<compile_context>
chip_gen: v7x
topology: tpu7x:2x2x1
jax: 0.10.0
libtpu: 0.0.40
codegen_flags: <defaults>
</compile_context>

<pallas_src>
import functools
import math

import jax
import jax.numpy as jnp
import numpy as np
from jax import lax
from jax.experimental import pallas as pl
from jax.experimental.pallas import tpu as pltpu


def _rvq_kernel(x_ref, e_ref, et_ref, esq_ref, qout_ref, idx_ref, *, n_q):
    # x_ref   : (1, d, TN)     activations (time on lanes)
    # e_ref   : (n_q, K, d)    codebooks
    # et_ref  : (n_q, d, K)    codebooks transposed (precomputed on host)
    # esq_ref : (n_q, K, 1)    per-code squared norms
    # qout_ref: (1, d, TN)     sum of selected codewords over all quantizers
    # idx_ref : (1, n_q, TN)   selected code indices per quantizer (int32)
    residual = x_ref[0].astype(jnp.float32)                     # (d, TN)
    qout = jnp.zeros_like(residual)
    K = e_ref.shape[1]
    tn = residual.shape[1]
    iota_k = lax.broadcasted_iota(jnp.int32, (K, tn), 0)

    ind_rows = []
    for q in range(n_q):                                        # n_q small & static
        e = e_ref[q].astype(jnp.float32)                        # (K, d)
        et = et_ref[q].astype(jnp.float32)                      # (d, K)
        esq = esq_ref[q]                                        # (K, 1)
        # argmin_k ||r - e_k||^2 == argmax_k (2 e_k . r - ||e_k||^2)
        scores = (2.0 * jnp.dot(e, residual,
                                preferred_element_type=jnp.float32) - esq)  # (K, TN)
        smax = jnp.max(scores, axis=0, keepdims=True)           # (1, TN)
        is_max = scores >= smax
        # first (smallest-index) maximum, matching torch .max().indices
        ind = jnp.min(jnp.where(is_max, iota_k, K), axis=0, keepdims=True)  # (1, TN)
        onehot = (iota_k == ind).astype(jnp.float32)            # (K, TN)
        quant = jnp.dot(et, onehot,
                        preferred_element_type=jnp.float32)     # (d, TN) gather
        residual = residual - quant
        qout = qout + quant
        ind_rows.append(ind)

    qout_ref[0] = qout.astype(qout_ref.dtype)
    idx_ref[0] = jnp.concatenate(ind_rows, axis=0).astype(jnp.int32)  # (n_q, TN)


def residual_vq_forward(x, embed, *, tn=128):
    """Inference (eval-mode) forward of ResidualVectorQuantization.

    x     : (b, d, n) float  -- NCT layout, like the torch module input.
    embed : (n_q, K, d)      -- stacked per-quantizer codebooks.
    Returns (quantized_out, out_indices, out_losses, out_quantized) matching
    the torch module: quantized_out (b, d, n), out_indices (n_q, b, n),
    out_losses (n_q, 1) of zeros (eval mode), out_quantized = [] (layers=None).
    """
    b, d, n = x.shape
    n_q, K, d2 = embed.shape
    assert d2 == d
    assert d % 8 == 0, "codebook dim (sublane axis) must be a multiple of 8"
    assert tn % 128 == 0 and n % tn == 0, "time tile must be lane-dense"

    embed_f = embed.astype(jnp.float32)
    embed_t = jnp.transpose(embed_f, (0, 2, 1))                  # (n_q, d, K)
    esq = jnp.sum(embed_f * embed_f, axis=-1, keepdims=True)     # (n_q, K, 1)

    kernel = functools.partial(_rvq_kernel, n_q=n_q)
    qout, idx = pl.pallas_call(
        kernel,
        out_shape=(
            jax.ShapeDtypeStruct((b, d, n), x.dtype),
            jax.ShapeDtypeStruct((b, n_q, n), jnp.int32),
        ),
        grid=(b, n // tn),
        in_specs=[
            pl.BlockSpec((1, d, tn), lambda bi, ti: (bi, 0, ti)),
            pl.BlockSpec((n_q, K, d), lambda bi, ti: (0, 0, 0)),
            pl.BlockSpec((n_q, d, K), lambda bi, ti: (0, 0, 0)),
            pl.BlockSpec((n_q, K, 1), lambda bi, ti: (0, 0, 0)),
        ],
        out_specs=(
            pl.BlockSpec((1, d, tn), lambda bi, ti: (bi, 0, ti)),
            pl.BlockSpec((1, n_q, tn), lambda bi, ti: (bi, 0, ti)),
        ),
        compiler_params=pltpu.CompilerParams(
            dimension_semantics=("parallel", "parallel"),
        ),
    )(x, embed_f, embed_t, esq)

    out_indices = jnp.transpose(idx, (1, 0, 2))   # (n_q, b, n), torch.stack order
    out_losses = jnp.zeros((n_q, 1), dtype=jnp.float32)   # eval-mode losses
    out_quantized = []                                    # layers=None case
    # TODO(synk): training-mode state updates (kmeans init, EMA codebook /
    # cluster-size updates, dead-code expiry, commitment loss) and the optional
    # project_in/project_out Linear layers (codebook_dim != dim) are stateful /
    # host-side and are not implemented here.
    return qout, out_indices, out_losses, out_quantized


def _rvq_reference(x, embed):
    """Pure-JAX mirror of the torch eval-mode forward (for correctness)."""
    b, d, n = x.shape
    n_q, K, _ = embed.shape
    xt = jnp.transpose(x, (0, 2, 1)).reshape(b * n, d)
    residual = xt
    qout = jnp.zeros_like(xt)
    inds = []
    for q in range(n_q):
        e = embed[q]
        dist = -(jnp.sum(residual ** 2, axis=1, keepdims=True)
                 - 2.0 * residual @ e.T
                 + jnp.sum(e ** 2, axis=1)[None, :])
        ind = jnp.argmax(dist, axis=-1)
        quant = e[ind]
        residual = residual - quant
        qout = qout + quant
        inds.append(ind.reshape(b, n).astype(jnp.int32))
    qout = jnp.transpose(qout.reshape(b, n, d), (0, 2, 1))
    return qout, jnp.stack(inds)


if __name__ == "__main__":
    key = jax.random.PRNGKey(0)
    kx, ke = jax.random.split(key)
    b, d, n = 2, 32, 256          # batch, codebook dim, time steps
    n_q, K = 4, 256               # num quantizers, codebook size

    x = jax.random.normal(kx, (b, d, n), dtype=jnp.float32)
    # uniform (kaiming-style) codebook init, mirroring uniform_init in torch
    bound = math.sqrt(3.0) * math.sqrt(2.0 / d)
    embed = jax.random.uniform(ke, (n_q, K, d), minval=-bound, maxval=bound,
                               dtype=jnp.float32)

    qout, indices, losses, out_q = residual_vq_forward(x, embed)
    qout = jax.block_until_ready(qout)
    indices = jax.block_until_ready(indices)

    qout_ref, idx_ref = _rvq_reference(x, embed)
    assert np.allclose(np.asarray(qout), np.asarray(qout_ref), atol=1e-5), \
        "quantized_out mismatch"
    assert np.array_equal(np.asarray(indices), np.asarray(idx_ref)), \
        "indices mismatch"
    assert losses.shape == (n_q, 1) and out_q == []

    print("KERNEL_OK")
</pallas_src>

<mosaic_0001>
module attributes {stable_mosaic.version = 11 : i64} {
  func.func @_rvq_kernel(%arg0: i32, %arg1: i32, %arg2: memref<1x32x128xf32, #tpu.memory_space<vmem>>, %arg3: memref<4x256x32xf32, #tpu.memory_space<vmem>>, %arg4: memref<4x32x256xf32, #tpu.memory_space<vmem>>, %arg5: memref<4x256x1xf32, #tpu.memory_space<vmem>>, %arg6: memref<1x32x128xf32, #tpu.memory_space<vmem>>, %arg7: memref<1x4x128xi32, #tpu.memory_space<vmem>>) attributes {dimension_semantics = [#tpu.dimension_semantics<parallel>, #tpu.dimension_semantics<parallel>], iteration_bounds = array<i64: 2, 2>, scalar_prefetch = 0 : i64, scratch_operands = 0 : i64, tpu.core_type = #tpu.core_type<tc>, window_params = [{transform_indices = @transform_0, window_bounds = array<i64: 1, 32, 128>}, {pipeline_mode = #tpu.pipeline_mode<synchronous>, transform_indices = @transform_1, window_bounds = array<i64: 4, 256, 32>}, {pipeline_mode = #tpu.pipeline_mode<synchronous>, transform_indices = @transform_2, window_bounds = array<i64: 4, 32, 256>}, {pipeline_mode = #tpu.pipeline_mode<synchronous>, transform_indices = @transform_3, window_bounds = array<i64: 4, 256, 1>}, {transform_indices = @transform_4, window_bounds = array<i64: 1, 32, 128>}, {transform_indices = @transform_5, window_bounds = array<i64: 1, 4, 128>}]} {
    %c0 = arith.constant 0 : index
    %c0_0 = arith.constant 0 : index
    %c0_1 = arith.constant 0 : index
    %0 = vector.load %arg2[%c0, %c0_0, %c0_1] : memref<1x32x128xf32, #tpu.memory_space<vmem>>, vector<1x32x128xf32>
    %1 = vector.shape_cast %0 : vector<1x32x128xf32> to vector<32x128xf32>
    %cst = arith.constant 0.000000e+00 : f32
    %2 = vector.broadcast %cst : f32 to vector<32x128xf32>
    %3 = tpu.iota {dimensions = array<i32: 0>} : vector<256x128xi32>
    %c0_2 = arith.constant 0 : index
    %c0_3 = arith.constant 0 : index
    %c0_4 = arith.constant 0 : index
    %4 = vector.load %arg3[%c0_2, %c0_3, %c0_4] : memref<4x256x32xf32, #tpu.memory_space<vmem>>, vector<1x256x32xf32>
    %5 = vector.shape_cast %4 : vector<1x256x32xf32> to vector<256x32xf32>
    %c0_5 = arith.constant 0 : index
    %c0_6 = arith.constant 0 : index
    %c0_7 = arith.constant 0 : index
    %6 = vector.load %arg4[%c0_5, %c0_6, %c0_7] : memref<4x32x256xf32, #tpu.memory_space<vmem>>, vector<1x32x256xf32>
    %7 = vector.shape_cast %6 : vector<1x32x256xf32> to vector<32x256xf32>
    %c0_8 = arith.constant 0 : index
    %c0_9 = arith.constant 0 : index
    %c0_10 = arith.constant 0 : index
    %8 = vector.load %arg5[%c0_8, %c0_9, %c0_10] : memref<4x256x1xf32, #tpu.memory_space<vmem>>, vector<1x256x1xf32>
    %9 = vector.shape_cast %8 : vector<1x256x1xf32> to vector<256x1xf32>
    %cst_11 = arith.constant dense<0.000000e+00> : vector<256x128xf32>
    %10 = tpu.matmul %5, %1, %cst_11 {dimension_numbers = #tpu.dot_dimension_numbers<[1], [0], [0], [1], [0, 0, 1, 1], [], []>} : vector<256x32xf32>, vector<32x128xf32>, vector<256x128xf32> -> vector<256x128xf32>
    %cst_12 = arith.constant 2.000000e+00 : f32
    %11 = vector.broadcast %cst_12 : f32 to vector<256x128xf32>
    %12 = arith.mulf %11, %10 : vector<256x128xf32>
    %13 = vector.broadcast %9 : vector<256x1xf32> to vector<256x128xf32>
    %14 = arith.subf %12, %13 : vector<256x128xf32>
    %cst_13 = arith.constant dense<0xFF800000> : vector<128xf32>
    %15 = vector.multi_reduction <maximumf>, %14, %cst_13 [0] : vector<256x128xf32> to vector<128xf32>
    %16 = vector.shape_cast %15 : vector<128xf32> to vector<1x128xf32>
    %17 = vector.broadcast %16 : vector<1x128xf32> to vector<256x128xf32>
    %18 = arith.cmpf oge, %14, %17 : vector<256x128xf32>
    %c256_i32 = arith.constant 256 : i32
    %19 = vector.broadcast %c256_i32 : i32 to vector<256x128xi32>
    %20 = arith.select %18, %3, %19 : vector<256x128xi1>, vector<256x128xi32>
    %cst_14 = arith.constant dense<2147483647> : vector<128xi32>
    %21 = vector.multi_reduction <minsi>, %20, %cst_14 [0] : vector<256x128xi32> to vector<128xi32>
    %22 = vector.shape_cast %21 : vector<128xi32> to vector<1x128xi32>
    %23 = vector.broadcast %22 : vector<1x128xi32> to vector<256x128xi32>
    %24 = arith.cmpi eq, %3, %23 : vector<256x128xi32>
    %25 = arith.extui %24 : vector<256x128xi1> to vector<256x128xi32>
    %26 = arith.sitofp %25 : vector<256x128xi32> to vector<256x128xf32>
    %cst_15 = arith.constant dense<0.000000e+00> : vector<32x128xf32>
    %27 = tpu.matmul %7, %26, %cst_15 {dimension_numbers = #tpu.dot_dimension_numbers<[1], [0], [0], [1], [0, 0, 1, 1], [], []>} : vector<32x256xf32>, vector<256x128xf32>, vector<32x128xf32> -> vector<32x128xf32>
    %28 = arith.subf %1, %27 : vector<32x128xf32>
    %29 = arith.addf %2, %27 : vector<32x128xf32>
    %c1 = arith.constant 1 : index
    %c0_16 = arith.constant 0 : index
    %c0_17 = arith.constant 0 : index
    %30 = vector.load %arg3[%c1, %c0_16, %c0_17] : memref<4x256x32xf32, #tpu.memory_space<vmem>>, vector<1x256x32xf32>
    %31 = vector.shape_cast %30 : vector<1x256x32xf32> to vector<256x32xf32>
    %c1_18 = arith.constant 1 : index
    %c0_19 = arith.constant 0 : index
    %c0_20 = arith.constant 0 : index
    %32 = vector.load %arg4[%c1_18, %c0_19, %c0_20] : memref<4x32x256xf32, #tpu.memory_space<vmem>>, vector<1x32x256xf32>
    %33 = vector.shape_cast %32 : vector<1x32x256xf32> to vector<32x256xf32>
    %c1_21 = arith.constant 1 : index
    %c0_22 = arith.constant 0 : index
    %c0_23 = arith.constant 0 : index
    %34 = vector.load %arg5[%c1_21, %c0_22, %c0_23] : memref<4x256x1xf32, #tpu.memory_space<vmem>>, vector<1x256x1xf32>
    %35 = vector.shape_cast %34 : vector<1x256x1xf32> to vector<256x1xf32>
    %cst_24 = arith.constant dense<0.000000e+00> : vector<256x128xf32>
    %36 = tpu.matmul %31, %28, %cst_24 {dimension_numbers = #tpu.dot_dimension_numbers<[1], [0], [0], [1], [0, 0, 1, 1], [], []>} : vector<256x32xf32>, vector<32x128xf32>, vector<256x128xf32> -> vector<256x128xf32>
    %cst_25 = arith.constant 2.000000e+00 : f32
    %37 = vector.broadcast %cst_25 : f32 to vector<256x128xf32>
    %38 = arith.mulf %37, %36 : vector<256x128xf32>
    %39 = vector.broadcast %35 : vector<256x1xf32> to vector<256x128xf32>
    %40 = arith.subf %38, %39 : vector<256x128xf32>
    %cst_26 = arith.constant dense<0xFF800000> : vector<128xf32>
    %41 = vector.multi_reduction <maximumf>, %40, %cst_26 [0] : vector<256x128xf32> to vector<128xf32>
    %42 = vector.shape_cast %41 : vector<128xf32> to vector<1x128xf32>
    %43 = vector.broadcast %42 : vector<1x128xf32> to vector<256x128xf32>
    %44 = arith.cmpf oge, %40, %43 : vector<256x128xf32>
    %c256_i32_27 = arith.constant 256 : i32
    %45 = vector.broadcast %c256_i32_27 : i32 to vector<256x128xi32>
    %46 = arith.select %44, %3, %45 : vector<256x128xi1>, vector<256x128xi32>
    %cst_28 = arith.constant dense<2147483647> : vector<128xi32>
    %47 = vector.multi_reduction <minsi>, %46, %cst_28 [0] : vector<256x128xi32> to vector<128xi32>
    %48 = vector.shape_cast %47 : vector<128xi32> to vector<1x128xi32>
    %49 = vector.broadcast %48 : vector<1x128xi32> to vector<256x128xi32>
    %50 = arith.cmpi eq, %3, %49 : vector<256x128xi32>
    %51 = arith.extui %50 : vector<256x128xi1> to vector<256x128xi32>
    %52 = arith.sitofp %51 : vector<256x128xi32> to vector<256x128xf32>
    %cst_29 = arith.constant dense<0.000000e+00> : vector<32x128xf32>
    %53 = tpu.matmul %33, %52, %cst_29 {dimension_numbers = #tpu.dot_dimension_numbers<[1], [0], [0], [1], [0, 0, 1, 1], [], []>} : vector<32x256xf32>, vector<256x128xf32>, vector<32x128xf32> -> vector<32x128xf32>
    %54 = arith.subf %28, %53 : vector<32x128xf32>
    %55 = arith.addf %29, %53 : vector<32x128xf32>
    %c2 = arith.constant 2 : index
    %c0_30 = arith.constant 0 : index
    %c0_31 = arith.constant 0 : index
    %56 = vector.load %arg3[%c2, %c0_30, %c0_31] : memref<4x256x32xf32, #tpu.memory_space<vmem>>, vector<1x256x32xf32>
    %57 = vector.shape_cast %56 : vector<1x256x32xf32> to vector<256x32xf32>
    %c2_32 = arith.constant 2 : index
    %c0_33 = arith.constant 0 : index
    %c0_34 = arith.constant 0 : index
    %58 = vector.load %arg4[%c2_32, %c0_33, %c0_34] : memref<4x32x256xf32, #tpu.memory_space<vmem>>, vector<1x32x256xf32>
    %59 = vector.shape_cast %58 : vector<1x32x256xf32> to vector<32x256xf32>
    %c2_35 = arith.constant 2 : index
    %c0_36 = arith.constant 0 : index
    %c0_37 = arith.constant 0 : index
    %60 = vector.load %arg5[%c2_35, %c0_36, %c0_37] : memref<4x256x1xf32, #tpu.memory_space<vmem>>, vector<1x256x1xf32>
    %61 = vector.shape_cast %60 : vector<1x256x1xf32> to vector<256x1xf32>
    %cst_38 = arith.constant dense<0.000000e+00> : vector<256x128xf32>
    %62 = tpu.matmul %57, %54, %cst_38 {dimension_numbers = #tpu.dot_dimension_numbers<[1], [0], [0], [1], [0, 0, 1, 1], [], []>} : vector<256x32xf32>, vector<32x128xf32>, vector<256x128xf32> -> vector<256x128xf32>
    %cst_39 = arith.constant 2.000000e+00 : f32
    %63 = vector.broadcast %cst_39 : f32 to vector<256x128xf32>
    %64 = arith.mulf %63, %62 : vector<256x128xf32>
    %65 = vector.broadcast %61 : vector<256x1xf32> to vector<256x128xf32>
    %66 = arith.subf %64, %65 : vector<256x128xf32>
    %cst_40 = arith.constant dense<0xFF800000> : vector<128xf32>
    %67 = vector.multi_reduction <maximumf>, %66, %cst_40 [0] : vector<256x128xf32> to vector<128xf32>
    %68 = vector.shape_cast %67 : vector<128xf32> to vector<1x128xf32>
    %69 = vector.broadcast %68 : vector<1x128xf32> to vector<256x128xf32>
    %70 = arith.cmpf oge, %66, %69 : vector<256x128xf32>
    %c256_i32_41 = arith.constant 256 : i32
    %71 = vector.broadcast %c256_i32_41 : i32 to vector<256x128xi32>
    %72 = arith.select %70, %3, %71 : vector<256x128xi1>, vector<256x128xi32>
    %cst_42 = arith.constant dense<2147483647> : vector<128xi32>
    %73 = vector.multi_reduction <minsi>, %72, %cst_42 [0] : vector<256x128xi32> to vector<128xi32>
    %74 = vector.shape_cast %73 : vector<128xi32> to vector<1x128xi32>
    %75 = vector.broadcast %74 : vector<1x128xi32> to vector<256x128xi32>
    %76 = arith.cmpi eq, %3, %75 : vector<256x128xi32>
    %77 = arith.extui %76 : vector<256x128xi1> to vector<256x128xi32>
    %78 = arith.sitofp %77 : vector<256x128xi32> to vector<256x128xf32>
    %cst_43 = arith.constant dense<0.000000e+00> : vector<32x128xf32>
    %79 = tpu.matmul %59, %78, %cst_43 {dimension_numbers = #tpu.dot_dimension_numbers<[1], [0], [0], [1], [0, 0, 1, 1], [], []>} : vector<32x256xf32>, vector<256x128xf32>, vector<32x128xf32> -> vector<32x128xf32>
    %80 = arith.subf %54, %79 : vector<32x128xf32>
    %81 = arith.addf %55, %79 : vector<32x128xf32>
    %c3 = arith.constant 3 : index
    %c0_44 = arith.constant 0 : index
    %c0_45 = arith.constant 0 : index
    %82 = vector.load %arg3[%c3, %c0_44, %c0_45] : memref<4x256x32xf32, #tpu.memory_space<vmem>>, vector<1x256x32xf32>
    %83 = vector.shape_cast %82 : vector<1x256x32xf32> to vector<256x32xf32>
    %c3_46 = arith.constant 3 : index
    %c0_47 = arith.constant 0 : index
    %c0_48 = arith.constant 0 : index
    %84 = vector.load %arg4[%c3_46, %c0_47, %c0_48] : memref<4x32x256xf32, #tpu.memory_space<vmem>>, vector<1x32x256xf32>
    %85 = vector.shape_cast %84 : vector<1x32x256xf32> to vector<32x256xf32>
    %c3_49 = arith.constant 3 : index
    %c0_50 = arith.constant 0 : index
    %c0_51 = arith.constant 0 : index
    %86 = vector.load %arg5[%c3_49, %c0_50, %c0_51] : memref<4x256x1xf32, #tpu.memory_space<vmem>>, vector<1x256x1xf32>
    %87 = vector.shape_cast %86 : vector<1x256x1xf32> to vector<256x1xf32>
    %cst_52 = arith.constant dense<0.000000e+00> : vector<256x128xf32>
    %88 = tpu.matmul %83, %80, %cst_52 {dimension_numbers = #tpu.dot_dimension_numbers<[1], [0], [0], [1], [0, 0, 1, 1], [], []>} : vector<256x32xf32>, vector<32x128xf32>, vector<256x128xf32> -> vector<256x128xf32>
    %cst_53 = arith.constant 2.000000e+00 : f32
    %89 = vector.broadcast %cst_53 : f32 to vector<256x128xf32>
    %90 = arith.mulf %89, %88 : vector<256x128xf32>
    %91 = vector.broadcast %87 : vector<256x1xf32> to vector<256x128xf32>
    %92 = arith.subf %90, %91 : vector<256x128xf32>
    %cst_54 = arith.constant dense<0xFF800000> : vector<128xf32>
    %93 = vector.multi_reduction <maximumf>, %92, %cst_54 [0] : vector<256x128xf32> to vector<128xf32>
    %94 = vector.shape_cast %93 : vector<128xf32> to vector<1x128xf32>
    %95 = vector.broadcast %94 : vector<1x128xf32> to vector<256x128xf32>
    %96 = arith.cmpf oge, %92, %95 : vector<256x128xf32>
    %c256_i32_55 = arith.constant 256 : i32
    %97 = vector.broadcast %c256_i32_55 : i32 to vector<256x128xi32>
    %98 = arith.select %96, %3, %97 : vector<256x128xi1>, vector<256x128xi32>
    %cst_56 = arith.constant dense<2147483647> : vector<128xi32>
    %99 = vector.multi_reduction <minsi>, %98, %cst_56 [0] : vector<256x128xi32> to vector<128xi32>
    %100 = vector.shape_cast %99 : vector<128xi32> to vector<1x128xi32>
    %101 = vector.broadcast %100 : vector<1x128xi32> to vector<256x128xi32>
    %102 = arith.cmpi eq, %3, %101 : vector<256x128xi32>
    %103 = arith.extui %102 : vector<256x128xi1> to vector<256x128xi32>
    %104 = arith.sitofp %103 : vector<256x128xi32> to vector<256x128xf32>
    %cst_57 = arith.constant dense<0.000000e+00> : vector<32x128xf32>
    %105 = tpu.matmul %85, %104, %cst_57 {dimension_numbers = #tpu.dot_dimension_numbers<[1], [0], [0], [1], [0, 0, 1, 1], [], []>} : vector<32x256xf32>, vector<256x128xf32>, vector<32x128xf32> -> vector<32x128xf32>
    %106 = arith.addf %81, %105 : vector<32x128xf32>
    %c0_58 = arith.constant 0 : index
    %c0_59 = arith.constant 0 : index
    %c0_60 = arith.constant 0 : index
    %107 = vector.load %arg6[%c0_58, %c0_59, %c0_60] : memref<1x32x128xf32, #tpu.memory_space<vmem>>, vector<1x32x128xf32>
    %108 = vector.shape_cast %107 : vector<1x32x128xf32> to vector<32x128xf32>
    %109 = vector.shape_cast %106 : vector<32x128xf32> to vector<1x32x128xf32>
    tpu.vector_store %arg6[%c0_58, %c0_59, %c0_60], %109 {strides = array<i32>} : memref<1x32x128xf32, #tpu.memory_space<vmem>>, vector<1x32x128xf32>,
    %110 = tpu.concatenate %22, %48, %74, %100 in 0 : vector<1x128xi32>, vector<1x128xi32>, vector<1x128xi32>, vector<1x128xi32> -> vector<4x128xi32>
    %c0_61 = arith.constant 0 : index
    %c0_62 = arith.constant 0 : index
    %c0_63 = arith.constant 0 : index
    %111 = vector.load %arg7[%c0_61, %c0_62, %c0_63] : memref<1x4x128xi32, #tpu.memory_space<vmem>>, vector<1x4x128xi32>
    %112 = vector.shape_cast %111 : vector<1x4x128xi32> to vector<4x128xi32>
    %113 = vector.shape_cast %110 : vector<4x128xi32> to vector<1x4x128xi32>
    tpu.vector_store %arg7[%c0_61, %c0_62, %c0_63], %113 {strides = array<i32>} : memref<1x4x128xi32, #tpu.memory_space<vmem>>, vector<1x4x128xi32>,
    return
  }
  func.func @transform_0(%arg0: i32, %arg1: i32) -> (i32, i32, i32) {
    %c0_i32 = arith.constant 0 : i32
    %c0_i32_0 = arith.constant 0 : i32
    return %arg0, %c0_i32, %arg1 : i32, i32, i32
  }
  func.func @transform_1(%arg0: i32, %arg1: i32) -> (i32, i32, i32) {
    %c0_i32 = arith.constant 0 : i32
    %c0_i32_0 = arith.constant 0 : i32
    %c0_i32_1 = arith.constant 0 : i32
    %c0_i32_2 = arith.constant 0 : i32
    return %c0_i32, %c0_i32_0, %c0_i32_1 : i32, i32, i32
  }
  func.func @transform_2(%arg0: i32, %arg1: i32) -> (i32, i32, i32) {
    %c0_i32 = arith.constant 0 : i32
    %c0_i32_0 = arith.constant 0 : i32
    %c0_i32_1 = arith.constant 0 : i32
    %c0_i32_2 = arith.constant 0 : i32
    return %c0_i32, %c0_i32_0, %c0_i32_1 : i32, i32, i32
  }
  func.func @transform_3(%arg0: i32, %arg1: i32) -> (i32, i32, i32) {
    %c0_i32 = arith.constant 0 : i32
    %c0_i32_0 = arith.constant 0 : i32
    %c0_i32_1 = arith.constant 0 : i32
    %c0_i32_2 = arith.constant 0 : i32
    return %c0_i32, %c0_i32_0, %c0_i32_1 : i32, i32, i32
  }
  func.func @transform_4(%arg0: i32, %arg1: i32) -> (i32, i32, i32) {
    %c0_i32 = arith.constant 0 : i32
    %c0_i32_0 = arith.constant 0 : i32
    return %arg0, %c0_i32, %arg1 : i32, i32, i32
  }
  func.func @transform_5(%arg0: i32, %arg1: i32) -> (i32, i32, i32) {
    %c0_i32 = arith.constant 0 : i32
    %c0_i32_0 = arith.constant 0 : i32
    return %arg0, %c0_i32, %arg1 : i32, i32, i32
  }
}

</mosaic_0001>

<llo_original>
// kernel: tpu_custom_call.1
$region0: #{tpu_custom_call.1}
  #allocation0 [shape = 'u32[]', space=smem, size = 0x4, offset = 0x4, fixed_abs, tag = 'smem constant byte address 0x4 - core index']
  #allocation1 [shape = 'u32[144,128]{1,0:T(1,128)}', space=vmem, size = 0x12000, scoped, tag = 'internal scratch']
  %s0 = inlined_call_operand.vmem [shape: f32[2,32,256], index: 0, kind: input, shape index: {}]
  %s1 = inlined_call_operand.vmem [shape: f32[4,256,32], index: 1, kind: input, shape index: {}]
  %s2 = inlined_call_operand.vmem [shape: f32[4,32,256], index: 2, kind: input, shape index: {}]
  %s3 = inlined_call_operand.vmem [shape: f32[4,256,1], index: 3, kind: input, shape index: {}]
  %s4 = inlined_call_operand.hbm [shape: f32[2,32,256], index: 4, kind: output, shape index: {0}]
  %s5 = inlined_call_operand.hbm [shape: s32[2,4,256], index: 5, kind: output, shape index: {1}]
  %6 = xla_tuple %s4, %s5
  %s7 = sld [smem:[#allocation0]]
  $region95: #{tpu_custom_call.1} parent=0
    _
  %s9 = ssub.s32 1, %s7
  %s10 = scalar_select 0, %s9, %s7
  $region1: #{tpu_custom_call.1} parent=0
    #allocation2 [shape = 'u8[32768]{0}', space=vmem, size = 0x8000, scoped, tag = 'input window, operand 0']
    #allocation3 [shape = 'u8[32768]{0}', space=vmem, size = 0x8000, scoped, tag = 'output window, operand 0']
    #allocation4 [shape = 's32[2]{0}', space=sflag, size = 0x8, scoped, tag = 'scoped memory for tpu_custom_call.1']
    #allocation5 [shape = 'u8[4096]{0}', space=vmem, size = 0x1000, scoped, tag = 'output window, operand 1']
    #allocation6 [shape = 's32[2]{0}', space=sflag, size = 0x8, scoped, tag = 'scoped memory for tpu_custom_call.1']
    %11 = vsyncpa [#allocation4], 0
    %s12 = scalar_lea.sflag [#allocation4], 1
    %13 = vsyncpa %s12, 0
    %14 = vsyncpa [#allocation6], 0
    %s15 = scalar_lea.sflag [#allocation6], 1
    %16 = vsyncpa %s15, 0
    loop: start=0, step=1, limit=6
    $region2: #{tpu_custom_call.1} parent=1 // loop_pre_header
      _
    $region3: #{tpu_custom_call.1} parent=1 // loop_header
      %s18 = sphi 0, %s22
      %p19 = scmp.ge.s32.totalorder %s18, 6
      %s25 = sphi 0, %s37
      %s26 = sphi 0, %s33
      %s27 = sphi 0, %s25
      %s28 = sphi 0, %s26
      %s29 = sphi 0, %s27
      %s30 = sphi 0, %s28
      %s42 = sphi 0, %s44
      %s45 = sphi 0, %s42
      %s46 = sphi 0, %s45
      %s62 = sphi 0, %s46
      %s66 = sphi 0, %s66
      %s68 = sphi 0, %s66
      %s69 = sphi 0, %s68
      %s83 = sphi 0, %s69
      %s87 = sphi 0, %s87
      %s89 = sphi 0, %s87
      %s90 = sphi 0, %s89
      %s104 = sphi 0, %s90
      %s108 = sphi 0, %s108
      %s110 = sphi 0, %s108
      %s111 = sphi 0, %s110
      %s125 = sphi 0, %s111
      %s133 = sphi 0, %s135
      %s136 = sphi 0, %s133
      %s137 = sphi 0, %s136
      %s153 = sphi 0, %s137
      %s161 = sphi 0, %s163
      %s164 = sphi 0, %s161
      %s165 = sphi 0, %s164
      %s181 = sphi 0, %s165
    $region4: #{tpu_custom_call.1} parent=1 // loop_header_branch
      %21 = sbr.rel (%p19) target = $region8
    $region5: #{tpu_custom_call.1} parent=1 // loop_body
      %s23 = ssub.s32 %s18, 1
      %s24 = ssub.s32 %s18, 2
      %s31 = sadd.s32 1, %s26
      %p32 = scmp.ge.s32.totalorder %s31, 2
      %s33 = scalar_select %p32, 0, %s31
      %s34 = sadd.s32 1, %s25
      %s35 = scalar_select %p32, %s34, %s25
      %p36 = scmp.ge.s32.totalorder %s35, 2
      %s37 = scalar_select %p36, 0, %s35
      %s38 = ssub.s32 %s25, %s37
      %s39 = ssub.s32 %s26, %s33
      %s40 = sor.u32 %s38, %s39
      %p41 = scmp.eq.s32.totalorder %s40, 0
      %s43 = sadd.s32 %s42, 1
      %s44 = scalar_select %p41, %s42, %s43
      %p47 = pneg %p41
      %p48 = scmp.eq.s32.totalorder %s18, 3
      %p49 = por %p47, %p48
      %p50 = scmp.ne.s32.totalorder %s42, %s45
      %p51 = scmp.eq.s32.totalorder %s18, 0
      %p52 = por %p50, %p51
      %p53 = scmp.ne.s32.totalorder %s42, %s45
      %p54 = scmp.eq.s32.totalorder %s23, 3
      %p55 = por %p53, %p54
      %p56 = scmp.ne.s32.totalorder %s45, %s46
      %p57 = scmp.eq.s32.totalorder %s23, 0
      %p58 = por %p56, %p57
      %p59 = scmp.ne.s32.totalorder %s45, %s46
      %p60 = scmp.eq.s32.totalorder %s24, 3
      %p61 = por %p59, %p60
      %p63 = scmp.ne.s32.totalorder %s46, %s62
      %p64 = scmp.eq.s32.totalorder %s24, 0
      %p65 = por %p63, %p64
      %s67 = sadd.s32 %s66, 1
      %p70 = scmp.eq.s32.totalorder %s18, 3
      %p71 = scmp.ne.s32.totalorder %s66, %s68
      %p72 = scmp.eq.s32.totalorder %s18, 0
      %p73 = por %p71, %p72
      %p74 = scmp.ne.s32.totalorder %s66, %s68
      %p75 = scmp.eq.s32.totalorder %s23, 3
      %p76 = por %p74, %p75
      %p77 = scmp.ne.s32.totalorder %s68, %s69
      %p78 = scmp.eq.s32.totalorder %s23, 0
      %p79 = por %p77, %p78
      %p80 = scmp.ne.s32.totalorder %s68, %s69
      %p81 = scmp.eq.s32.totalorder %s24, 3
      %p82 = por %p80, %p81
      %p84 = scmp.ne.s32.totalorder %s69, %s83
      %p85 = scmp.eq.s32.totalorder %s24, 0
      %p86 = por %p84, %p85
      %s88 = sadd.s32 %s87, 1
      %p91 = scmp.eq.s32.totalorder %s18, 3
      %p92 = scmp.ne.s32.totalorder %s87, %s89
      %p93 = scmp.eq.s32.totalorder %s18, 0
      %p94 = por %p92, %p93
      %p95 = scmp.ne.s32.totalorder %s87, %s89
      %p96 = scmp.eq.s32.totalorder %s23, 3
      %p97 = por %p95, %p96
      %p98 = scmp.ne.s32.totalorder %s89, %s90
      %p99 = scmp.eq.s32.totalorder %s23, 0
      %p100 = por %p98, %p99
      %p101 = scmp.ne.s32.totalorder %s89, %s90
      %p102 = scmp.eq.s32.totalorder %s24, 3
      %p103 = por %p101, %p102
      %p105 = scmp.ne.s32.totalorder %s90, %s104
      %p106 = scmp.eq.s32.totalorder %s24, 0
      %p107 = por %p105, %p106
      %s109 = sadd.s32 %s108, 1
      %p112 = scmp.eq.s32.totalorder %s18, 3
      %p113 = scmp.ne.s32.totalorder %s108, %s110
      %p114 = scmp.eq.s32.totalorder %s18, 0
      %p115 = por %p113, %p114
      %p116 = scmp.ne.s32.totalorder %s108, %s110
      %p117 = scmp.eq.s32.totalorder %s23, 3
      %p118 = por %p116, %p117
      %p119 = scmp.ne.s32.totalorder %s110, %s111
      %p120 = scmp.eq.s32.totalorder %s23, 0
      %p121 = por %p119, %p120
      %p122 = scmp.ne.s32.totalorder %s110, %s111
      %p123 = scmp.eq.s32.totalorder %s24, 3
      %p124 = por %p122, %p123
      %p126 = scmp.ne.s32.totalorder %s111, %s125
      %p127 = scmp.eq.s32.totalorder %s24, 0
      %p128 = por %p126, %p127
      %s129 = ssub.s32 %s25, %s37
      %s130 = ssub.s32 %s26, %s33
      %s131 = sor.u32 %s129, %s130
      %p132 = scmp.eq.s32.totalorder %s131, 0
      %s134 = sadd.s32 %s133, 1
      %s135 = scalar_select %p132, %s133, %s134
      %p138 = pneg %p132
      %p139 = scmp.eq.s32.totalorder %s18, 3
      %p140 = por %p138, %p139
      %p141 = scmp.ne.s32.totalorder %s133, %s136
      %p142 = scmp.eq.s32.totalorder %s18, 0
      %p143 = por %p141, %p142
      %p144 = scmp.ne.s32.totalorder %s133, %s136
      %p145 = scmp.eq.s32.totalorder %s23, 3
      %p146 = por %p144, %p145
      %p147 = scmp.ne.s32.totalorder %s136, %s137
      %p148 = scmp.eq.s32.totalorder %s23, 0
      %p149 = por %p147, %p148
      %p150 = scmp.ne.s32.totalorder %s136, %s137
      %p151 = scmp.eq.s32.totalorder %s24, 3
      %p152 = por %p150, %p151
      %p154 = scmp.ne.s32.totalorder %s137, %s153
      %p155 = scmp.eq.s32.totalorder %s24, 0
      %p156 = por %p154, %p155
      %s157 = ssub.s32 %s25, %s37
      %s158 = ssub.s32 %s26, %s33
      %s159 = sor.u32 %s157, %s158
      %p160 = scmp.eq.s32.totalorder %s159, 0
      %s162 = sadd.s32 %s161, 1
      %s163 = scalar_select %p160, %s161, %s162
      %p166 = pneg %p160
      %p167 = scmp.eq.s32.totalorder %s18, 3
      %p168 = por %p166, %p167
      %p169 = scmp.ne.s32.totalorder %s161, %s164
      %p170 = scmp.eq.s32.totalorder %s18, 0
      %p171 = por %p169, %p170
      %p172 = scmp.ne.s32.totalorder %s161, %s164
      %p173 = scmp.eq.s32.totalorder %s23, 3
      %p174 = por %p172, %p173
      %p175 = scmp.ne.s32.totalorder %s164, %s165
      %p176 = scmp.eq.s32.totalorder %s23, 0
      %p177 = por %p175, %p176
      %p178 = scmp.ne.s32.totalorder %s164, %s165
      %p179 = scmp.eq.s32.totalorder %s24, 3
      %p180 = por %p178, %p179
      %p182 = scmp.ne.s32.totalorder %s165, %s181
      %p183 = scmp.eq.s32.totalorder %s24, 0
      %p184 = por %p182, %p183
      %p185 = scmp.le.s32.totalorder 1, %s18
      %p186 = scmp.lt.s32.totalorder %s18, 5
      %p187 = pnand %p185, %p186
      %p188 = pneg %p187
      // Predicated region
      $region9: #{tpu_custom_call.1} parent=5 // pred_check
        _
      $region10: #{tpu_custom_call.1} parent=5 // pred_check_branch
        %190 = sbr.rel (%p187) target = $region12
      $region11: #{tpu_custom_call.1} parent=5 // pred_region
        %s191 = ssub.s32 %s18, 1
        // Predicated region
        $region13: #{tpu_custom_call.1} parent=11 // pred_check
          %p192 = pneg %p79
        $region14: #{tpu_custom_call.1} parent=11 // pred_check_branch
          %194 = sbr.rel (%p192) target = $region16
        $region15: #{tpu_custom_call.1} parent=11 // pred_region
          _
        $region16: #{tpu_custom_call.1} parent=11 // pred_fallthru
          _
        // Predicated region
        $region17: #{tpu_custom_call.1} parent=11 // pred_check
          %p195 = pneg %p100
        $region18: #{tpu_custom_call.1} parent=11 // pred_check_branch
          %197 = sbr.rel (%p195) target = $region20
        $region19: #{tpu_custom_call.1} parent=11 // pred_region
          _
        $region20: #{tpu_custom_call.1} parent=11 // pred_fallthru
          _
        // Predicated region
        $region21: #{tpu_custom_call.1} parent=11 // pred_check
          %p198 = pneg %p121
        $region22: #{tpu_custom_call.1} parent=11 // pred_check_branch
          %200 = sbr.rel (%p198) target = $region24
        $region23: #{tpu_custom_call.1} parent=11 // pred_region
          _
        $region24: #{tpu_custom_call.1} parent=11 // pred_fallthru
          _
      $region12: #{tpu_custom_call.1} parent=5 // pred_fallthru
        _
      %p201 = scmp.lt.s32.totalorder %s18, 4
      // Predicated region
      $region25: #{tpu_custom_call.1} parent=5 // pred_check
        %p202 = pneg %p201
      $region26: #{tpu_custom_call.1} parent=5 // pred_check_branch
        %204 = sbr.rel (%p202) target = $region28
      $region27: #{tpu_custom_call.1} parent=5 // pred_region
        // Predicated region
        $region29: #{tpu_custom_call.1} parent=27 // pred_check
          %p205 = pneg %p52
        $region30: #{tpu_custom_call.1} parent=27 // pred_check_branch
          %207 = sbr.rel (%p205) target = $region32
        $region31: #{tpu_custom_call.1} parent=27 // pred_region
          %s208 = sand.u32 %s42, 1
          %s209 = sand.u32 %s42, 1
          %s210 = smul.addr %s209, 32
          %s211 = scalar_lea.vmem [#allocation2], %s210
          %s212 = smul.addr %s25, 8
          %s213 = sadd.s32 %s26, %s212
          %s214 = smul.addr %s213, 8
          %s215 = scalar_lea.vmem %s0, %s214
          // Predicated region
          $region33: #{tpu_custom_call.1} parent=31 // pred_check
            _
          $region34: #{tpu_custom_call.1} parent=31 // pred_check_branch
            %217 = sbr.rel (0) target = $region36
          $region35: #{tpu_custom_call.1} parent=31 // pred_region
            // Predicated region
            $region37: #{tpu_custom_call.1} parent=35 // pred_check
              _
            $region38: #{tpu_custom_call.1} parent=35 // pred_check_branch
              %219 = sbr.rel (0) target = $region40
            $region39: #{tpu_custom_call.1} parent=35 // pred_region
              // Predicated region
              $region52: #{tpu_custom_call.1} parent=39 // pred_check
                _
              $region53: #{tpu_custom_call.1} parent=39 // pred_check_branch
                %240 = sbr.rel (0) target = $region55
              $region54: #{tpu_custom_call.1} parent=39 // pred_region
                loop: start=0, step=1, limit=1
                $region56: #{tpu_custom_call.1} parent=54 // loop_pre_header
                  _
                $region57: #{tpu_custom_call.1} parent=54 // loop_header
                  %s242 = sphi 0, %s246
                  %p243 = scmp.ge.s32.totalorder %s242, 1
                  %s247 = sphi %s215, %s215
                  %s248 = sphi %s211, %s211
                $region58: #{tpu_custom_call.1} parent=54 // loop_header_branch
                  %245 = sbr.rel (%p243) target = $region62
                $region59: #{tpu_custom_call.1} parent=54 // loop_body
                  %v249 = vld [vmem:[%s247] sm:$0xff]
                  %250 = vst [vmem:[%s248] sm:$0xff] %v249
                  %v251 = vld [vmem:[%s247 + $0x10] sm:$0xff]
                  %252 = vst [vmem:[%s248 + $0x8] sm:$0xff] %v251
                  %v253 = vld [vmem:[%s247 + $0x20] sm:$0xff]
                  %254 = vst [vmem:[%s248 + $0x10] sm:$0xff] %v253
                  %v255 = vld [vmem:[%s247 + $0x30] sm:$0xff]
                  %256 = vst [vmem:[%s248 + $0x18] sm:$0xff] %v255
                $region60: #{tpu_custom_call.1} parent=54 // loop_footer
                  %s246 = sadd.s32 1, %s242
                $region61: #{tpu_custom_call.1} parent=54 // loop_footer_branch
                  %241 = sbr.rel target = $region57
                $region62: #{tpu_custom_call.1} parent=54 // loop_exit
                  _
              $region55: #{tpu_custom_call.1} parent=39 // pred_fallthru
                _
              // Predicated region
              $region63: #{tpu_custom_call.1} parent=39 // pred_check
                _
              $region64: #{tpu_custom_call.1} parent=39 // pred_check_branch
                %258 = sbr.rel target = $region66
              $region65: #{tpu_custom_call.1} parent=39 // pred_region
                _
              $region66: #{tpu_custom_call.1} parent=39 // pred_fallthru
                _
            $region40: #{tpu_custom_call.1} parent=35 // pred_fallthru
              _
            // Predicated region
            $region41: #{tpu_custom_call.1} parent=35 // pred_check
              _
            $region42: #{tpu_custom_call.1} parent=35 // pred_check_branch
              %221 = sbr.rel target = $region44
            $region43: #{tpu_custom_call.1} parent=35 // pred_region
              loop: start=0, step=1, limit=1
              $region45: #{tpu_custom_call.1} parent=43 // loop_pre_header
                _
              $region46: #{tpu_custom_call.1} parent=43 // loop_header
                %s224 = sphi 0, %s228
                %p225 = scmp.ge.s32.totalorder %s224, 1
                %s229 = sphi %s215, %s215
                %s230 = sphi %s211, %s211
              $region47: #{tpu_custom_call.1} parent=43 // loop_header_branch
                %227 = sbr.rel (%p225) target = $region51
              $region48: #{tpu_custom_call.1} parent=43 // loop_body
                %v231 = vld [vmem:[%s229] sm:$0xff]
                %232 = vst [vmem:[%s230] sm:$0xff] %v231
                %v233 = vld [vmem:[%s229 + $0x10] sm:$0xff]
                %234 = vst [vmem:[%s230 + $0x8] sm:$0xff] %v233
                %v235 = vld [vmem:[%s229 + $0x20] sm:$0xff]
                %236 = vst [vmem:[%s230 + $0x10] sm:$0xff] %v235
                %v237 = vld [vmem:[%s229 + $0x30] sm:$0xff]
                %238 = vst [vmem:[%s230 + $0x18] sm:$0xff] %v237
              $region49: #{tpu_custom_call.1} parent=43 // loop_footer
                %s228 = sadd.s32 1, %s224
              $region50: #{tpu_custom_call.1} parent=43 // loop_footer_branch
                %223 = sbr.rel target = $region46
              $region51: #{tpu_custom_call.1} parent=43 // loop_exit
                _
            $region44: #{tpu_custom_call.1} parent=35 // pred_fallthru
              _
          $region36: #{tpu_custom_call.1} parent=31 // pred_fallthru
            _
          %259 = vnop
        $region32: #{tpu_custom_call.1} parent=27 // pred_fallthru
          _
      $region28: #{tpu_custom_call.1} parent=5 // pred_fallthru
        _
      %p260 = scmp.le.s32.totalorder 1, %s18
      %p261 = scmp.lt.s32.totalorder %s18, 5
      %p262 = pnand %p260, %p261
      %p263 = pneg %p262
      // Predicated region
      $region67: #{tpu_custom_call.1} parent=5 // pred_check
        _
      $region68: #{tpu_custom_call.1} parent=5 // pred_check_branch
        %265 = sbr.rel (%p262) target = $region70
      $region69: #{tpu_custom_call.1} parent=5 // pred_region
        %s266 = ssub.s32 %s18, 1
        %s267 = sand.u32 %s45, 1
        %s268 = sand.u32 %s45, 1
        %s269 = smul.addr %s268, 32
        %s270 = scalar_lea.vmem [#allocation2], %s269
        // Predicated region
        $region71: #{tpu_custom_call.1} parent=69 // pred_check
          %p271 = pneg %p58
        $region72: #{tpu_custom_call.1} parent=69 // pred_check_branch
          %273 = sbr.rel (%p271) target = $region74
        $region73: #{tpu_custom_call.1} parent=69 // pred_region
          _
        $region74: #{tpu_custom_call.1} parent=69 // pred_fallthru
          _
        %s274 = sand.u32 %s45, 1
        %s275 = sand.u32 %s45, 1
        %s276 = smul.addr %s275, 32
        %s277 = scalar_lea.vmem [#allocation2], %s276
        %p278 = pneg %p58
        %p279 = pneg %p55
        %p280 = pneg %p79
        %p281 = pneg %p76
        %p282 = pneg %p100
        %p283 = pneg %p97
        %p284 = pneg %p121
        %p285 = pneg %p118
        %p286 = pneg %p149
        %p287 = pneg %p146
        %s288 = sand.u32 %s136, 1
        %s289 = scalar_lea.sflag [#allocation4], %s288
        %s290 = sand.u32 %s136, 1
        %s291 = smul.addr %s290, 32
        %s292 = scalar_lea.vmem [#allocation3], %s291
        %p293 = pneg %p177
        %p294 = pneg %p174
        %s295 = sand.u32 %s164, 1
        %s296 = scalar_lea.sflag [#allocation6], %s295
        %s297 = sand.u32 %s164, 1
        %s298 = smul.addr %s297, 4
        %s299 = scalar_lea.vmem [#allocation5], %s298
        %v300 = vld [vmem:[%s270] sm:$0xff]
        %v301 = vld [vmem:[%s270 + $0x8] sm:$0xff]
        %v302 = vld [vmem:[%s270 + $0x10] sm:$0xff]
        %v303 = vld [vmem:[%s270 + $0x18] sm:$0xff]
        %v304 = vlaneseq
        %v305 = vshrl.u32 %v304, 7
        %v306 = vadd.s32 %v305, 8
        %v307 = vadd.s32 %v305, 16
        %v308 = vadd.s32 %v305, 24
        %v309 = vadd.s32 %v305, 32
        %v310 = vadd.s32 %v305, 40
        %v311 = vadd.s32 %v305, 48
        %v312 = vadd.s32 %v305, 56
        %v313 = vadd.s32 %v305, 64
        %v314 = vadd.s32 %v305, 72
        %v315 = vadd.s32 %v305, 80
        %v316 = vadd.s32 %v305, 88
        %v317 = vadd.s32 %v305, 96
        %v318 = vadd.s32 %v305, 104
        %v319 = vadd.s32 %v305, 112
        %v320 = vadd.s32 %v305, 120
        %v321 = vadd.s32 %v305, 128
        %v322 = vadd.s32 %v305, 136
        %v323 = vadd.s32 %v305, 144
        %v324 = vadd.s32 %v305, 152
        %v325 = vadd.s32 %v305, 160
        %v326 = vadd.s32 %v305, 168
        %v327 = vadd.s32 %v305, 176
        %v328 = vadd.s32 %v305, 184
        %v329 = vadd.s32 %v305, 192
        %v330 = vadd.s32 %v305, 200
        %v331 = vadd.s32 %v305, 208
        %v332 = vadd.s32 %v305, 216
        %v333 = vadd.s32 %v305, 224
        %v334 = vadd.s32 %v305, 232
        %v335 = vadd.s32 %v305, 240
        %v336 = vadd.s32 %v305, 248
        %v337 = vld [vmem:[%s1] sm:$0xff]
        %v338 = vld [vmem:[%s1 + $0x8] sm:$0xff]
        %v339 = vld [vmem:[%s1 + $0x10] sm:$0xff]
        %v340 = vld [vmem:[%s1 + $0x18] sm:$0xff]
        %v341 = vld [vmem:[%s1 + $0x20] sm:$0xff]
        %v342 = vld [vmem:[%s1 + $0x28] sm:$0xff]
        %v343 = vld [vmem:[%s1 + $0x30] sm:$0xff]
        %v344 = vld [vmem:[%s1 + $0x38] sm:$0xff]
        %v345 = vld [vmem:[%s1 + $0x40] sm:$0xff]
        %v346 = vld [vmem:[%s1 + $0x48] sm:$0xff]
        %v347 = vld [vmem:[%s1 + $0x50] sm:$0xff]
        %v348 = vld [vmem:[%s1 + $0x58] sm:$0xff]
        %v349 = vld [vmem:[%s1 + $0x60] sm:$0xff]
        %v350 = vld [vmem:[%s1 + $0x68] sm:$0xff]
        %v351 = vld [vmem:[%s1 + $0x70] sm:$0xff]
        %v352 = vld [vmem:[%s1 + $0x78] sm:$0xff]
        %v353 = vld [vmem:[%s1 + $0x80] sm:$0xff]
        %v354 = vld [vmem:[%s1 + $0x88] sm:$0xff]
        %v355 = vld [vmem:[%s1 + $0x90] sm:$0xff]
        %v356 = vld [vmem:[%s1 + $0x98] sm:$0xff]
        %v357 = vld [vmem:[%s1 + $0xa0] sm:$0xff]
        %v358 = vld [vmem:[%s1 + $0xa8] sm:$0xff]
        %v359 = vld [vmem:[%s1 + $0xb0] sm:$0xff]
        %v360 = vld [vmem:[%s1 + $0xb8] sm:$0xff]
        %v361 = vld [vmem:[%s1 + $0xc0] sm:$0xff]
        %v362 = vld [vmem:[%s1 + $0xc8] sm:$0xff]
        %v363 = vld [vmem:[%s1 + $0xd0] sm:$0xff]
        %v364 = vld [vmem:[%s1 + $0xd8] sm:$0xff]
        %v365 = vld [vmem:[%s1 + $0xe0] sm:$0xff]
        %v366 = vld [vmem:[%s1 + $0xe8] sm:$0xff]
        %v367 = vld [vmem:[%s1 + $0xf0] sm:$0xff]
        %v368 = vld [vmem:[%s1 + $0xf8] sm:$0xff]
        %v369 = vld [vmem:[%s2] sm:$0xff]
        %v370 = vld [vmem:[%s2 + $0x8] sm:$0xff]
        %v371 = vld [vmem:[%s2 + $0x10] sm:$0xff]
        %v372 = vld [vmem:[%s2 + $0x18] sm:$0xff]
        %v373 = vld [vmem:[%s2 + $0x20] sm:$0xff]
        %v374 = vld [vmem:[%s2 + $0x28] sm:$0xff]
        %v375 = vld [vmem:[%s2 + $0x30] sm:$0xff]
        %v376 = vld [vmem:[%s2 + $0x38] sm:$0xff]
        %v377 = vld [vmem:[%s3] sm:$0xff]
        %v378 = vld [vmem:[%s3 + $0x8] sm:$0xff]
        %v379 = vld [vmem:[%s3 + $0x10] sm:$0xff]
        %v380 = vld [vmem:[%s3 + $0x18] sm:$0xff]
        %v381 = vld [vmem:[%s3 + $0x20] sm:$0xff]
        %v382 = vld [vmem:[%s3 + $0x28] sm:$0xff]
        %v383 = vld [vmem:[%s3 + $0x30] sm:$0xff]
        %v384 = vld [vmem:[%s3 + $0x38] sm:$0xff]
        %v385 = vld [vmem:[%s3 + $0x40] sm:$0xff]
        %v386 = vld [vmem:[%s3 + $0x48] sm:$0xff]
        %v387 = vld [vmem:[%s3 + $0x50] sm:$0xff]
        %v388 = vld [vmem:[%s3 + $0x58] sm:$0xff]
        %v389 = vld [vmem:[%s3 + $0x60] sm:$0xff]
        %v390 = vld [vmem:[%s3 + $0x68] sm:$0xff]
        %v391 = vld [vmem:[%s3 + $0x70] sm:$0xff]
        %v392 = vld [vmem:[%s3 + $0x78] sm:$0xff]
        %v393 = vld [vmem:[%s3 + $0x80] sm:$0xff]
        %v394 = vld [vmem:[%s3 + $0x88] sm:$0xff]
        %v395 = vld [vmem:[%s3 + $0x90] sm:$0xff]
        %v396 = vld [vmem:[%s3 + $0x98] sm:$0xff]
        %v397 = vld [vmem:[%s3 + $0xa0] sm:$0xff]
        %v398 = vld [vmem:[%s3 + $0xa8] sm:$0xff]
        %v399 = vld [vmem:[%s3 + $0xb0] sm:$0xff]
        %v400 = vld [vmem:[%s3 + $0xb8] sm:$0xff]
        %v401 = vld [vmem:[%s3 + $0xc0] sm:$0xff]
        %v402 = vld [vmem:[%s3 + $0xc8] sm:$0xff]
        %v403 = vld [vmem:[%s3 + $0xd0] sm:$0xff]
        %v404 = vld [vmem:[%s3 + $0xd8] sm:$0xff]
        %v405 = vld [vmem:[%s3 + $0xe0] sm:$0xff]
        %v406 = vld [vmem:[%s3 + $0xe8] sm:$0xff]
        %v407 = vld [vmem:[%s3 + $0xf0] sm:$0xff]
        %v408 = vld [vmem:[%s3 + $0xf8] sm:$0xff]
        %vm409 = vcmask 261120
        %v411 = vsel %vm409, %v337, 0
        %v414 = vsel %vm409, %v338, 0
        %v417 = vsel %vm409, %v339, 0
        %v420 = vsel %vm409, %v340, 0
        %v423 = vsel %vm409, %v341, 0
        %v426 = vsel %vm409, %v342, 0
        %v429 = vsel %vm409, %v343, 0
        %v432 = vsel %vm409, %v344, 0
        %v435 = vsel %vm409, %v345, 0
        %v438 = vsel %vm409, %v346, 0
        %v441 = vsel %vm409, %v347, 0
        %v444 = vsel %vm409, %v348, 0
        %v447 = vsel %vm409, %v349, 0
        %v450 = vsel %vm409, %v350, 0
        %v453 = vsel %vm409, %v351, 0
        %v456 = vsel %vm409, %v352, 0
        %v459 = vsel %vm409, %v353, 0
        %v462 = vsel %vm409, %v354, 0
        %v465 = vsel %vm409, %v355, 0
        %v468 = vsel %vm409, %v356, 0
        %v471 = vsel %vm409, %v357, 0
        %v474 = vsel %vm409, %v358, 0
        %v477 = vsel %vm409, %v359, 0
        %v480 = vsel %vm409, %v360, 0
        %v483 = vsel %vm409, %v361, 0
        %v486 = vsel %vm409, %v362, 0
        %v489 = vsel %vm409, %v363, 0
        %v492 = vsel %vm409, %v364, 0
        %v495 = vsel %vm409, %v365, 0
        %v498 = vsel %vm409, %v366, 0
        %v501 = vsel %vm409, %v367, 0
        %v504 = vsel %vm409, %v368, 0
        %506 = vmatprep.subr.mxu0 0.0
        %507 = vmatpush1.msra.mxu0 %v300
        %508 = vmatprep.subr.mxu0 0.0
        %509 = vmatpush1.msra.mxu0 %v301
        %510 = vmatprep.subr.mxu0 0.0
        %511 = vmatpush1.msra.mxu0 %v302
        %512 = vmatprep.subr.mxu0 0.0
        %513 = vmatpush1.msra.mxu0 %v303
        %514 = vmatprep.subr.mxu0 0.0
        %515 = vmatpush1.msra.mxu0 0.0
        %516 = vmatprep.subr.mxu0 0.0
        %517 = vmatpush1.msra.mxu0 0.0
        %518 = vmatprep.subr.mxu0 0.0
        %519 = vmatpush1.msra.mxu0 0.0
        %520 = vmatprep.subr.mxu0 0.0
        %521 = vmatpush1.msra.mxu0 0.0
        %522 = vmatprep.subr.mxu0 0.0
        %523 = vmatpush1.msra.mxu0 0.0
        %524 = vmatprep.subr.mxu0 0.0
        %525 = vmatpush1.msra.mxu0 0.0
        %526 = vmatprep.subr.mxu0 0.0
        %527 = vmatpush1.msra.mxu0 0.0
        %528 = vmatprep.subr.mxu0 0.0
        %529 = vmatpush1.msra.mxu0 0.0
        %530 = vmatprep.subr.mxu0 0.0
        %531 = vmatpush1.msra.mxu0 0.0
        %532 = vmatprep.subr.mxu0 0.0
        %533 = vmatpush1.msra.mxu0 0.0
        %534 = vmatprep.subr.mxu0 0.0
        %535 = vmatpush1.msra.mxu0 0.0
        %536 = vmatprep.subr.mxu0 0.0
        %537 = vmatpush1.msra.mxu0 0.0
        %538 = vmatprep.subr.mxu0 0.0
        %539 = vmatpush1.msra.mxu0 0.0
        %540 = vmatprep.subr.mxu0 0.0
        %541 = vmatpush1.msra.mxu0 0.0
        %542 = vmatprep.subr.mxu0 0.0
        %543 = vmatpush1.msra.mxu0 0.0
        %544 = vmatprep.subr.mxu0 0.0
        %545 = vmatpush1.msra.mxu0 0.0
        %546 = vmatprep.subr.mxu0 0.0
        %547 = vmatpush1.msra.mxu0 0.0
        %548 = vmatprep.subr.mxu0 0.0
        %549 = vmatpush1.msra.mxu0 0.0
        %550 = vmatprep.subr.mxu0 0.0
        %551 = vmatpush1.msra.mxu0 0.0
        %552 = vmatprep.subr.mxu0 0.0
        %553 = vmatpush1.msra.mxu0 0.0
        %554 = vmatprep.subr.mxu0 0.0
        %555 = vmatpush1.msra.mxu0 0.0
        %556 = vmatprep.subr.mxu0 0.0
        %557 = vmatpush1.msra.mxu0 0.0
        %558 = vmatprep.subr.mxu0 0.0
        %559 = vmatpush1.msra.mxu0 0.0
        %560 = vmatprep.subr.mxu0 0.0
        %561 = vmatpush1.msra.mxu0 0.0
        %562 = vmatprep.subr.mxu0 0.0
        %563 = vmatpush1.msra.mxu0 0.0
        %564 = vmatprep.subr.mxu0 0.0
        %565 = vmatpush1.msra.mxu0 0.0
        %566 = vmatprep.subr.mxu0 0.0
        %567 = vmatpush1.msra.mxu0 0.0
        %568 = vmatprep.subr.mxu0 0.0
        %569 = vmatpush1.msra.mxu0 0.0
        %570 = vmatprep.mubr.f32.mxu0 0.0
        %571 = vmatmul.mubr.f32.gmra.mrb[0].mxu0 %v411
        %v572 = vpop.f32.mrb[0].mxu0
        %v573 = vadd.f32 0.0, %v572
        %v574 = vpop.f32.mrb[0].mxu0
        %575 = vmatprep.mubr.f32.mxu0 0.0
        %576 = vmatmul.mubr.f32.gmra.mrb[0].mxu0 %v414
        %v577 = vpop.f32.mrb[0].mxu0
        %v578 = vadd.f32 0.0, %v577
        %v579 = vpop.f32.mrb[0].mxu0
        %580 = vmatprep.mubr.f32.mxu0 0.0
        %581 = vmatmul.mubr.f32.gmra.mrb[0].mxu0 %v417
        %v582 = vpop.f32.mrb[0].mxu0
        %v583 = vadd.f32 0.0, %v582
        %v584 = vpop.f32.mrb[0].mxu0
        %585 = vmatprep.mubr.f32.mxu0 0.0
        %586 = vmatmul.mubr.f32.gmra.mrb[0].mxu0 %v420
        %v587 = vpop.f32.mrb[0].mxu0
        %v588 = vadd.f32 0.0, %v587
        %v589 = vpop.f32.mrb[0].mxu0
        %590 = vmatprep.mubr.f32.mxu0 0.0
        %591 = vmatmul.mubr.f32.gmra.mrb[0].mxu0 %v423
        %v592 = vpop.f32.mrb[0].mxu0
        %v593 = vadd.f32 0.0, %v592
        %v594 = vpop.f32.mrb[0].mxu0
        %595 = vmatprep.mubr.f32.mxu0 0.0
        %596 = vmatmul.mubr.f32.gmra.mrb[0].mxu0 %v426
        %v597 = vpop.f32.mrb[0].mxu0
        %v598 = vadd.f32 0.0, %v597
        %v599 = vpop.f32.mrb[0].mxu0
        %600 = vmatprep.mubr.f32.mxu0 0.0
        %601 = vmatmul.mubr.f32.gmra.mrb[0].mxu0 %v429
        %v602 = vpop.f32.mrb[0].mxu0
        %v603 = vadd.f32 0.0, %v602
        %v604 = vpop.f32.mrb[0].mxu0
        %605 = vmatprep.mubr.f32.mxu0 0.0
        %606 = vmatmul.mubr.f32.gmra.mrb[0].mxu0 %v432
        %v607 = vpop.f32.mrb[0].mxu0
        %v608 = vadd.f32 0.0, %v607
        %v609 = vpop.f32.mrb[0].mxu0
        %610 = vmatprep.mubr.f32.mxu0 0.0
        %611 = vmatmul.mubr.f32.gmra.mrb[0].mxu0 %v435
        %v612 = vpop.f32.mrb[0].mxu0
        %v613 = vadd.f32 0.0, %v612
        %v614 = vpop.f32.mrb[0].mxu0
        %615 = vmatprep.mubr.f32.mxu0 0.0
        %616 = vmatmul.mubr.f32.gmra.mrb[0].mxu0 %v438
        %v617 = vpop.f32.mrb[0].mxu0
        %v618 = vadd.f32 0.0, %v617
        %v619 = vpop.f32.mrb[0].mxu0
        %620 = vmatprep.mubr.f32.mxu0 0.0
        %621 = vmatmul.mubr.f32.gmra.mrb[0].mxu0 %v441
        %v622 = vpop.f32.mrb[0].mxu0
        %v623 = vadd.f32 0.0, %v622
        %v624 = vpop.f32.mrb[0].mxu0
        %625 = vmatprep.mubr.f32.mxu0 0.0
        %626 = vmatmul.mubr.f32.gmra.mrb[0].mxu0 %v444
        %v627 = vpop.f32.mrb[0].mxu0
        %v628 = vadd.f32 0.0, %v627
        %v629 = vpop.f32.mrb[0].mxu0
        %630 = vmatprep.mubr.f32.mxu0 0.0
        %631 = vmatmul.mubr.f32.gmra.mrb[0].mxu0 %v447
        %v632 = vpop.f32.mrb[0].mxu0
        %v633 = vadd.f32 0.0, %v632
        %v634 = vpop.f32.mrb[0].mxu0
        %635 = vmatprep.mubr.f32.mxu0 0.0
        %636 = vmatmul.mubr.f32.gmra.mrb[0].mxu0 %v450
        %v637 = vpop.f32.mrb[0].mxu0
        %v638 = vadd.f32 0.0, %v637
        %v639 = vpop.f32.mrb[0].mxu0
        %640 = vmatprep.mubr.f32.mxu0 0.0
        %641 = vmatmul.mubr.f32.gmra.mrb[0].mxu0 %v453
        %v642 = vpop.f32.mrb[0].mxu0
        %v643 = vadd.f32 0.0, %v642
        %v644 = vpop.f32.mrb[0].mxu0
        %645 = vmatprep.mubr.f32.mxu0 0.0
        %646 = vmatmul.mubr.f32.gmra.mrb[0].mxu0 %v456
        %v647 = vpop.f32.mrb[0].mxu0
        %v648 = vadd.f32 0.0, %v647
        %v649 = vpop.f32.mrb[0].mxu0
        %650 = vmatprep.mubr.f32.mxu0 0.0
        %651 = vmatmul.mubr.f32.gmra.mrb[0].mxu0 %v459
        %v652 = vpop.f32.mrb[0].mxu0
        %v653 = vadd.f32 0.0, %v652
        %v654 = vpop.f32.mrb[0].mxu0
        %655 = vmatprep.mubr.f32.mxu0 0.0
        %656 = vmatmul.mubr.f32.gmra.mrb[0].mxu0 %v462
        %v657 = vpop.f32.mrb[0].mxu0
        %v658 = vadd.f32 0.0, %v657
        %v659 = vpop.f32.mrb[0].mxu0
        %660 = vmatprep.mubr.f32.mxu0 0.0
        %661 = vmatmul.mubr.f32.gmra.mrb[0].mxu0 %v465
        %v662 = vpop.f32.mrb[0].mxu0
        %v663 = vadd.f32 0.0, %v662
        %v664 = vpop.f32.mrb[0].mxu0
        %665 = vmatprep.mubr.f32.mxu0 0.0
        %666 = vmatmul.mubr.f32.gmra.mrb[0].mxu0 %v468
        %v667 = vpop.f32.mrb[0].mxu0
        %v668 = vadd.f32 0.0, %v667
        %v669 = vpop.f32.mrb[0].mxu0
        %670 = vmatprep.mubr.f32.mxu0 0.0
        %671 = vmatmul.mubr.f32.gmra.mrb[0].mxu0 %v471
        %v672 = vpop.f32.mrb[0].mxu0
        %v673 = vadd.f32 0.0, %v672
        %v674 = vpop.f32.mrb[0].mxu0
        %675 = vmatprep.mubr.f32.mxu0 0.0
        %676 = vmatmul.mubr.f32.gmra.mrb[0].mxu0 %v474
        %v677 = vpop.f32.mrb[0].mxu0
        %v678 = vadd.f32 0.0, %v677
        %v679 = vpop.f32.mrb[0].mxu0
        %680 = vmatprep.mubr.f32.mxu0 0.0
        %681 = vmatmul.mubr.f32.gmra.mrb[0].mxu0 %v477
        %v682 = vpop.f32.mrb[0].mxu0
        %v683 = vadd.f32 0.0, %v682
        %v684 = vpop.f32.mrb[0].mxu0
        %685 = vmatprep.mubr.f32.mxu0 0.0
        %686 = vmatmul.mubr.f32.gmra.mrb[0].mxu0 %v480
        %v687 = vpop.f32.mrb[0].mxu0
        %v688 = vadd.f32 0.0, %v687
        %v689 = vpop.f32.mrb[0].mxu0
        %690 = vmatprep.mubr.f32.mxu0 0.0
        %691 = vmatmul.mubr.f32.gmra.mrb[0].mxu0 %v483
        %v692 = vpop.f32.mrb[0].mxu0
        %v693 = vadd.f32 0.0, %v692
        %v694 = vpop.f32.mrb[0].mxu0
        %695 = vmatprep.mubr.f32.mxu0 0.0
        %696 = vmatmul.mubr.f32.gmra.mrb[0].mxu0 %v486
        %v697 = vpop.f32.mrb[0].mxu0
        %v698 = vadd.f32 0.0, %v697
        %v699 = vpop.f32.mrb[0].mxu0
        %700 = vmatprep.mubr.f32.mxu0 0.0
        %701 = vmatmul.mubr.f32.gmra.mrb[0].mxu0 %v489
        %v702 = vpop.f32.mrb[0].mxu0
        %v703 = vadd.f32 0.0, %v702
        %v704 = vpop.f32.mrb[0].mxu0
        %705 = vmatprep.mubr.f32.mxu0 0.0
        %706 = vmatmul.mubr.f32.gmra.mrb[0].mxu0 %v492
        %v707 = vpop.f32.mrb[0].mxu0
        %v708 = vadd.f32 0.0, %v707
        %v709 = vpop.f32.mrb[0].mxu0
        %710 = vmatprep.mubr.f32.mxu0 0.0
        %711 = vmatmul.mubr.f32.gmra.mrb[0].mxu0 %v495
        %v712 = vpop.f32.mrb[0].mxu0
        %v713 = vadd.f32 0.0, %v712
        %v714 = vpop.f32.mrb[0].mxu0
        %715 = vmatprep.mubr.f32.mxu0 0.0
        %716 = vmatmul.mubr.f32.gmra.mrb[0].mxu0 %v498
        %v717 = vpop.f32.mrb[0].mxu0
        %v718 = vadd.f32 0.0, %v717
        %v719 = vpop.f32.mrb[0].mxu0
        %720 = vmatprep.mubr.f32.mxu0 0.0
        %721 = vmatmul.mubr.f32.gmra.mrb[0].mxu0 %v501
        %v722 = vpop.f32.mrb[0].mxu0
        %v723 = vadd.f32 0.0, %v722
        %v724 = vpop.f32.mrb[0].mxu0
        %725 = vmatprep.mubr.f32.mxu0 0.0
        %726 = vmatmul.mubr.f32.gmra.mrb[0].mxu0 %v504
        %v727 = vpop.f32.mrb[0].mxu0
        %v728 = vadd.f32 0.0, %v727
        %v729 = vpop.f32.mrb[0].mxu0
        %730 = vdwg.mxu0
        %v731 = vmul.f32 %v573, 2.0
        %v732 = vmul.f32 %v578, 2.0
        %v733 = vmul.f32 %v583, 2.0
        %v734 = vmul.f32 %v588, 2.0
        %v735 = vmul.f32 %v593, 2.0
        %v736 = vmul.f32 %v598, 2.0
        %v737 = vmul.f32 %v603, 2.0
        %v738 = vmul.f32 %v608, 2.0
        %v739 = vmul.f32 %v613, 2.0
        %v740 = vmul.f32 %v618, 2.0
        %v741 = vmul.f32 %v623, 2.0
        %v742 = vmul.f32 %v628, 2.0
        %v743 = vmul.f32 %v633, 2.0
        %v744 = vmul.f32 %v638, 2.0
        %v745 = vmul.f32 %v643, 2.0
        %v746 = vmul.f32 %v648, 2.0
        %v747 = vmul.f32 %v653, 2.0
        %v748 = vmul.f32 %v658, 2.0
        %v749 = vmul.f32 %v663, 2.0
        %v750 = vmul.f32 %v668, 2.0
        %v751 = vmul.f32 %v673, 2.0
        %v752 = vmul.f32 %v678, 2.0
        %v753 = vmul.f32 %v683, 2.0
        %v754 = vmul.f32 %v688, 2.0
        %v755 = vmul.f32 %v693, 2.0
        %v756 = vmul.f32 %v698, 2.0
        %v757 = vmul.f32 %v703, 2.0
        %v758 = vmul.f32 %v708, 2.0
        %v759 = vmul.f32 %v713, 2.0
        %v760 = vmul.f32 %v718, 2.0
        %v761 = vmul.f32 %v723, 2.0
        %v762 = vmul.f32 %v728, 2.0
        %764 = vset.pattern.permute.xlu0 0
        %765 = vperm.xlu0 %764, %v377
        %v766 = vpop.permute.xlu0 %765
        %769 = vset.pattern.permute.xlu0 0
        %770 = vperm.xlu0 %769, %v378
        %v771 = vpop.permute.xlu0 %770
        %774 = vset.pattern.permute.xlu0 0
        %775 = vperm.xlu0 %774, %v379
        %v776 = vpop.permute.xlu0 %775
        %779 = vset.pattern.permute.xlu0 0
        %780 = vperm.xlu0 %779, %v380
        %v781 = vpop.permute.xlu0 %780
        %784 = vset.pattern.permute.xlu0 0
        %785 = vperm.xlu0 %784, %v381
        %v786 = vpop.permute.xlu0 %785
        %789 = vset.pattern.permute.xlu0 0
        %790 = vperm.xlu0 %789, %v382
        %v791 = vpop.permute.xlu0 %790
        %794 = vset.pattern.permute.xlu0 0
        %795 = vperm.xlu0 %794, %v383
        %v796 = vpop.permute.xlu0 %795
        %799 = vset.pattern.permute.xlu0 0
        %800 = vperm.xlu0 %799, %v384
        %v801 = vpop.permute.xlu0 %800
        %804 = vset.pattern.permute.xlu0 0
        %805 = vperm.xlu0 %804, %v385
        %v806 = vpop.permute.xlu0 %805
        %809 = vset.pattern.permute.xlu0 0
        %810 = vperm.xlu0 %809, %v386
        %v811 = vpop.permute.xlu0 %810
        %814 = vset.pattern.permute.xlu0 0
        %815 = vperm.xlu0 %814, %v387
        %v816 = vpop.permute.xlu0 %815
        %819 = vset.pattern.permute.xlu0 0
        %820 = vperm.xlu0 %819, %v388
        %v821 = vpop.permute.xlu0 %820
        %824 = vset.pattern.permute.xlu0 0
        %825 = vperm.xlu0 %824, %v389
        %v826 = vpop.permute.xlu0 %825
        %829 = vset.pattern.permute.xlu0 0
        %830 = vperm.xlu0 %829, %v390
        %v831 = vpop.permute.xlu0 %830
        %834 = vset.pattern.permute.xlu0 0
        %835 = vperm.xlu0 %834, %v391
        %v836 = vpop.permute.xlu0 %835
        %839 = vset.pattern.permute.xlu0 0
        %840 = vperm.xlu0 %839, %v392
        %v841 = vpop.permute.xlu0 %840
        %844 = vset.pattern.permute.xlu0 0
        %845 = vperm.xlu0 %844, %v393
        %v846 = vpop.permute.xlu0 %845
        %849 = vset.pattern.permute.xlu0 0
        %850 = vperm.xlu0 %849, %v394
        %v851 = vpop.permute.xlu0 %850
        %854 = vset.pattern.permute.xlu0 0
        %855 = vperm.xlu0 %854, %v395
        %v856 = vpop.permute.xlu0 %855
        %859 = vset.pattern.permute.xlu0 0
        %860 = vperm.xlu0 %859, %v396
        %v861 = vpop.permute.xlu0 %860
        %864 = vset.pattern.permute.xlu0 0
        %865 = vperm.xlu0 %864, %v397
        %v866 = vpop.permute.xlu0 %865
        %869 = vset.pattern.permute.xlu0 0
        %870 = vperm.xlu0 %869, %v398
        %v871 = vpop.permute.xlu0 %870
        %874 = vset.pattern.permute.xlu0 0
        %875 = vperm.xlu0 %874, %v399
        %v876 = vpop.permute.xlu0 %875
        %879 = vset.pattern.permute.xlu0 0
        %880 = vperm.xlu0 %879, %v400
        %v881 = vpop.permute.xlu0 %880
        %884 = vset.pattern.permute.xlu0 0
        %885 = vperm.xlu0 %884, %v401
        %v886 = vpop.permute.xlu0 %885
        %889 = vset.pattern.permute.xlu0 0
        %890 = vperm.xlu0 %889, %v402
        %v891 = vpop.permute.xlu0 %890
        %894 = vset.pattern.permute.xlu0 0
        %895 = vperm.xlu0 %894, %v403
        %v896 = vpop.permute.xlu0 %895
        %899 = vset.pattern.permute.xlu0 0
        %900 = vperm.xlu0 %899, %v404
        %v901 = vpop.permute.xlu0 %900
        %904 = vset.pattern.permute.xlu0 0
        %905 = vperm.xlu0 %904, %v405
        %v906 = vpop.permute.xlu0 %905
        %909 = vset.pattern.permute.xlu0 0
        %910 = vperm.xlu0 %909, %v406
        %v911 = vpop.permute.xlu0 %910
        %914 = vset.pattern.permute.xlu0 0
        %915 = vperm.xlu0 %914, %v407
        %v916 = vpop.permute.xlu0 %915
        %919 = vset.pattern.permute.xlu0 0
        %920 = vperm.xlu0 %919, %v408
        %v921 = vpop.permute.xlu0 %920
        %v923 = vsub.f32 %v731, %v766
        %v924 = vsub.f32 %v732, %v771
        %v925 = vsub.f32 %v733, %v776
        %v926 = vsub.f32 %v734, %v781
        %v927 = vsub.f32 %v735, %v786
        %v928 = vsub.f32 %v736, %v791
        %v929 = vsub.f32 %v737, %v796
        %v930 = vsub.f32 %v738, %v801
        %v931 = vsub.f32 %v739, %v806
        %v932 = vsub.f32 %v740, %v811
        %v933 = vsub.f32 %v741, %v816
        %v934 = vsub.f32 %v742, %v821
        %v935 = vsub.f32 %v743, %v826
        %v936 = vsub.f32 %v744, %v831
        %v937 = vsub.f32 %v745, %v836
        %v938 = vsub.f32 %v746, %v841
        %v939 = vsub.f32 %v747, %v846
        %v940 = vsub.f32 %v748, %v851
        %v941 = vsub.f32 %v749, %v856
        %v942 = vsub.f32 %v750, %v861
        %v943 = vsub.f32 %v751, %v866
        %v944 = vsub.f32 %v752, %v871
        %v945 = vsub.f32 %v753, %v876
        %v946 = vsub.f32 %v754, %v881
        %v947 = vsub.f32 %v755, %v886
        %v948 = vsub.f32 %v756, %v891
        %v949 = vsub.f32 %v757, %v896
        %v950 = vsub.f32 %v758, %v901
        %v951 = vsub.f32 %v759, %v906
        %v952 = vsub.f32 %v760, %v911
        %v953 = vsub.f32 %v761, %v916
        %v954 = vsub.f32 %v762, %v921
        %v955 = vmax.f32 %v923, %v927
        %v956 = vmax.f32 %v924, %v928
        %v957 = vmax.f32 %v925, %v929
        %v958 = vmax.f32 %v926, %v930
        %v959 = vmax.f32 %v955, %v931
        %v960 = vmax.f32 %v956, %v932
        %v961 = vmax.f32 %v957, %v933
        %v962 = vmax.f32 %v958, %v934
        %v963 = vmax.f32 %v959, %v935
        %v964 = vmax.f32 %v960, %v936
        %v965 = vmax.f32 %v961, %v937
        %v966 = vmax.f32 %v962, %v938
        %v967 = vmax.f32 %v963, %v939
        %v968 = vmax.f32 %v964, %v940
        %v969 = vmax.f32 %v965, %v941
        %v970 = vmax.f32 %v966, %v942
        %v971 = vmax.f32 %v967, %v943
        %v972 = vmax.f32 %v968, %v944
        %v973 = vmax.f32 %v969, %v945
        %v974 = vmax.f32 %v970, %v946
        %v975 = vmax.f32 %v971, %v947
        %v976 = vmax.f32 %v972, %v948
        %v977 = vmax.f32 %v973, %v949
        %v978 = vmax.f32 %v974, %v950
        %v979 = vmax.f32 %v975, %v951
        %v980 = vmax.f32 %v976, %v952
        %v981 = vmax.f32 %v977, %v953
        %v982 = vmax.f32 %v978, %v954
        %v983 = vmax.f32 %v979, %v980
        %v984 = vmax.f32 %v981, %v982
        %v985 = vmax.f32 %v983, %v984
        %v986 = vrot.slane %v985, 4
        %v987 = vmax.f32 %v985, %v986
        %v988 = vrot.slane %v987, 2
        %v989 = vmax.f32 %v987, %v988
        %v990 = vrot.slane %v989, 1
        %v991 = vmax.f32 %v989, %v990
        %vm992 = vcmp.ge.f32.partialorder %v923, %v991
        %vm993 = vcmp.ge.f32.partialorder %v924, %v991
        %vm994 = vcmp.ge.f32.partialorder %v925, %v991
        %vm995 = vcmp.ge.f32.partialorder %v926, %v991
        %vm996 = vcmp.ge.f32.partialorder %v927, %v991
        %vm997 = vcmp.ge.f32.partialorder %v928, %v991
        %vm998 = vcmp.ge.f32.partialorder %v929, %v991
        %vm999 = vcmp.ge.f32.partialorder %v930, %v991
        %vm1000 = vcmp.ge.f32.partialorder %v931, %v991
        %vm1001 = vcmp.ge.f32.partialorder %v932, %v991
        %vm1002 = vcmp.ge.f32.partialorder %v933, %v991
        %vm1003 = vcmp.ge.f32.partialorder %v934, %v991
        %vm1004 = vcmp.ge.f32.partialorder %v935, %v991
        %vm1005 = vcmp.ge.f32.partialorder %v936, %v991
        %vm1006 = vcmp.ge.f32.partialorder %v937, %v991
        %vm1007 = vcmp.ge.f32.partialorder %v938, %v991
        %vm1008 = vcmp.ge.f32.partialorder %v939, %v991
        %vm1009 = vcmp.ge.f32.partialorder %v940, %v991
        %vm1010 = vcmp.ge.f32.partialorder %v941, %v991
        %vm1011 = vcmp.ge.f32.partialorder %v942, %v991
        %vm1012 = vcmp.ge.f32.partialorder %v943, %v991
        %vm1013 = vcmp.ge.f32.partialorder %v944, %v991
        %vm1014 = vcmp.ge.f32.partialorder %v945, %v991
        %vm1015 = vcmp.ge.f32.partialorder %v946, %v991
        %vm1016 = vcmp.ge.f32.partialorder %v947, %v991
        %vm1017 = vcmp.ge.f32.partialorder %v948, %v991
        %vm1018 = vcmp.ge.f32.partialorder %v949, %v991
        %vm1019 = vcmp.ge.f32.partialorder %v950, %v991
        %vm1020 = vcmp.ge.f32.partialorder %v951, %v991
        %vm1021 = vcmp.ge.f32.partialorder %v952, %v991
        %vm1022 = vcmp.ge.f32.partialorder %v953, %v991
        %vm1023 = vcmp.ge.f32.partialorder %v954, %v991
        %v1024 = vsel %vm992, %v305, 256
        %v1025 = vsel %vm993, %v306, 256
        %v1026 = vsel %vm994, %v307, 256
        %v1027 = vsel %vm995, %v308, 256
        %v1028 = vsel %vm996, %v309, 256
        %v1029 = vsel %vm997, %v310, 256
        %v1030 = vsel %vm998, %v311, 256
        %v1031 = vsel %vm999, %v312, 256
        %v1032 = vsel %vm1000, %v313, 256
        %v1033 = vsel %vm1001, %v314, 256
        %v1034 = vsel %vm1002, %v315, 256
        %v1035 = vsel %vm1003, %v316, 256
        %v1036 = vsel %vm1004, %v317, 256
        %v1037 = vsel %vm1005, %v318, 256
        %v1038 = vsel %vm1006, %v319, 256
        %v1039 = vsel %vm1007, %v320, 256
        %v1040 = vsel %vm1008, %v321, 256
        %v1041 = vsel %vm1009, %v322, 256
        %v1042 = vsel %vm1010, %v323, 256
        %v1043 = vsel %vm1011, %v324, 256
        %v1044 = vsel %vm1012, %v325, 256
        %v1045 = vsel %vm1013, %v326, 256
        %v1046 = vsel %vm1014, %v327, 256
        %v1047 = vsel %vm1015, %v328, 256
        %v1048 = vsel %vm1016, %v329, 256
        %v1049 = vsel %vm1017, %v330, 256
        %v1050 = vsel %vm1018, %v331, 256
        %v1051 = vsel %vm1019, %v332, 256
        %v1052 = vsel %vm1020, %v333, 256
        %v1053 = vsel %vm1021, %v334, 256
        %v1054 = vsel %vm1022, %v335, 256
        %v1055 = vsel %vm1023, %v336, 256
        %vm1056 = vcmp.lt.s32.totalorder %v1024, %v1028
        %v1057 = vsel %vm1056, %v1024, %v1028
        %vm1058 = vcmp.lt.s32.totalorder %v1025, %v1029
        %v1059 = vsel %vm1058, %v1025, %v1029
        %vm1060 = vcmp.lt.s32.totalorder %v1026, %v1030
        %v1061 = vsel %vm1060, %v1026, %v1030
        %vm1062 = vcmp.lt.s32.totalorder %v1027, %v1031
        %v1063 = vsel %vm1062, %v1027, %v1031
        %vm1064 = vcmp.lt.s32.totalorder %v1057, %v1032
        %v1065 = vsel %vm1064, %v1057, %v1032
        %vm1066 = vcmp.lt.s32.totalorder %v1059, %v1033
        %v1067 = vsel %vm1066, %v1059, %v1033
        %vm1068 = vcmp.lt.s32.totalorder %v1061, %v1034
        %v1069 = vsel %vm1068, %v1061, %v1034
        %vm1070 = vcmp.lt.s32.totalorder %v1063, %v1035
        %v1071 = vsel %vm1070, %v1063, %v1035
        %vm1072 = vcmp.lt.s32.totalorder %v1065, %v1036
        %v1073 = vsel %vm1072, %v1065, %v1036
        %vm1074 = vcmp.lt.s32.totalorder %v1067, %v1037
        %v1075 = vsel %vm1074, %v1067, %v1037
        %vm1076 = vcmp.lt.s32.totalorder %v1069, %v1038
        %v1077 = vsel %vm1076, %v1069, %v1038
        %vm1078 = vcmp.lt.s32.totalorder %v1071, %v1039
        %v1079 = vsel %vm1078, %v1071, %v1039
        %vm1080 = vcmp.lt.s32.totalorder %v1073, %v1040
        %v1081 = vsel %vm1080, %v1073, %v1040
        %vm1082 = vcmp.lt.s32.totalorder %v1075, %v1041
        %v1083 = vsel %vm1082, %v1075, %v1041
        %vm1084 = vcmp.lt.s32.totalorder %v1077, %v1042
        %v1085 = vsel %vm1084, %v1077, %v1042
        %vm1086 = vcmp.lt.s32.totalorder %v1079, %v1043
        %v1087 = vsel %vm1086, %v1079, %v1043
        %vm1088 = vcmp.lt.s32.totalorder %v1081, %v1044
        %v1089 = vsel %vm1088, %v1081, %v1044
        %vm1090 = vcmp.lt.s32.totalorder %v1083, %v1045
        %v1091 = vsel %vm1090, %v1083, %v1045
        %vm1092 = vcmp.lt.s32.totalorder %v1085, %v1046
        %v1093 = vsel %vm1092, %v1085, %v1046
        %vm1094 = vcmp.lt.s32.totalorder %v1087, %v1047
        %v1095 = vsel %vm1094, %v1087, %v1047
        %vm1096 = vcmp.lt.s32.totalorder %v1089, %v1048
        %v1097 = vsel %vm1096, %v1089, %v1048
        %vm1098 = vcmp.lt.s32.totalorder %v1091, %v1049
        %v1099 = vsel %vm1098, %v1091, %v1049
        %vm1100 = vcmp.lt.s32.totalorder %v1093, %v1050
        %v1101 = vsel %vm1100, %v1093, %v1050
        %vm1102 = vcmp.lt.s32.totalorder %v1095, %v1051
        %v1103 = vsel %vm1102, %v1095, %v1051
        %vm1104 = vcmp.lt.s32.totalorder %v1097, %v1052
        %v1105 = vsel %vm1104, %v1097, %v1052
        %vm1106 = vcmp.lt.s32.totalorder %v1099, %v1053
        %v1107 = vsel %vm1106, %v1099, %v1053
        %vm1108 = vcmp.lt.s32.totalorder %v1101, %v1054
        %v1109 = vsel %vm1108, %v1101, %v1054
        %vm1110 = vcmp.lt.s32.totalorder %v1103, %v1055
        %v1111 = vsel %vm1110, %v1103, %v1055
        %vm1112 = vcmp.lt.s32.totalorder %v1105, %v1107
        %v1113 = vsel %vm1112, %v1105, %v1107
        %vm1114 = vcmp.lt.s32.totalorder %v1109, %v1111
        %v1115 = vsel %vm1114, %v1109, %v1111
        %vm1116 = vcmp.lt.s32.totalorder %v1113, %v1115
        %v1117 = vsel %vm1116, %v1113, %v1115
        %v1118 = vrot.slane %v1117, 4
        %vm1119 = vcmp.lt.s32.totalorder %v1117, %v1118
        %v1120 = vsel %vm1119, %v1117, %v1118
        %v1121 = vrot.slane %v1120, 2
        %vm1122 = vcmp.lt.s32.totalorder %v1120, %v1121
        %v1123 = vsel %vm1122, %v1120, %v1121
        %v1124 = vrot.slane %v1123, 1
        %vm1125 = vcmp.lt.s32.totalorder %v1123, %v1124
        %v1126 = vsel %vm1125, %v1123, %v1124
        %vm1127 = vcmp.eq.s32.totalorder %v305, %v1126
        %vm1128 = vcmp.eq.s32.totalorder %v306, %v1126
        %vm1129 = vcmp.eq.s32.totalorder %v307, %v1126
        %vm1130 = vcmp.eq.s32.totalorder %v308, %v1126
        %vm1131 = vcmp.eq.s32.totalorder %v309, %v1126
        %vm1132 = vcmp.eq.s32.totalorder %v310, %v1126
        %vm1133 = vcmp.eq.s32.totalorder %v311, %v1126
        %vm1134 = vcmp.eq.s32.totalorder %v312, %v1126
        %vm1135 = vcmp.eq.s32.totalorder %v313, %v1126
        %vm1136 = vcmp.eq.s32.totalorder %v314, %v1126
        %vm1137 = vcmp.eq.s32.totalorder %v315, %v1126
        %vm1138 = vcmp.eq.s32.totalorder %v316, %v1126
        %vm1139 = vcmp.eq.s32.totalorder %v317, %v1126
        %vm1140 = vcmp.eq.s32.totalorder %v318, %v1126
        %vm1141 = vcmp.eq.s32.totalorder %v319, %v1126
        %vm1142 = vcmp.eq.s32.totalorder %v320, %v1126
        %vm1143 = vcmp.eq.s32.totalorder %v321, %v1126
        %vm1144 = vcmp.eq.s32.totalorder %v322, %v1126
        %vm1145 = vcmp.eq.s32.totalorder %v323, %v1126
        %vm1146 = vcmp.eq.s32.totalorder %v324, %v1126
        %vm1147 = vcmp.eq.s32.totalorder %v325, %v1126
        %vm1148 = vcmp.eq.s32.totalorder %v326, %v1126
        %vm1149 = vcmp.eq.s32.totalorder %v327, %v1126
        %vm1150 = vcmp.eq.s32.totalorder %v328, %v1126
        %vm1151 = vcmp.eq.s32.totalorder %v329, %v1126
        %vm1152 = vcmp.eq.s32.totalorder %v330, %v1126
        %vm1153 = vcmp.eq.s32.totalorder %v331, %v1126
        %vm1154 = vcmp.eq.s32.totalorder %v332, %v1126
        %vm1155 = vcmp.eq.s32.totalorder %v333, %v1126
        %vm1156 = vcmp.eq.s32.totalorder %v334, %v1126
        %vm1157 = vcmp.eq.s32.totalorder %v335, %v1126
        %vm1158 = vcmp.eq.s32.totalorder %v336, %v1126
        %v1159 = vsel %vm1127, 1, 0
        %v1160 = vsel %vm1128, 1, 0
        %v1161 = vsel %vm1129, 1, 0
        %v1162 = vsel %vm1130, 1, 0
        %v1163 = vsel %vm1131, 1, 0
        %v1164 = vsel %vm1132, 1, 0
        %v1165 = vsel %vm1133, 1, 0
        %v1166 = vsel %vm1134, 1, 0
        %v1167 = vsel %vm1135, 1, 0
        %v1168 = vsel %vm1136, 1, 0
        %v1169 = vsel %vm1137, 1, 0
        %v1170 = vsel %vm1138, 1, 0
        %v1171 = vsel %vm1139, 1, 0
        %v1172 = vsel %vm1140, 1, 0
        %v1173 = vsel %vm1141, 1, 0
        %v1174 = vsel %vm1142, 1, 0
        %v1175 = vsel %vm1143, 1, 0
        %v1176 = vsel %vm1144, 1, 0
        %v1177 = vsel %vm1145, 1, 0
        %v1178 = vsel %vm1146, 1, 0
        %v1179 = vsel %vm1147, 1, 0
        %v1180 = vsel %vm1148, 1, 0
        %v1181 = vsel %vm1149, 1, 0
        %v1182 = vsel %vm1150, 1, 0
        %v1183 = vsel %vm1151, 1, 0
        %v1184 = vsel %vm1152, 1, 0
        %v1185 = vsel %vm1153, 1, 0
        %v1186 = vsel %vm1154, 1, 0
        %v1187 = vsel %vm1155, 1, 0
        %v1188 = vsel %vm1156, 1, 0
        %v1189 = vsel %vm1157, 1, 0
        %v1190 = vsel %vm1158, 1, 0
        %v1191 = vcvt.s32.f32 %v1159
        %v1192 = vcvt.s32.f32 %v1160
        %v1193 = vcvt.s32.f32 %v1161
        %v1194 = vcvt.s32.f32 %v1162
        %v1195 = vcvt.s32.f32 %v1163
        %v1196 = vcvt.s32.f32 %v1164
        %v1197 = vcvt.s32.f32 %v1165
        %v1198 = vcvt.s32.f32 %v1166
        %v1199 = vcvt.s32.f32 %v1167
        %v1200 = vcvt.s32.f32 %v1168
        %v1201 = vcvt.s32.f32 %v1169
        %v1202 = vcvt.s32.f32 %v1170
        %v1203 = vcvt.s32.f32 %v1171
        %v1204 = vcvt.s32.f32 %v1172
        %v1205 = vcvt.s32.f32 %v1173
        %v1206 = vcvt.s32.f32 %v1174
        %v1207 = vcvt.s32.f32 %v1175
        %v1208 = vcvt.s32.f32 %v1176
        %v1209 = vcvt.s32.f32 %v1177
        %v1210 = vcvt.s32.f32 %v1178
        %v1211 = vcvt.s32.f32 %v1179
        %v1212 = vcvt.s32.f32 %v1180
        %v1213 = vcvt.s32.f32 %v1181
        %v1214 = vcvt.s32.f32 %v1182
        %v1215 = vcvt.s32.f32 %v1183
        %v1216 = vcvt.s32.f32 %v1184
        %v1217 = vcvt.s32.f32 %v1185
        %v1218 = vcvt.s32.f32 %v1186
        %v1219 = vcvt.s32.f32 %v1187
        %v1220 = vcvt.s32.f32 %v1188
        %v1221 = vcvt.s32.f32 %v1189
        %v1222 = vcvt.s32.f32 %v1190
        %1223 = vmatprep.subr.mxu0 0.0
        %1224 = vmatpush1.msra.mxu0 %v1191
        %1225 = vmatprep.subr.mxu0 0.0
        %1226 = vmatpush1.msra.mxu0 %v1192
        %1227 = vmatprep.subr.mxu0 0.0
        %1228 = vmatpush1.msra.mxu0 %v1193
        %1229 = vmatprep.subr.mxu0 0.0
        %1230 = vmatpush1.msra.mxu0 %v1194
        %1231 = vmatprep.subr.mxu0 0.0
        %1232 = vmatpush1.msra.mxu0 %v1195
        %1233 = vmatprep.subr.mxu0 0.0
        %1234 = vmatpush1.msra.mxu0 %v1196
        %1235 = vmatprep.subr.mxu0 0.0
        %1236 = vmatpush1.msra.mxu0 %v1197
        %1237 = vmatprep.subr.mxu0 0.0
        %1238 = vmatpush1.msra.mxu0 %v1198
        %1239 = vmatprep.subr.mxu0 0.0
        %1240 = vmatpush1.msra.mxu0 %v1199
        %1241 = vmatprep.subr.mxu0 0.0
        %1242 = vmatpush1.msra.mxu0 %v1200
        %1243 = vmatprep.subr.mxu0 0.0
        %1244 = vmatpush1.msra.mxu0 %v1201
        %1245 = vmatprep.subr.mxu0 0.0
        %1246 = vmatpush1.msra.mxu0 %v1202
        %1247 = vmatprep.subr.mxu0 0.0
        %1248 = vmatpush1.msra.mxu0 %v1203
        %1249 = vmatprep.subr.mxu0 0.0
        %1250 = vmatpush1.msra.mxu0 %v1204
        %1251 = vmatprep.subr.mxu0 0.0
        %1252 = vmatpush1.msra.mxu0 %v1205
        %1253 = vmatprep.subr.mxu0 0.0
        %1254 = vmatpush1.msra.mxu0 %v1206
        %1255 = vmatprep.subr.mxu0 0.0
        %1256 = vmatpush1.msra.mxu0 %v1207
        %1257 = vmatprep.subr.mxu0 0.0
        %1258 = vmatpush1.msra.mxu0 %v1208
        %1259 = vmatprep.subr.mxu0 0.0
        %1260 = vmatpush1.msra.mxu0 %v1209
        %1261 = vmatprep.subr.mxu0 0.0
        %1262 = vmatpush1.msra.mxu0 %v1210
        %1263 = vmatprep.subr.mxu0 0.0
        %1264 = vmatpush1.msra.mxu0 %v1211
        %1265 = vmatprep.subr.mxu0 0.0
        %1266 = vmatpush1.msra.mxu0 %v1212
        %1267 = vmatprep.subr.mxu0 0.0
        %1268 = vmatpush1.msra.mxu0 %v1213
        %1269 = vmatprep.subr.mxu0 0.0
        %1270 = vmatpush1.msra.mxu0 %v1214
        %1271 = vmatprep.subr.mxu0 0.0
        %1272 = vmatpush1.msra.mxu0 %v1215
        %1273 = vmatprep.subr.mxu0 0.0
        %1274 = vmatpush1.msra.mxu0 %v1216
        %1275 = vmatprep.subr.mxu0 0.0
        %1276 = vmatpush1.msra.mxu0 %v1217
        %1277 = vmatprep.subr.mxu0 0.0
        %1278 = vmatpush1.msra.mxu0 %v1218
        %1279 = vmatprep.subr.mxu0 0.0
        %1280 = vmatpush1.msra.mxu0 %v1219
        %1281 = vmatprep.subr.mxu0 0.0
        %1282 = vmatpush1.msra.mxu0 %v1220
        %1283 = vmatprep.subr.mxu0 0.0
        %1284 = vmatpush1.msra.mxu0 %v1221
        %1285 = vmatprep.subr.mxu0 0.0
        %1286 = vmatpush1.msra.mxu0 %v1222
        %1287 = vmatprep.mubr.f32.mxu0 %v370
        %1288 = vmatmul.mubr.f32.gmra.mrb[0].mxu0 %v369
        %v1289 = vpop.f32.mrb[0].mxu0
        %v1290 = vadd.f32 0.0, %v1289
        %v1291 = vpop.f32.mrb[0].mxu0
        %1292 = vmatprep.mubr.f32.mxu0 %v372
        %1293 = vmatmul.mubr.f32.gmra.mrb[0].mxu0 %v371
        %v1294 = vpop.f32.mrb[0].mxu0
        %v1295 = vadd.f32 0.0, %v1294
        %v1296 = vpop.f32.mrb[0].mxu0
        %1297 = vmatprep.mubr.f32.mxu0 %v374
        %1298 = vmatmul.mubr.f32.gmra.mrb[0].mxu0 %v373
        %v1299 = vpop.f32.mrb[0].mxu0
        %v1300 = vadd.f32 0.0, %v1299
        %v1301 = vpop.f32.mrb[0].mxu0
        %1302 = vmatprep.mubr.f32.mxu0 %v376
        %1303 = vmatmul.mubr.f32.gmra.mrb[0].mxu0 %v375
        %v1304 = vpop.f32.mrb[0].mxu0
        %v1305 = vadd.f32 0.0, %v1304
        %v1306 = vpop.f32.mrb[0].mxu0
        %1307 = vdwg.mxu0
        %v1308 = vsub.f32 %v300, %v1290
        %v1309 = vsub.f32 %v301, %v1295
        %v1310 = vsub.f32 %v302, %v1300
        %v1311 = vsub.f32 %v303, %v1305
        %v1312 = vadd.f32 %v1290, 0.0
        %v1313 = vadd.f32 %v1295, 0.0
        %v1314 = vadd.f32 %v1300, 0.0
        %v1315 = vadd.f32 %v1305, 0.0
        %s1316 = scalar_lea.vmem %s1, 256
        %v1317 = vld [vmem:[%s1316] sm:$0xff]
        %v1318 = vld [vmem:[%s1316 + $0x8] sm:$0xff]
        %v1319 = vld [vmem:[%s1316 + $0x10] sm:$0xff]
        %v1320 = vld [vmem:[%s1316 + $0x18] sm:$0xff]
        %v1321 = vld [vmem:[%s1316 + $0x20] sm:$0xff]
        %v1322 = vld [vmem:[%s1316 + $0x28] sm:$0xff]
        %v1323 = vld [vmem:[%s1316 + $0x30] sm:$0xff]
        %v1324 = vld [vmem:[%s1316 + $0x38] sm:$0xff]
        %v1325 = vld [vmem:[%s1316 + $0x40] sm:$0xff]
        %v1326 = vld [vmem:[%s1316 + $0x48] sm:$0xff]
        %v1327 = vld [vmem:[%s1316 + $0x50] sm:$0xff]
        %v1328 = vld [vmem:[%s1316 + $0x58] sm:$0xff]
        %v1329 = vld [vmem:[%s1316 + $0x60] sm:$0xff]
        %v1330 = vld [vmem:[%s1316 + $0x68] sm:$0xff]
        %v1331 = vld [vmem:[%s1316 + $0x70] sm:$0xff]
        %v1332 = vld [vmem:[%s1316 + $0x78] sm:$0xff]
        %v1333 = vld [vmem:[%s1316 + $0x80] sm:$0xff]
        %v1334 = vld [vmem:[%s1316 + $0x88] sm:$0xff]
        %v1335 = vld [vmem:[%s1316 + $0x90] sm:$0xff]
        %v1336 = vld [vmem:[%s1316 + $0x98] sm:$0xff]
        %v1337 = vld [vmem:[%s1316 + $0xa0] sm:$0xff]
        %v1338 = vld [vmem:[%s1316 + $0xa8] sm:$0xff]
        %v1339 = vld [vmem:[%s1316 + $0xb0] sm:$0xff]
        %v1340 = vld [vmem:[%s1316 + $0xb8] sm:$0xff]
        %v1341 = vld [vmem:[%s1316 + $0xc0] sm:$0xff]
        %v1342 = vld [vmem:[%s1316 + $0xc8] sm:$0xff]
        %v1343 = vld [vmem:[%s1316 + $0xd0] sm:$0xff]
        %v1344 = vld [vmem:[%s1316 + $0xd8] sm:$0xff]
        %v1345 = vld [vmem:[%s1316 + $0xe0] sm:$0xff]
        %v1346 = vld [vmem:[%s1316 + $0xe8] sm:$0xff]
        %v1347 = vld [vmem:[%s1316 + $0xf0] sm:$0xff]
        %v1348 = vld [vmem:[%s1316 + $0xf8] sm:$0xff]
        %s1349 = scalar_lea.vmem %s2, 64
        %v1350 = vld [vmem:[%s1349] sm:$0xff]
        %v1351 = vld [vmem:[%s1349 + $0x8] sm:$0xff]
        %v1352 = vld [vmem:[%s1349 + $0x10] sm:$0xff]
        %v1353 = vld [vmem:[%s1349 + $0x18] sm:$0xff]
        %v1354 = vld [vmem:[%s1349 + $0x20] sm:$0xff]
        %v1355 = vld [vmem:[%s1349 + $0x28] sm:$0xff]
        %v1356 = vld [vmem:[%s1349 + $0x30] sm:$0xff]
        %v1357 = vld [vmem:[%s1349 + $0x38] sm:$0xff]
        %s1358 = scalar_lea.vmem %s3, 256
        %v1359 = vld [vmem:[%s1358] sm:$0xff]
        %v1360 = vld [vmem:[%s1358 + $0x8] sm:$0xff]
        %v1361 = vld [vmem:[%s1358 + $0x10] sm:$0xff]
        %v1362 = vld [vmem:[%s1358 + $0x18] sm:$0xff]
        %v1363 = vld [vmem:[%s1358 + $0x20] sm:$0xff]
        %v1364 = vld [vmem:[%s1358 + $0x28] sm:$0xff]
        %v1365 = vld [vmem:[%s1358 + $0x30] sm:$0xff]
        %v1366 = vld [vmem:[%s1358 + $0x38] sm:$0xff]
        %v1367 = vld [vmem:[%s1358 + $0x40] sm:$0xff]
        %v1368 = vld [vmem:[%s1358 + $0x48] sm:$0xff]
        %v1369 = vld [vmem:[%s1358 + $0x50] sm:$0xff]
        %v1370 = vld [vmem:[%s1358 + $0x58] sm:$0xff]
        %v1371 = vld [vmem:[%s1358 + $0x60] sm:$0xff]
        %v1372 = vld [vmem:[%s1358 + $0x68] sm:$0xff]
        %v1373 = vld [vmem:[%s1358 + $0x70] sm:$0xff]
        %v1374 = vld [vmem:[%s1358 + $0x78] sm:$0xff]
        %v1375 = vld [vmem:[%s1358 + $0x80] sm:$0xff]
        %v1376 = vld [vmem:[%s1358 + $0x88] sm:$0xff]
        %v1377 = vld [vmem:[%s1358 + $0x90] sm:$0xff]
        %v1378 = vld [vmem:[%s1358 + $0x98] sm:$0xff]
        %v1379 = vld [vmem:[%s1358 + $0xa0] sm:$0xff]
        %v1380 = vld [vmem:[%s1358 + $0xa8] sm:$0xff]
        %v1381 = vld [vmem:[%s1358 + $0xb0] sm:$0xff]
        %v1382 = vld [vmem:[%s1358 + $0xb8] sm:$0xff]
        %v1383 = vld [vmem:[%s1358 + $0xc0] sm:$0xff]
        %v1384 = vld [vmem:[%s1358 + $0xc8] sm:$0xff]
        %v1385 = vld [vmem:[%s1358 + $0xd0] sm:$0xff]
        %v1386 = vld [vmem:[%s1358 + $0xd8] sm:$0xff]
        %v1387 = vld [vmem:[%s1358 + $0xe0] sm:$0xff]
        %v1388 = vld [vmem:[%s1358 + $0xe8] sm:$0xff]
        %v1389 = vld [vmem:[%s1358 + $0xf0] sm:$0xff]
        %v1390 = vld [vmem:[%s1358 + $0xf8] sm:$0xff]
        %v1392 = vsel %vm409, %v1317, 0
        %v1395 = vsel %vm409, %v1318, 0
        %v1398 = vsel %vm409, %v1319, 0
        %v1401 = vsel %vm409, %v1320, 0
        %v1404 = vsel %vm409, %v1321, 0
        %v1407 = vsel %vm409, %v1322, 0
        %v1410 = vsel %vm409, %v1323, 0
        %v1413 = vsel %vm409, %v1324, 0
        %v1416 = vsel %vm409, %v1325, 0
        %v1419 = vsel %vm409, %v1326, 0
        %v1422 = vsel %vm409, %v1327, 0
        %v1425 = vsel %vm409, %v1328, 0
        %v1428 = vsel %vm409, %v1329, 0
        %v1431 = vsel %vm409, %v1330, 0
        %v1434 = vsel %vm409, %v1331, 0
        %v1437 = vsel %vm409, %v1332, 0
        %v1440 = vsel %vm409, %v1333, 0
        %v1443 = vsel %vm409, %v1334, 0
        %v1446 = vsel %vm409, %v1335, 0
        %v1449 = vsel %vm409, %v1336, 0
        %v1452 = vsel %vm409, %v1337, 0
        %v1455 = vsel %vm409, %v1338, 0
        %v1458 = vsel %vm409, %v1339, 0
        %v1461 = vsel %vm409, %v1340, 0
        %v1464 = vsel %vm409, %v1341, 0
        %v1467 = vsel %vm409, %v1342, 0
        %v1470 = vsel %vm409, %v1343, 0
        %v1473 = vsel %vm409, %v1344, 0
        %v1476 = vsel %vm409, %v1345, 0
        %v1479 = vsel %vm409, %v1346, 0
        %v1482 = vsel %vm409, %v1347, 0
        %v1485 = vsel %vm409, %v1348, 0
        %1487 = vmatprep.subr.mxu0 0.0
        %1488 = vmatpush1.msra.mxu0 %v1308
        %1489 = vmatprep.subr.mxu0 0.0
        %1490 = vmatpush1.msra.mxu0 %v1309
        %1491 = vmatprep.subr.mxu0 0.0
        %1492 = vmatpush1.msra.mxu0 %v1310
        %1493 = vmatprep.subr.mxu0 0.0
        %1494 = vmatpush1.msra.mxu0 %v1311
        %1495 = vmatprep.subr.mxu0 0.0
        %1496 = vmatpush1.msra.mxu0 0.0
        %1497 = vmatprep.subr.mxu0 0.0
        %1498 = vmatpush1.msra.mxu0 0.0
        %1499 = vmatprep.subr.mxu0 0.0
        %1500 = vmatpush1.msra.mxu0 0.0
        %1501 = vmatprep.subr.mxu0 0.0
        %1502 = vmatpush1.msra.mxu0 0.0
        %1503 = vmatprep.subr.mxu0 0.0
        %1504 = vmatpush1.msra.mxu0 0.0
        %1505 = vmatprep.subr.mxu0 0.0
        %1506 = vmatpush1.msra.mxu0 0.0
        %1507 = vmatprep.subr.mxu0 0.0
        %1508 = vmatpush1.msra.mxu0 0.0
        %1509 = vmatprep.subr.mxu0 0.0
        %1510 = vmatpush1.msra.mxu0 0.0
        %1511 = vmatprep.subr.mxu0 0.0
        %1512 = vmatpush1.msra.mxu0 0.0
        %1513 = vmatprep.subr.mxu0 0.0
        %1514 = vmatpush1.msra.mxu0 0.0
        %1515 = vmatprep.subr.mxu0 0.0
        %1516 = vmatpush1.msra.mxu0 0.0
        %1517 = vmatprep.subr.mxu0 0.0
        %1518 = vmatpush1.msra.mxu0 0.0
        %1519 = vmatprep.subr.mxu0 0.0
        %1520 = vmatpush1.msra.mxu0 0.0
        %1521 = vmatprep.subr.mxu0 0.0
        %1522 = vmatpush1.msra.mxu0 0.0
        %1523 = vmatprep.subr.mxu0 0.0
        %1524 = vmatpush1.msra.mxu0 0.0
        %1525 = vmatprep.subr.mxu0 0.0
        %1526 = vmatpush1.msra.mxu0 0.0
        %1527 = vmatprep.subr.mxu0 0.0
        %1528 = vmatpush1.msra.mxu0 0.0
        %1529 = vmatprep.subr.mxu0 0.0
        %1530 = vmatpush1.msra.mxu0 0.0
        %1531 = vmatprep.subr.mxu0 0.0
        %1532 = vmatpush1.msra.mxu0 0.0
        %1533 = vmatprep.subr.mxu0 0.0
        %1534 = vmatpush1.msra.mxu0 0.0
        %1535 = vmatprep.subr.mxu0 0.0
        %1536 = vmatpush1.msra.mxu0 0.0
        %1537 = vmatprep.subr.mxu0 0.0
        %1538 = vmatpush1.msra.mxu0 0.0
        %1539 = vmatprep.subr.mxu0 0.0
        %1540 = vmatpush1.msra.mxu0 0.0
        %1541 = vmatprep.subr.mxu0 0.0
        %1542 = vmatpush1.msra.mxu0 0.0
        %1543 = vmatprep.subr.mxu0 0.0
        %1544 = vmatpush1.msra.mxu0 0.0
        %1545 = vmatprep.subr.mxu0 0.0
        %1546 = vmatpush1.msra.mxu0 0.0
        %1547 = vmatprep.subr.mxu0 0.0
        %1548 = vmatpush1.msra.mxu0 0.0
        %1549 = vmatprep.subr.mxu0 0.0
        %1550 = vmatpush1.msra.mxu0 0.0
        %1551 = vmatprep.mubr.f32.mxu0 0.0
        %1552 = vmatmul.mubr.f32.gmra.mrb[0].mxu0 %v1392
        %v1553 = vpop.f32.mrb[0].mxu0
        %v1554 = vadd.f32 0.0, %v1553
        %v1555 = vpop.f32.mrb[0].mxu0
        %1556 = vmatprep.mubr.f32.mxu0 0.0
        %1557 = vmatmul.mubr.f32.gmra.mrb[0].mxu0 %v1395
        %v1558 = vpop.f32.mrb[0].mxu0
        %v1559 = vadd.f32 0.0, %v1558
        %v1560 = vpop.f32.mrb[0].mxu0
        %1561 = vmatprep.mubr.f32.mxu0 0.0
        %1562 = vmatmul.mubr.f32.gmra.mrb[0].mxu0 %v1398
        %v1563 = vpop.f32.mrb[0].mxu0
        %v1564 = vadd.f32 0.0, %v1563
        %v1565 = vpop.f32.mrb[0].mxu0
        %1566 = vmatprep.mubr.f32.mxu0 0.0
        %1567 = vmatmul.mubr.f32.gmra.mrb[0].mxu0 %v1401
        %v1568 = vpop.f32.mrb[0].mxu0
        %v1569 = vadd.f32 0.0, %v1568
        %v1570 = vpop.f32.mrb[0].mxu0
        %1571 = vmatprep.mubr.f32.mxu0 0.0
        %1572 = vmatmul.mubr.f32.gmra.mrb[0].mxu0 %v1404
        %v1573 = vpop.f32.mrb[0].mxu0
        %v1574 = vadd.f32 0.0, %v1573
        %v1575 = vpop.f32.mrb[0].mxu0
        %1576 = vmatprep.mubr.f32.mxu0 0.0
        %1577 = vmatmul.mubr.f32.gmra.mrb[0].mxu0 %v1407
        %v1578 = vpop.f32.mrb[0].mxu0
        %v1579 = vadd.f32 0.0, %v1578
        %v1580 = vpop.f32.mrb[0].mxu0
        %1581 = vmatprep.mubr.f32.mxu0 0.0
        %1582 = vmatmul.mubr.f32.gmra.mrb[0].mxu0 %v1410
        %v1583 = vpop.f32.mrb[0].mxu0
        %v1584 = vadd.f32 0.0, %v1583
        %v1585 = vpop.f32.mrb[0].mxu0
        %1586 = vmatprep.mubr.f32.mxu0 0.0
        %1587 = vmatmul.mubr.f32.gmra.mrb[0].mxu0 %v1413
        %v1588 = vpop.f32.mrb[0].mxu0
        %v1589 = vadd.f32 0.0, %v1588
        %v1590 = vpop.f32.mrb[0].mxu0
        %1591 = vmatprep.mubr.f32.mxu0 0.0
        %1592 = vmatmul.mubr.f32.gmra.mrb[0].mxu0 %v1416
        %v1593 = vpop.f32.mrb[0].mxu0
        %v1594 = vadd.f32 0.0, %v1593
        %v1595 = vpop.f32.mrb[0].mxu0
        %1596 = vmatprep.mubr.f32.mxu0 0.0
        %1597 = vmatmul.mubr.f32.gmra.mrb[0].mxu0 %v1419
        %v1598 = vpop.f32.mrb[0].mxu0
        %v1599 = vadd.f32 0.0, %v1598
        %v1600 = vpop.f32.mrb[0].mxu0
        %1601 = vmatprep.mubr.f32.mxu0 0.0
        %1602 = vmatmul.mubr.f32.gmra.mrb[0].mxu0 %v1422
        %v1603 = vpop.f32.mrb[0].mxu0
        %v1604 = vadd.f32 0.0, %v1603
        %v1605 = vpop.f32.mrb[0].mxu0
        %1606 = vmatprep.mubr.f32.mxu0 0.0
        %1607 = vmatmul.mubr.f32.gmra.mrb[0].mxu0 %v1425
        %v1608 = vpop.f32.mrb[0].mxu0
        %v1609 = vadd.f32 0.0, %v1608
        %v1610 = vpop.f32.mrb[0].mxu0
        %1611 = vmatprep.mubr.f32.mxu0 0.0
        %1612 = vmatmul.mubr.f32.gmra.mrb[0].mxu0 %v1428
        %v1613 = vpop.f32.mrb[0].mxu0
        %v1614 = vadd.f32 0.0, %v1613
        %v1615 = vpop.f32.mrb[0].mxu0
        %1616 = vmatprep.mubr.f32.mxu0 0.0
        %1617 = vmatmul.mubr.f32.gmra.mrb[0].mxu0 %v1431
        %v1618 = vpop.f32.mrb[0].mxu0
        %v1619 = vadd.f32 0.0, %v1618
        %v1620 = vpop.f32.mrb[0].mxu0
        %1621 = vmatprep.mubr.f32.mxu0 0.0
        %1622 = vmatmul.mubr.f32.gmra.mrb[0].mxu0 %v1434
        %v1623 = vpop.f32.mrb[0].mxu0
        %v1624 = vadd.f32 0.0, %v1623
        %v1625 = vpop.f32.mrb[0].mxu0
        %1626 = vmatprep.mubr.f32.mxu0 0.0
        %1627 = vmatmul.mubr.f32.gmra.mrb[0].mxu0 %v1437
        %v1628 = vpop.f32.mrb[0].mxu0
        %v1629 = vadd.f32 0.0, %v1628
        %v1630 = vpop.f32.mrb[0].mxu0
        %1631 = vmatprep.mubr.f32.mxu0 0.0
        %1632 = vmatmul.mubr.f32.gmra.mrb[0].mxu0 %v1440
        %v1633 = vpop.f32.mrb[0].mxu0
        %v1634 = vadd.f32 0.0, %v1633
        %v1635 = vpop.f32.mrb[0].mxu0
        %1636 = vmatprep.mubr.f32.mxu0 0.0
        %1637 = vmatmul.mubr.f32.gmra.mrb[0].mxu0 %v1443
        %v1638 = vpop.f32.mrb[0].mxu0
        %v1639 = vadd.f32 0.0, %v1638
        %v1640 = vpop.f32.mrb[0].mxu0
        %1641 = vmatprep.mubr.f32.mxu0 0.0
        %1642 = vmatmul.mubr.f32.gmra.mrb[0].mxu0 %v1446
        %v1643 = vpop.f32.mrb[0].mxu0
        %v1644 = vadd.f32 0.0, %v1643
        %v1645 = vpop.f32.mrb[0].mxu0
        %1646 = vmatprep.mubr.f32.mxu0 0.0
        %1647 = vmatmul.mubr.f32.gmra.mrb[0].mxu0 %v1449
        %v1648 = vpop.f32.mrb[0].mxu0
        %v1649 = vadd.f32 0.0, %v1648
        %v1650 = vpop.f32.mrb[0].mxu0
        %1651 = vmatprep.mubr.f32.mxu0 0.0
        %1652 = vmatmul.mubr.f32.gmra.mrb[0].mxu0 %v1452
        %v1653 = vpop.f32.mrb[0].mxu0
        %v1654 = vadd.f32 0.0, %v1653
        %v1655 = vpop.f32.mrb[0].mxu0
        %1656 = vmatprep.mubr.f32.mxu0 0.0
        %1657 = vmatmul.mubr.f32.gmra.mrb[0].mxu0 %v1455
        %v1658 = vpop.f32.mrb[0].mxu0
        %v1659 = vadd.f32 0.0, %v1658
        %v1660 = vpop.f32.mrb[0].mxu0
        %1661 = vmatprep.mubr.f32.mxu0 0.0
        %1662 = vmatmul.mubr.f32.gmra.mrb[0].mxu0 %v1458
        %v1663 = vpop.f32.mrb[0].mxu0
        %v1664 = vadd.f32 0.0, %v1663
        %v1665 = vpop.f32.mrb[0].mxu0
        %1666 = vmatprep.mubr.f32.mxu0 0.0
        %1667 = vmatmul.mubr.f32.gmra.mrb[0].mxu0 %v1461
        %v1668 = vpop.f32.mrb[0].mxu0
        %v1669 = vadd.f32 0.0, %v1668
        %v1670 = vpop.f32.mrb[0].mxu0
        %1671 = vmatprep.mubr.f32.mxu0 0.0
        %1672 = vmatmul.mubr.f32.gmra.mrb[0].mxu0 %v1464
        %v1673 = vpop.f32.mrb[0].mxu0
        %v1674 = vadd.f32 0.0, %v1673
        %v1675 = vpop.f32.mrb[0].mxu0
        %1676 = vmatprep.mubr.f32.mxu0 0.0
        %1677 = vmatmul.mubr.f32.gmra.mrb[0].mxu0 %v1467
        %v1678 = vpop.f32.mrb[0].mxu0
        %v1679 = vadd.f32 0.0, %v1678
        %v1680 = vpop.f32.mrb[0].mxu0
        %1681 = vmatprep.mubr.f32.mxu0 0.0
        %1682 = vmatmul.mubr.f32.gmra.mrb[0].mxu0 %v1470
        %v1683 = vpop.f32.mrb[0].mxu0
        %v1684 = vadd.f32 0.0, %v1683
        %v1685 = vpop.f32.mrb[0].mxu0
        %1686 = vmatprep.mubr.f32.mxu0 0.0
        %1687 = vmatmul.mubr.f32.gmra.mrb[0].mxu0 %v1473
        %v1688 = vpop.f32.mrb[0].mxu0
        %v1689 = vadd.f32 0.0, %v1688
        %v1690 = vpop.f32.mrb[0].mxu0
        %1691 = vmatprep.mubr.f32.mxu0 0.0
        %1692 = vmatmul.mubr.f32.gmra.mrb[0].mxu0 %v1476
        %v1693 = vpop.f32.mrb[0].mxu0
        %v1694 = vadd.f32 0.0, %v1693
        %v1695 = vpop.f32.mrb[0].mxu0
        %1696 = vmatprep.mubr.f32.mxu0 0.0
        %1697 = vmatmul.mubr.f32.gmra.mrb[0].mxu0 %v1479
        %v1698 = vpop.f32.mrb[0].mxu0
        %v1699 = vadd.f32 0.0, %v1698
        %v1700 = vpop.f32.mrb[0].mxu0
        %1701 = vmatprep.mubr.f32.mxu0 0.0
        %1702 = vmatmul.mubr.f32.gmra.mrb[0].mxu0 %v1482
        %v1703 = vpop.f32.mrb[0].mxu0
        %v1704 = vadd.f32 0.0, %v1703
        %v1705 = vpop.f32.mrb[0].mxu0
        %1706 = vmatprep.mubr.f32.mxu0 0.0
        %1707 = vmatmul.mubr.f32.gmra.mrb[0].mxu0 %v1485
        %v1708 = vpop.f32.mrb[0].mxu0
        %v1709 = vadd.f32 0.0, %v1708
        %v1710 = vpop.f32.mrb[0].mxu0
        %1711 = vdwg.mxu0
        %v1712 = vmul.f32 %v1554, 2.0
        %v1713 = vmul.f32 %v1559, 2.0
        %v1714 = vmul.f32 %v1564, 2.0
        %v1715 = vmul.f32 %v1569, 2.0
        %v1716 = vmul.f32 %v1574, 2.0
        %v1717 = vmul.f32 %v1579, 2.0
        %v1718 = vmul.f32 %v1584, 2.0
        %v1719 = vmul.f32 %v1589, 2.0
        %v1720 = vmul.f32 %v1594, 2.0
        %v1721 = vmul.f32 %v1599, 2.0
        %v1722 = vmul.f32 %v1604, 2.0
        %v1723 = vmul.f32 %v1609, 2.0
        %v1724 = vmul.f32 %v1614, 2.0
        %v1725 = vmul.f32 %v1619, 2.0
        %v1726 = vmul.f32 %v1624, 2.0
        %v1727 = vmul.f32 %v1629, 2.0
        %v1728 = vmul.f32 %v1634, 2.0
        %v1729 = vmul.f32 %v1639, 2.0
        %v1730 = vmul.f32 %v1644, 2.0
        %v1731 = vmul.f32 %v1649, 2.0
        %v1732 = vmul.f32 %v1654, 2.0
        %v1733 = vmul.f32 %v1659, 2.0
        %v1734 = vmul.f32 %v1664, 2.0
        %v1735 = vmul.f32 %v1669, 2.0
        %v1736 = vmul.f32 %v1674, 2.0
        %v1737 = vmul.f32 %v1679, 2.0
        %v1738 = vmul.f32 %v1684, 2.0
        %v1739 = vmul.f32 %v1689, 2.0
        %v1740 = vmul.f32 %v1694, 2.0
        %v1741 = vmul.f32 %v1699, 2.0
        %v1742 = vmul.f32 %v1704, 2.0
        %v1743 = vmul.f32 %v1709, 2.0
        %1745 = vset.pattern.permute.xlu0 0
        %1746 = vperm.xlu0 %1745, %v1359
        %v1747 = vpop.permute.xlu0 %1746
        %1750 = vset.pattern.permute.xlu0 0
        %1751 = vperm.xlu0 %1750, %v1360
        %v1752 = vpop.permute.xlu0 %1751
        %1755 = vset.pattern.permute.xlu0 0
        %1756 = vperm.xlu0 %1755, %v1361
        %v1757 = vpop.permute.xlu0 %1756
        %1760 = vset.pattern.permute.xlu0 0
        %1761 = vperm.xlu0 %1760, %v1362
        %v1762 = vpop.permute.xlu0 %1761
        %1765 = vset.pattern.permute.xlu0 0
        %1766 = vperm.xlu0 %1765, %v1363
        %v1767 = vpop.permute.xlu0 %1766
        %1770 = vset.pattern.permute.xlu0 0
        %1771 = vperm.xlu0 %1770, %v1364
        %v1772 = vpop.permute.xlu0 %1771
        %1775 = vset.pattern.permute.xlu0 0
        %1776 = vperm.xlu0 %1775, %v1365
        %v1777 = vpop.permute.xlu0 %1776
        %1780 = vset.pattern.permute.xlu0 0
        %1781 = vperm.xlu0 %1780, %v1366
        %v1782 = vpop.permute.xlu0 %1781
        %1785 = vset.pattern.permute.xlu0 0
        %1786 = vperm.xlu0 %1785, %v1367
        %v1787 = vpop.permute.xlu0 %1786
        %1790 = vset.pattern.permute.xlu0 0
        %1791 = vperm.xlu0 %1790, %v1368
        %v1792 = vpop.permute.xlu0 %1791
        %1795 = vset.pattern.permute.xlu0 0
        %1796 = vperm.xlu0 %1795, %v1369
        %v1797 = vpop.permute.xlu0 %1796
        %1800 = vset.pattern.permute.xlu0 0
        %1801 = vperm.xlu0 %1800, %v1370
        %v1802 = vpop.permute.xlu0 %1801
        %1805 = vset.pattern.permute.xlu0 0
        %1806 = vperm.xlu0 %1805, %v1371
        %v1807 = vpop.permute.xlu0 %1806
        %1810 = vset.pattern.permute.xlu0 0
        %1811 = vperm.xlu0 %1810, %v1372
        %v1812 = vpop.permute.xlu0 %1811
        %1815 = vset.pattern.permute.xlu0 0
        %1816 = vperm.xlu0 %1815, %v1373
        %v1817 = vpop.permute.xlu0 %1816
        %1820 = vset.pattern.permute.xlu0 0
        %1821 = vperm.xlu0 %1820, %v1374
        %v1822 = vpop.permute.xlu0 %1821
        %1825 = vset.pattern.permute.xlu0 0
        %1826 = vperm.xlu0 %1825, %v1375
        %v1827 = vpop.permute.xlu0 %1826
        %1830 = vset.pattern.permute.xlu0 0
        %1831 = vperm.xlu0 %1830, %v1376
        %v1832 = vpop.permute.xlu0 %1831
        %1835 = vset.pattern.permute.xlu0 0
        %1836 = vperm.xlu0 %1835, %v1377
        %v1837 = vpop.permute.xlu0 %1836
        %1840 = vset.pattern.permute.xlu0 0
        %1841 = vperm.xlu0 %1840, %v1378
        %v1842 = vpop.permute.xlu0 %1841
        %1845 = vset.pattern.permute.xlu0 0
        %1846 = vperm.xlu0 %1845, %v1379
        %v1847 = vpop.permute.xlu0 %1846
        %1850 = vset.pattern.permute.xlu0 0
        %1851 = vperm.xlu0 %1850, %v1380
        %v1852 = vpop.permute.xlu0 %1851
        %1855 = vset.pattern.permute.xlu0 0
        %1856 = vperm.xlu0 %1855, %v1381
        %v1857 = vpop.permute.xlu0 %1856
        %1860 = vset.pattern.permute.xlu0 0
        %1861 = vperm.xlu0 %1860, %v1382
        %v1862 = vpop.permute.xlu0 %1861
        %1865 = vset.pattern.permute.xlu0 0
        %1866 = vperm.xlu0 %1865, %v1383
        %v1867 = vpop.permute.xlu0 %1866
        %1870 = vset.pattern.permute.xlu0 0
        %1871 = vperm.xlu0 %1870, %v1384
        %v1872 = vpop.permute.xlu0 %1871
        %1875 = vset.pattern.permute.xlu0 0
        %1876 = vperm.xlu0 %1875, %v1385
        %v1877 = vpop.permute.xlu0 %1876
        %1880 = vset.pattern.permute.xlu0 0
        %1881 = vperm.xlu0 %1880, %v1386
        %v1882 = vpop.permute.xlu0 %1881
        %1885 = vset.pattern.permute.xlu0 0
        %1886 = vperm.xlu0 %1885, %v1387
        %v1887 = vpop.permute.xlu0 %1886
        %1890 = vset.pattern.permute.xlu0 0
        %1891 = vperm.xlu0 %1890, %v1388
        %v1892 = vpop.permute.xlu0 %1891
        %1895 = vset.pattern.permute.xlu0 0
        %1896 = vperm.xlu0 %1895, %v1389
        %v1897 = vpop.permute.xlu0 %1896
        %1900 = vset.pattern.permute.xlu0 0
        %1901 = vperm.xlu0 %1900, %v1390
        %v1902 = vpop.permute.xlu0 %1901
        %v1904 = vsub.f32 %v1712, %v1747
        %v1905 = vsub.f32 %v1713, %v1752
        %v1906 = vsub.f32 %v1714, %v1757
        %v1907 = vsub.f32 %v1715, %v1762
        %v1908 = vsub.f32 %v1716, %v1767
        %v1909 = vsub.f32 %v1717, %v1772
        %v1910 = vsub.f32 %v1718, %v1777
        %v1911 = vsub.f32 %v1719, %v1782
        %v1912 = vsub.f32 %v1720, %v1787
        %v1913 = vsub.f32 %v1721, %v1792
        %v1914 = vsub.f32 %v1722, %v1797
        %v1915 = vsub.f32 %v1723, %v1802
        %v1916 = vsub.f32 %v1724, %v1807
        %v1917 = vsub.f32 %v1725, %v1812
        %v1918 = vsub.f32 %v1726, %v1817
        %v1919 = vsub.f32 %v1727, %v1822
        %v1920 = vsub.f32 %v1728, %v1827
        %v1921 = vsub.f32 %v1729, %v1832
        %v1922 = vsub.f32 %v1730, %v1837
        %v1923 = vsub.f32 %v1731, %v1842
        %v1924 = vsub.f32 %v1732, %v1847
        %v1925 = vsub.f32 %v1733, %v1852
        %v1926 = vsub.f32 %v1734, %v1857
        %v1927 = vsub.f32 %v1735, %v1862
        %v1928 = vsub.f32 %v1736, %v1867
        %v1929 = vsub.f32 %v1737, %v1872
        %v1930 = vsub.f32 %v1738, %v1877
        %v1931 = vsub.f32 %v1739, %v1882
        %v1932 = vsub.f32 %v1740, %v1887
        %v1933 = vsub.f32 %v1741, %v1892
        %v1934 = vsub.f32 %v1742, %v1897
        %v1935 = vsub.f32 %v1743, %v1902
        %v1936 = vmax.f32 %v1904, %v1908
        %v1937 = vmax.f32 %v1905, %v1909
        %v1938 = vmax.f32 %v1906, %v1910
        %v1939 = vmax.f32 %v1907, %v1911
        %v1940 = vmax.f32 %v1936, %v1912
        %v1941 = vmax.f32 %v1937, %v1913
        %v1942 = vmax.f32 %v1938, %v1914
        %v1943 = vmax.f32 %v1939, %v1915
        %v1944 = vmax.f32 %v1940, %v1916
        %v1945 = vmax.f32 %v1941, %v1917
        %v1946 = vmax.f32 %v1942, %v1918
        %v1947 = vmax.f32 %v1943, %v1919
        %v1948 = vmax.f32 %v1944, %v1920
        %v1949 = vmax.f32 %v1945, %v1921
        %v1950 = vmax.f32 %v1946, %v1922
        %v1951 = vmax.f32 %v1947, %v1923
        %v1952 = vmax.f32 %v1948, %v1924
        %v1953 = vmax.f32 %v1949, %v1925
        %v1954 = vmax.f32 %v1950, %v1926
        %v1955 = vmax.f32 %v1951, %v1927
        %v1956 = vmax.f32 %v1952, %v1928
        %v1957 = vmax.f32 %v1953, %v1929
        %v1958 = vmax.f32 %v1954, %v1930
        %v1959 = vmax.f32 %v1955, %v1931
        %v1960 = vmax.f32 %v1956, %v1932
        %v1961 = vmax.f32 %v1957, %v1933
        %v1962 = vmax.f32 %v1958, %v1934
        %v1963 = vmax.f32 %v1959, %v1935
        %v1964 = vmax.f32 %v1960, %v1961
        %v1965 = vmax.f32 %v1962, %v1963
        %v1966 = vmax.f32 %v1964, %v1965
        %v1967 = vrot.slane %v1966, 4
        %v1968 = vmax.f32 %v1966, %v1967
        %v1969 = vrot.slane %v1968, 2
        %v1970 = vmax.f32 %v1968, %v1969
        %v1971 = vrot.slane %v1970, 1
        %v1972 = vmax.f32 %v1970, %v1971
        %vm1973 = vcmp.ge.f32.partialorder %v1904, %v1972
        %vm1974 = vcmp.ge.f32.partialorder %v1905, %v1972
        %vm1975 = vcmp.ge.f32.partialorder %v1906, %v1972
        %vm1976 = vcmp.ge.f32.partialorder %v1907, %v1972
        %vm1977 = vcmp.ge.f32.partialorder %v1908, %v1972
        %vm1978 = vcmp.ge.f32.partialorder %v1909, %v1972
        %vm1979 = vcmp.ge.f32.partialorder %v1910, %v1972
        %vm1980 = vcmp.ge.f32.partialorder %v1911, %v1972
        %vm1981 = vcmp.ge.f32.partialorder %v1912, %v1972
        %vm1982 = vcmp.ge.f32.partialorder %v1913, %v1972
        %vm1983 = vcmp.ge.f32.partialorder %v1914, %v1972
        %vm1984 = vcmp.ge.f32.partialorder %v1915, %v1972
        %vm1985 = vcmp.ge.f32.partialorder %v1916, %v1972
        %vm1986 = vcmp.ge.f32.partialorder %v1917, %v1972
        %vm1987 = vcmp.ge.f32.partialorder %v1918, %v1972
        %vm1988 = vcmp.ge.f32.partialorder %v1919, %v1972
        %vm1989 = vcmp.ge.f32.partialorder %v1920, %v1972
        %vm1990 = vcmp.ge.f32.partialorder %v1921, %v1972
        %vm1991 = vcmp.ge.f32.partialorder %v1922, %v1972
        %vm1992 = vcmp.ge.f32.partialorder %v1923, %v1972
        %vm1993 = vcmp.ge.f32.partialorder %v1924, %v1972
        %vm1994 = vcmp.ge.f32.partialorder %v1925, %v1972
        %vm1995 = vcmp.ge.f32.partialorder %v1926, %v1972
        %vm1996 = vcmp.ge.f32.partialorder %v1927, %v1972
        %vm1997 = vcmp.ge.f32.partialorder %v1928, %v1972
        %vm1998 = vcmp.ge.f32.partialorder %v1929, %v1972
        %vm1999 = vcmp.ge.f32.partialorder %v1930, %v1972
        %vm2000 = vcmp.ge.f32.partialorder %v1931, %v1972
        %vm2001 = vcmp.ge.f32.partialorder %v1932, %v1972
        %vm2002 = vcmp.ge.f32.partialorder %v1933, %v1972
        %vm2003 = vcmp.ge.f32.partialorder %v1934, %v1972
        %vm2004 = vcmp.ge.f32.partialorder %v1935, %v1972
        %v2005 = vsel %vm1973, %v305, 256
        %v2006 = vsel %vm1974, %v306, 256
        %v2007 = vsel %vm1975, %v307, 256
        %v2008 = vsel %vm1976, %v308, 256
        %v2009 = vsel %vm1977, %v309, 256
        %v2010 = vsel %vm1978, %v310, 256
        %v2011 = vsel %vm1979, %v311, 256
        %v2012 = vsel %vm1980, %v312, 256
        %v2013 = vsel %vm1981, %v313, 256
        %v2014 = vsel %vm1982, %v314, 256
        %v2015 = vsel %vm1983, %v315, 256
        %v2016 = vsel %vm1984, %v316, 256
        %v2017 = vsel %vm1985, %v317, 256
        %v2018 = vsel %vm1986, %v318, 256
        %v2019 = vsel %vm1987, %v319, 256
        %v2020 = vsel %vm1988, %v320, 256
        %v2021 = vsel %vm1989, %v321, 256
        %v2022 = vsel %vm1990, %v322, 256
        %v2023 = vsel %vm1991, %v323, 256
        %v2024 = vsel %vm1992, %v324, 256
        %v2025 = vsel %vm1993, %v325, 256
        %v2026 = vsel %vm1994, %v326, 256
        %v2027 = vsel %vm1995, %v327, 256
        %v2028 = vsel %vm1996, %v328, 256
        %v2029 = vsel %vm1997, %v329, 256
        %v2030 = vsel %vm1998, %v330, 256
        %v2031 = vsel %vm1999, %v331, 256
        %v2032 = vsel %vm2000, %v332, 256
        %v2033 = vsel %vm2001, %v333, 256
        %v2034 = vsel %vm2002, %v334, 256
        %v2035 = vsel %vm2003, %v335, 256
        %v2036 = vsel %vm2004, %v336, 256
        %vm2037 = vcmp.lt.s32.totalorder %v2005, %v2009
        %v2038 = vsel %vm2037, %v2005, %v2009
        %vm2039 = vcmp.lt.s32.totalorder %v2006, %v2010
        %v2040 = vsel %vm2039, %v2006, %v2010
        %vm2041 = vcmp.lt.s32.totalorder %v2007, %v2011
        %v2042 = vsel %vm2041, %v2007, %v2011
        %vm2043 = vcmp.lt.s32.totalorder %v2008, %v2012
        %v2044 = vsel %vm2043, %v2008, %v2012
        %vm2045 = vcmp.lt.s32.totalorder %v2038, %v2013
        %v2046 = vsel %vm2045, %v2038, %v2013
        %vm2047 = vcmp.lt.s32.totalorder %v2040, %v2014
        %v2048 = vsel %vm2047, %v2040, %v2014
        %vm2049 = vcmp.lt.s32.totalorder %v2042, %v2015
        %v2050 = vsel %vm2049, %v2042, %v2015
        %vm2051 = vcmp.lt.s32.totalorder %v2044, %v2016
        %v2052 = vsel %vm2051, %v2044, %v2016
        %vm2053 = vcmp.lt.s32.totalorder %v2046, %v2017
        %v2054 = vsel %vm2053, %v2046, %v2017
        %vm2055 = vcmp.lt.s32.totalorder %v2048, %v2018
        %v2056 = vsel %vm2055, %v2048, %v2018
        %vm2057 = vcmp.lt.s32.totalorder %v2050, %v2019
        %v2058 = vsel %vm2057, %v2050, %v2019
        %vm2059 = vcmp.lt.s32.totalorder %v2052, %v2020
        %v2060 = vsel %vm2059, %v2052, %v2020
        %vm2061 = vcmp.lt.s32.totalorder %v2054, %v2021
        %v2062 = vsel %vm2061, %v2054, %v2021
        %vm2063 = vcmp.lt.s32.totalorder %v2056, %v2022
        %v2064 = vsel %vm2063, %v2056, %v2022
        %vm2065 = vcmp.lt.s32.totalorder %v2058, %v2023
        %v2066 = vsel %vm2065, %v2058, %v2023
        %vm2067 = vcmp.lt.s32.totalorder %v2060, %v2024
        %v2068 = vsel %vm2067, %v2060, %v2024
        %vm2069 = vcmp.lt.s32.totalorder %v2062, %v2025
        %v2070 = vsel %vm2069, %v2062, %v2025
        %vm2071 = vcmp.lt.s32.totalorder %v2064, %v2026
        %v2072 = vsel %vm2071, %v2064, %v2026
        %vm2073 = vcmp.lt.s32.totalorder %v2066, %v2027
        %v2074 = vsel %vm2073, %v2066, %v2027
        %vm2075 = vcmp.lt.s32.totalorder %v2068, %v2028
        %v2076 = vsel %vm2075, %v2068, %v2028
        %vm2077 = vcmp.lt.s32.totalorder %v2070, %v2029
        %v2078 = vsel %vm2077, %v2070, %v2029
        %vm2079 = vcmp.lt.s32.totalorder %v2072, %v2030
        %v2080 = vsel %vm2079, %v2072, %v2030
        %vm2081 = vcmp.lt.s32.totalorder %v2074, %v2031
        %v2082 = vsel %vm2081, %v2074, %v2031
        %vm2083 = vcmp.lt.s32.totalorder %v2076, %v2032
        %v2084 = vsel %vm2083, %v2076, %v2032
        %vm2085 = vcmp.lt.s32.totalorder %v2078, %v2033
        %v2086 = vsel %vm2085, %v2078, %v2033
        %vm2087 = vcmp.lt.s32.totalorder %v2080, %v2034
        %v2088 = vsel %vm2087, %v2080, %v2034
        %vm2089 = vcmp.lt.s32.totalorder %v2082, %v2035
        %v2090 = vsel %vm2089, %v2082, %v2035
        %vm2091 = vcmp.lt.s32.totalorder %v2084, %v2036
        %v2092 = vsel %vm2091, %v2084, %v2036
        %vm2093 = vcmp.lt.s32.totalorder %v2086, %v2088
        %v2094 = vsel %vm2093, %v2086, %v2088
        %vm2095 = vcmp.lt.s32.totalorder %v2090, %v2092
        %v2096 = vsel %vm2095, %v2090, %v2092
        %vm2097 = vcmp.lt.s32.totalorder %v2094, %v2096
        %v2098 = vsel %vm2097, %v2094, %v2096
        %v2099 = vrot.slane %v2098, 4
        %vm2100 = vcmp.lt.s32.totalorder %v2098, %v2099
        %v2101 = vsel %vm2100, %v2098, %v2099
        %v2102 = vrot.slane %v2101, 2
        %vm2103 = vcmp.lt.s32.totalorder %v2101, %v2102
        %v2104 = vsel %vm2103, %v2101, %v2102
        %v2105 = vrot.slane %v2104, 1
        %vm2106 = vcmp.lt.s32.totalorder %v2104, %v2105
        %v2107 = vsel %vm2106, %v2104, %v2105
        %vm2108 = vcmp.eq.s32.totalorder %v305, %v2107
        %vm2109 = vcmp.eq.s32.totalorder %v306, %v2107
        %vm2110 = vcmp.eq.s32.totalorder %v307, %v2107
        %vm2111 = vcmp.eq.s32.totalorder %v308, %v2107
        %vm2112 = vcmp.eq.s32.totalorder %v309, %v2107
        %vm2113 = vcmp.eq.s32.totalorder %v310, %v2107
        %vm2114 = vcmp.eq.s32.totalorder %v311, %v2107
        %vm2115 = vcmp.eq.s32.totalorder %v312, %v2107
        %vm2116 = vcmp.eq.s32.totalorder %v313, %v2107
        %vm2117 = vcmp.eq.s32.totalorder %v314, %v2107
        %vm2118 = vcmp.eq.s32.totalorder %v315, %v2107
        %vm2119 = vcmp.eq.s32.totalorder %v316, %v2107
        %vm2120 = vcmp.eq.s32.totalorder %v317, %v2107
        %vm2121 = vcmp.eq.s32.totalorder %v318, %v2107
        %vm2122 = vcmp.eq.s32.totalorder %v319, %v2107
        %vm2123 = vcmp.eq.s32.totalorder %v320, %v2107
        %vm2124 = vcmp.eq.s32.totalorder %v321, %v2107
        %vm2125 = vcmp.eq.s32.totalorder %v322, %v2107
        %vm2126 = vcmp.eq.s32.totalorder %v323, %v2107
        %vm2127 = vcmp.eq.s32.totalorder %v324, %v2107
        %vm2128 = vcmp.eq.s32.totalorder %v325, %v2107
        %vm2129 = vcmp.eq.s32.totalorder %v326, %v2107
        %vm2130 = vcmp.eq.s32.totalorder %v327, %v2107
        %vm2131 = vcmp.eq.s32.totalorder %v328, %v2107
        %vm2132 = vcmp.eq.s32.totalorder %v329, %v2107
        %vm2133 = vcmp.eq.s32.totalorder %v330, %v2107
        %vm2134 = vcmp.eq.s32.totalorder %v331, %v2107
        %vm2135 = vcmp.eq.s32.totalorder %v332, %v2107
        %vm2136 = vcmp.eq.s32.totalorder %v333, %v2107
        %vm2137 = vcmp.eq.s32.totalorder %v334, %v2107
        %vm2138 = vcmp.eq.s32.totalorder %v335, %v2107
        %vm2139 = vcmp.eq.s32.totalorder %v336, %v2107
        %v2140 = vsel %vm2108, 1, 0
        %v2141 = vsel %vm2109, 1, 0
        %v2142 = vsel %vm2110, 1, 0
        %v2143 = vsel %vm2111, 1, 0
        %v2144 = vsel %vm2112, 1, 0
        %v2145 = vsel %vm2113, 1, 0
        %v2146 = vsel %vm2114, 1, 0
        %v2147 = vsel %vm2115, 1, 0
        %v2148 = vsel %vm2116, 1, 0
        %v2149 = vsel %vm2117, 1, 0
        %v2150 = vsel %vm2118, 1, 0
        %v2151 = vsel %vm2119, 1, 0
        %v2152 = vsel %vm2120, 1, 0
        %v2153 = vsel %vm2121, 1, 0
        %v2154 = vsel %vm2122, 1, 0
        %v2155 = vsel %vm2123, 1, 0
        %v2156 = vsel %vm2124, 1, 0
        %v2157 = vsel %vm2125, 1, 0
        %v2158 = vsel %vm2126, 1, 0
        %v2159 = vsel %vm2127, 1, 0
        %v2160 = vsel %vm2128, 1, 0
        %v2161 = vsel %vm2129, 1, 0
        %v2162 = vsel %vm2130, 1, 0
        %v2163 = vsel %vm2131, 1, 0
        %v2164 = vsel %vm2132, 1, 0
        %v2165 = vsel %vm2133, 1, 0
        %v2166 = vsel %vm2134, 1, 0
        %v2167 = vsel %vm2135, 1, 0
        %v2168 = vsel %vm2136, 1, 0
        %v2169 = vsel %vm2137, 1, 0
        %v2170 = vsel %vm2138, 1, 0
        %v2171 = vsel %vm2139, 1, 0
        %v2172 = vcvt.s32.f32 %v2140
        %v2173 = vcvt.s32.f32 %v2141
        %v2174 = vcvt.s32.f32 %v2142
        %v2175 = vcvt.s32.f32 %v2143
        %v2176 = vcvt.s32.f32 %v2144
        %v2177 = vcvt.s32.f32 %v2145
        %v2178 = vcvt.s32.f32 %v2146
        %v2179 = vcvt.s32.f32 %v2147
        %v2180 = vcvt.s32.f32 %v2148
        %v2181 = vcvt.s32.f32 %v2149
        %v2182 = vcvt.s32.f32 %v2150
        %v2183 = vcvt.s32.f32 %v2151
        %v2184 = vcvt.s32.f32 %v2152
        %v2185 = vcvt.s32.f32 %v2153
        %v2186 = vcvt.s32.f32 %v2154
        %v2187 = vcvt.s32.f32 %v2155
        %v2188 = vcvt.s32.f32 %v2156
        %v2189 = vcvt.s32.f32 %v2157
        %v2190 = vcvt.s32.f32 %v2158
        %v2191 = vcvt.s32.f32 %v2159
        %v2192 = vcvt.s32.f32 %v2160
        %v2193 = vcvt.s32.f32 %v2161
        %v2194 = vcvt.s32.f32 %v2162
        %v2195 = vcvt.s32.f32 %v2163
        %v2196 = vcvt.s32.f32 %v2164
        %v2197 = vcvt.s32.f32 %v2165
        %v2198 = vcvt.s32.f32 %v2166
        %v2199 = vcvt.s32.f32 %v2167
        %v2200 = vcvt.s32.f32 %v2168
        %v2201 = vcvt.s32.f32 %v2169
        %v2202 = vcvt.s32.f32 %v2170
        %v2203 = vcvt.s32.f32 %v2171
        %2204 = vmatprep.subr.mxu0 0.0
        %2205 = vmatpush1.msra.mxu0 %v2172
        %2206 = vmatprep.subr.mxu0 0.0
        %2207 = vmatpush1.msra.mxu0 %v2173
        %2208 = vmatprep.subr.mxu0 0.0
        %2209 = vmatpush1.msra.mxu0 %v2174
        %2210 = vmatprep.subr.mxu0 0.0
        %2211 = vmatpush1.msra.mxu0 %v2175
        %2212 = vmatprep.subr.mxu0 0.0
        %2213 = vmatpush1.msra.mxu0 %v2176
        %2214 = vmatprep.subr.mxu0 0.0
        %2215 = vmatpush1.msra.mxu0 %v2177
        %2216 = vmatprep.subr.mxu0 0.0
        %2217 = vmatpush1.msra.mxu0 %v2178
        %2218 = vmatprep.subr.mxu0 0.0
        %2219 = vmatpush1.msra.mxu0 %v2179
        %2220 = vmatprep.subr.mxu0 0.0
        %2221 = vmatpush1.msra.mxu0 %v2180
        %2222 = vmatprep.subr.mxu0 0.0
        %2223 = vmatpush1.msra.mxu0 %v2181
        %2224 = vmatprep.subr.mxu0 0.0
        %2225 = vmatpush1.msra.mxu0 %v2182
        %2226 = vmatprep.subr.mxu0 0.0
        %2227 = vmatpush1.msra.mxu0 %v2183
        %2228 = vmatprep.subr.mxu0 0.0
        %2229 = vmatpush1.msra.mxu0 %v2184
        %2230 = vmatprep.subr.mxu0 0.0
        %2231 = vmatpush1.msra.mxu0 %v2185
        %2232 = vmatprep.subr.mxu0 0.0
        %2233 = vmatpush1.msra.mxu0 %v2186
        %2234 = vmatprep.subr.mxu0 0.0
        %2235 = vmatpush1.msra.mxu0 %v2187
        %2236 = vmatprep.subr.mxu0 0.0
        %2237 = vmatpush1.msra.mxu0 %v2188
        %2238 = vmatprep.subr.mxu0 0.0
        %2239 = vmatpush1.msra.mxu0 %v2189
        %2240 = vmatprep.subr.mxu0 0.0
        %2241 = vmatpush1.msra.mxu0 %v2190
        %2242 = vmatprep.subr.mxu0 0.0
        %2243 = vmatpush1.msra.mxu0 %v2191
        %2244 = vmatprep.subr.mxu0 0.0
        %2245 = vmatpush1.msra.mxu0 %v2192
        %2246 = vmatprep.subr.mxu0 0.0
        %2247 = vmatpush1.msra.mxu0 %v2193
        %2248 = vmatprep.subr.mxu0 0.0
        %2249 = vmatpush1.msra.mxu0 %v2194
        %2250 = vmatprep.subr.mxu0 0.0
        %2251 = vmatpush1.msra.mxu0 %v2195
        %2252 = vmatprep.subr.mxu0 0.0
        %2253 = vmatpush1.msra.mxu0 %v2196
        %2254 = vmatprep.subr.mxu0 0.0
        %2255 = vmatpush1.msra.mxu0 %v2197
        %2256 = vmatprep.subr.mxu0 0.0
        %2257 = vmatpush1.msra.mxu0 %v2198
        %2258 = vmatprep.subr.mxu0 0.0
        %2259 = vmatpush1.msra.mxu0 %v2199
        %2260 = vmatprep.subr.mxu0 0.0
        %2261 = vmatpush1.msra.mxu0 %v2200
        %2262 = vmatprep.subr.mxu0 0.0
        %2263 = vmatpush1.msra.mxu0 %v2201
        %2264 = vmatprep.subr.mxu0 0.0
        %2265 = vmatpush1.msra.mxu0 %v2202
        %2266 = vmatprep.subr.mxu0 0.0
        %2267 = vmatpush1.msra.mxu0 %v2203
        %2268 = vmatprep.mubr.f32.mxu0 %v1351
        %2269 = vmatmul.mubr.f32.gmra.mrb[0].mxu0 %v1350
        %v2270 = vpop.f32.mrb[0].mxu0
        %v2271 = vadd.f32 0.0, %v2270
        %v2272 = vpop.f32.mrb[0].mxu0
        %2273 = vmatprep.mubr.f32.mxu0 %v1353
        %2274 = vmatmul.mubr.f32.gmra.mrb[0].mxu0 %v1352
        %v2275 = vpop.f32.mrb[0].mxu0
        %v2276 = vadd.f32 0.0, %v2275
        %v2277 = vpop.f32.mrb[0].mxu0
        %2278 = vmatprep.mubr.f32.mxu0 %v1355
        %2279 = vmatmul.mubr.f32.gmra.mrb[0].mxu0 %v1354
        %v2280 = vpop.f32.mrb[0].mxu0
        %v2281 = vadd.f32 0.0, %v2280
        %v2282 = vpop.f32.mrb[0].mxu0
        %2283 = vmatprep.mubr.f32.mxu0 %v1357
        %2284 = vmatmul.mubr.f32.gmra.mrb[0].mxu0 %v1356
        %v2285 = vpop.f32.mrb[0].mxu0
        %v2286 = vadd.f32 0.0, %v2285
        %v2287 = vpop.f32.mrb[0].mxu0
        %2288 = vdwg.mxu0
        %v2289 = vsub.f32 %v1308, %v2271
        %v2290 = vsub.f32 %v1309, %v2276
        %v2291 = vsub.f32 %v1310, %v2281
        %v2292 = vsub.f32 %v1311, %v2286
        %v2293 = vadd.f32 %v1312, %v2271
        %v2294 = vadd.f32 %v1313, %v2276
        %v2295 = vadd.f32 %v1314, %v2281
        %v2296 = vadd.f32 %v1315, %v2286
        %s2297 = scalar_lea.vmem %s1, 512
        %v2298 = vld [vmem:[%s2297] sm:$0xff]
        %v2299 = vld [vmem:[%s2297 + $0x8] sm:$0xff]
        %v2300 = vld [vmem:[%s2297 + $0x10] sm:$0xff]
        %v2301 = vld [vmem:[%s2297 + $0x18] sm:$0xff]
        %v2302 = vld [vmem:[%s2297 + $0x20] sm:$0xff]
        %v2303 = vld [vmem:[%s2297 + $0x28] sm:$0xff]
        %v2304 = vld [vmem:[%s2297 + $0x30] sm:$0xff]
        %v2305 = vld [vmem:[%s2297 + $0x38] sm:$0xff]
        %v2306 = vld [vmem:[%s2297 + $0x40] sm:$0xff]
        %v2307 = vld [vmem:[%s2297 + $0x48] sm:$0xff]
        %v2308 = vld [vmem:[%s2297 + $0x50] sm:$0xff]
        %v2309 = vld [vmem:[%s2297 + $0x58] sm:$0xff]
        %v2310 = vld [vmem:[%s2297 + $0x60] sm:$0xff]
        %v2311 = vld [vmem:[%s2297 + $0x68] sm:$0xff]
        %v2312 = vld [vmem:[%s2297 + $0x70] sm:$0xff]
        %v2313 = vld [vmem:[%s2297 + $0x78] sm:$0xff]
        %v2314 = vld [vmem:[%s2297 + $0x80] sm:$0xff]
        %v2315 = vld [vmem:[%s2297 + $0x88] sm:$0xff]
        %v2316 = vld [vmem:[%s2297 + $0x90] sm:$0xff]
        %v2317 = vld [vmem:[%s2297 + $0x98] sm:$0xff]
        %v2318 = vld [vmem:[%s2297 + $0xa0] sm:$0xff]
        %v2319 = vld [vmem:[%s2297 + $0xa8] sm:$0xff]
        %v2320 = vld [vmem:[%s2297 + $0xb0] sm:$0xff]
        %v2321 = vld [vmem:[%s2297 + $0xb8] sm:$0xff]
        %v2322 = vld [vmem:[%s2297 + $0xc0] sm:$0xff]
        %v2323 = vld [vmem:[%s2297 + $0xc8] sm:$0xff]
        %v2324 = vld [vmem:[%s2297 + $0xd0] sm:$0xff]
        %v2325 = vld [vmem:[%s2297 + $0xd8] sm:$0xff]
        %v2326 = vld [vmem:[%s2297 + $0xe0] sm:$0xff]
        %v2327 = vld [vmem:[%s2297 + $0xe8] sm:$0xff]
        %v2328 = vld [vmem:[%s2297 + $0xf0] sm:$0xff]
        %v2329 = vld [vmem:[%s2297 + $0xf8] sm:$0xff]
        %s2330 = scalar_lea.vmem %s2, 128
        %v2331 = vld [vmem:[%s2330] sm:$0xff]
        %v2332 = vld [vmem:[%s2330 + $0x8] sm:$0xff]
        %v2333 = vld [vmem:[%s2330 + $0x10] sm:$0xff]
        %v2334 = vld [vmem:[%s2330 + $0x18] sm:$0xff]
        %v2335 = vld [vmem:[%s2330 + $0x20] sm:$0xff]
        %v2336 = vld [vmem:[%s2330 + $0x28] sm:$0xff]
        %v2337 = vld [vmem:[%s2330 + $0x30] sm:$0xff]
        %v2338 = vld [vmem:[%s2330 + $0x38] sm:$0xff]
        %s2339 = scalar_lea.vmem %s3, 512
        %v2340 = vld [vmem:[%s2339] sm:$0xff]
        %v2341 = vld [vmem:[%s2339 + $0x8] sm:$0xff]
        %v2342 = vld [vmem:[%s2339 + $0x10] sm:$0xff]
        %v2343 = vld [vmem:[%s2339 + $0x18] sm:$0xff]
        %v2344 = vld [vmem:[%s2339 + $0x20] sm:$0xff]
        %v2345 = vld [vmem:[%s2339 + $0x28] sm:$0xff]
        %v2346 = vld [vmem:[%s2339 + $0x30] sm:$0xff]
        %v2347 = vld [vmem:[%s2339 + $0x38] sm:$0xff]
        %v2348 = vld [vmem:[%s2339 + $0x40] sm:$0xff]
        %v2349 = vld [vmem:[%s2339 + $0x48] sm:$0xff]
        %v2350 = vld [vmem:[%s2339 + $0x50] sm:$0xff]
        %v2351 = vld [vmem:[%s2339 + $0x58] sm:$0xff]
        %v2352 = vld [vmem:[%s2339 + $0x60] sm:$0xff]
        %v2353 = vld [vmem:[%s2339 + $0x68] sm:$0xff]
        %v2354 = vld [vmem:[%s2339 + $0x70] sm:$0xff]
        %v2355 = vld [vmem:[%s2339 + $0x78] sm:$0xff]
        %v2356 = vld [vmem:[%s2339 + $0x80] sm:$0xff]
        %v2357 = vld [vmem:[%s2339 + $0x88] sm:$0xff]
        %v2358 = vld [vmem:[%s2339 + $0x90] sm:$0xff]
        %v2359 = vld [vmem:[%s2339 + $0x98] sm:$0xff]
        %v2360 = vld [vmem:[%s2339 + $0xa0] sm:$0xff]
        %v2361 = vld [vmem:[%s2339 + $0xa8] sm:$0xff]
        %v2362 = vld [vmem:[%s2339 + $0xb0] sm:$0xff]
        %v2363 = vld [vmem:[%s2339 + $0xb8] sm:$0xff]
        %v2364 = vld [vmem:[%s2339 + $0xc0] sm:$0xff]
        %v2365 = vld [vmem:[%s2339 + $0xc8] sm:$0xff]
        %v2366 = vld [vmem:[%s2339 + $0xd0] sm:$0xff]
        %v2367 = vld [vmem:[%s2339 + $0xd8] sm:$0xff]
        %v2368 = vld [vmem:[%s2339 + $0xe0] sm:$0xff]
        %v2369 = vld [vmem:[%s2339 + $0xe8] sm:$0xff]
        %v2370 = vld [vmem:[%s2339 + $0xf0] sm:$0xff]
        %v2371 = vld [vmem:[%s2339 + $0xf8] sm:$0xff]
        %v2373 = vsel %vm409, %v2298, 0
        %v2376 = vsel %vm409, %v2299, 0
        %v2379 = vsel %vm409, %v2300, 0
        %v2382 = vsel %vm409, %v2301, 0
        %v2385 = vsel %vm409, %v2302, 0
        %v2388 = vsel %vm409, %v2303, 0
        %v2391 = vsel %vm409, %v2304, 0
        %v2394 = vsel %vm409, %v2305, 0
        %v2397 = vsel %vm409, %v2306, 0
        %v2400 = vsel %vm409, %v2307, 0
        %v2403 = vsel %vm409, %v2308, 0
        %v2406 = vsel %vm409, %v2309, 0
        %v2409 = vsel %vm409, %v2310, 0
        %v2412 = vsel %vm409, %v2311, 0
        %v2415 = vsel %vm409, %v2312, 0
        %v2418 = vsel %vm409, %v2313, 0
        %v2421 = vsel %vm409, %v2314, 0
        %v2424 = vsel %vm409, %v2315, 0
        %v2427 = vsel %vm409, %v2316, 0
        %v2430 = vsel %vm409, %v2317, 0
        %v2433 = vsel %vm409, %v2318, 0
        %v2436 = vsel %vm409, %v2319, 0
        %v2439 = vsel %vm409, %v2320, 0
        %v2442 = vsel %vm409, %v2321, 0
        %v2445 = vsel %vm409, %v2322, 0
        %v2448 = vsel %vm409, %v2323, 0
        %v2451 = vsel %vm409, %v2324, 0
        %v2454 = vsel %vm409, %v2325, 0
        %v2457 = vsel %vm409, %v2326, 0
        %v2460 = vsel %vm409, %v2327, 0
        %v2463 = vsel %vm409, %v2328, 0
        %v2466 = vsel %vm409, %v2329, 0
        %2468 = vmatprep.subr.mxu0 0.0
        %2469 = vmatpush1.msra.mxu0 %v2289
        %2470 = vmatprep.subr.mxu0 0.0
        %2471 = vmatpush1.msra.mxu0 %v2290
        %2472 = vmatprep.subr.mxu0 0.0
        %2473 = vmatpush1.msra.mxu0 %v2291
        %2474 = vmatprep.subr.mxu0 0.0
        %2475 = vmatpush1.msra.mxu0 %v2292
        %2476 = vmatprep.subr.mxu0 0.0
        %2477 = vmatpush1.msra.mxu0 0.0
        %2478 = vmatprep.subr.mxu0 0.0
        %2479 = vmatpush1.msra.mxu0 0.0
        %2480 = vmatprep.subr.mxu0 0.0
        %2481 = vmatpush1.msra.mxu0 0.0
        %2482 = vmatprep.subr.mxu0 0.0
        %2483 = vmatpush1.msra.mxu0 0.0
        %2484 = vmatprep.subr.mxu0 0.0
        %2485 = vmatpush1.msra.mxu0 0.0
        %2486 = vmatprep.subr.mxu0 0.0
        %2487 = vmatpush1.msra.mxu0 0.0
        %2488 = vmatprep.subr.mxu0 0.0
        %2489 = vmatpush1.msra.mxu0 0.0
        %2490 = vmatprep.subr.mxu0 0.0
        %2491 = vmatpush1.msra.mxu0 0.0
        %2492 = vmatprep.subr.mxu0 0.0
        %2493 = vmatpush1.msra.mxu0 0.0
        %2494 = vmatprep.subr.mxu0 0.0
        %2495 = vmatpush1.msra.mxu0 0.0
        %2496 = vmatprep.subr.mxu0 0.0
        %2497 = vmatpush1.msra.mxu0 0.0
        %2498 = vmatprep.subr.mxu0 0.0
        %2499 = vmatpush1.msra.mxu0 0.0
        %2500 = vmatprep.subr.mxu0 0.0
        %2501 = vmatpush1.msra.mxu0 0.0
        %2502 = vmatprep.subr.mxu0 0.0
        %2503 = vmatpush1.msra.mxu0 0.0
        %2504 = vmatprep.subr.mxu0 0.0
        %2505 = vmatpush1.msra.mxu0 0.0
        %2506 = vmatprep.subr.mxu0 0.0
        %2507 = vmatpush1.msra.mxu0 0.0
        %2508 = vmatprep.subr.mxu0 0.0
        %2509 = vmatpush1.msra.mxu0 0.0
        %2510 = vmatprep.subr.mxu0 0.0
        %2511 = vmatpush1.msra.mxu0 0.0
        %2512 = vmatprep.subr.mxu0 0.0
        %2513 = vmatpush1.msra.mxu0 0.0
        %2514 = vmatprep.subr.mxu0 0.0
        %2515 = vmatpush1.msra.mxu0 0.0
        %2516 = vmatprep.subr.mxu0 0.0
        %2517 = vmatpush1.msra.mxu0 0.0
        %2518 = vmatprep.subr.mxu0 0.0
        %2519 = vmatpush1.msra.mxu0 0.0
        %2520 = vmatprep.subr.mxu0 0.0
        %2521 = vmatpush1.msra.mxu0 0.0
        %2522 = vmatprep.subr.mxu0 0.0
        %2523 = vmatpush1.msra.mxu0 0.0
        %2524 = vmatprep.subr.mxu0 0.0
        %2525 = vmatpush1.msra.mxu0 0.0
        %2526 = vmatprep.subr.mxu0 0.0
        %2527 = vmatpush1.msra.mxu0 0.0
        %2528 = vmatprep.subr.mxu0 0.0
        %2529 = vmatpush1.msra.mxu0 0.0
        %2530 = vmatprep.subr.mxu0 0.0
        %2531 = vmatpush1.msra.mxu0 0.0
        %2532 = vmatprep.mubr.f32.mxu0 0.0
        %2533 = vmatmul.mubr.f32.gmra.mrb[0].mxu0 %v2373
        %v2534 = vpop.f32.mrb[0].mxu0
        %v2535 = vadd.f32 0.0, %v2534
        %v2536 = vpop.f32.mrb[0].mxu0
        %2537 = vmatprep.mubr.f32.mxu0 0.0
        %2538 = vmatmul.mubr.f32.gmra.mrb[0].mxu0 %v2376
        %v2539 = vpop.f32.mrb[0].mxu0
        %v2540 = vadd.f32 0.0, %v2539
        %v2541 = vpop.f32.mrb[0].mxu0
        %2542 = vmatprep.mubr.f32.mxu0 0.0
        %2543 = vmatmul.mubr.f32.gmra.mrb[0].mxu0 %v2379
        %v2544 = vpop.f32.mrb[0].mxu0
        %v2545 = vadd.f32 0.0, %v2544
        %v2546 = vpop.f32.mrb[0].mxu0
        %2547 = vmatprep.mubr.f32.mxu0 0.0
        %2548 = vmatmul.mubr.f32.gmra.mrb[0].mxu0 %v2382
        %v2549 = vpop.f32.mrb[0].mxu0
        %v2550 = vadd.f32 0.0, %v2549
        %v2551 = vpop.f32.mrb[0].mxu0
        %2552 = vmatprep.mubr.f32.mxu0 0.0
        %2553 = vmatmul.mubr.f32.gmra.mrb[0].mxu0 %v2385
        %v2554 = vpop.f32.mrb[0].mxu0
        %v2555 = vadd.f32 0.0, %v2554
        %v2556 = vpop.f32.mrb[0].mxu0
        %2557 = vmatprep.mubr.f32.mxu0 0.0
        %2558 = vmatmul.mubr.f32.gmra.mrb[0].mxu0 %v2388
        %v2559 = vpop.f32.mrb[0].mxu0
        %v2560 = vadd.f32 0.0, %v2559
        %v2561 = vpop.f32.mrb[0].mxu0
        %2562 = vmatprep.mubr.f32.mxu0 0.0
        %2563 = vmatmul.mubr.f32.gmra.mrb[0].mxu0 %v2391
        %v2564 = vpop.f32.mrb[0].mxu0
        %v2565 = vadd.f32 0.0, %v2564
        %v2566 = vpop.f32.mrb[0].mxu0
        %2567 = vmatprep.mubr.f32.mxu0 0.0
        %2568 = vmatmul.mubr.f32.gmra.mrb[0].mxu0 %v2394
        %v2569 = vpop.f32.mrb[0].mxu0
        %v2570 = vadd.f32 0.0, %v2569
        %v2571 = vpop.f32.mrb[0].mxu0
        %2572 = vmatprep.mubr.f32.mxu0 0.0
        %2573 = vmatmul.mubr.f32.gmra.mrb[0].mxu0 %v2397
        %v2574 = vpop.f32.mrb[0].mxu0
        %v2575 = vadd.f32 0.0, %v2574
        %v2576 = vpop.f32.mrb[0].mxu0
        %2577 = vmatprep.mubr.f32.mxu0 0.0
        %2578 = vmatmul.mubr.f32.gmra.mrb[0].mxu0 %v2400
        %v2579 = vpop.f32.mrb[0].mxu0
        %v2580 = vadd.f32 0.0, %v2579
        %v2581 = vpop.f32.mrb[0].mxu0
        %2582 = vmatprep.mubr.f32.mxu0 0.0
        %2583 = vmatmul.mubr.f32.gmra.mrb[0].mxu0 %v2403
        %v2584 = vpop.f32.mrb[0].mxu0
        %v2585 = vadd.f32 0.0, %v2584
        %v2586 = vpop.f32.mrb[0].mxu0
        %2587 = vmatprep.mubr.f32.mxu0 0.0
        %2588 = vmatmul.mubr.f32.gmra.mrb[0].mxu0 %v2406
        %v2589 = vpop.f32.mrb[0].mxu0
        %v2590 = vadd.f32 0.0, %v2589
        %v2591 = vpop.f32.mrb[0].mxu0
        %2592 = vmatprep.mubr.f32.mxu0 0.0
        %2593 = vmatmul.mubr.f32.gmra.mrb[0].mxu0 %v2409
        %v2594 = vpop.f32.mrb[0].mxu0
        %v2595 = vadd.f32 0.0, %v2594
        %v2596 = vpop.f32.mrb[0].mxu0
        %2597 = vmatprep.mubr.f32.mxu0 0.0
        %2598 = vmatmul.mubr.f32.gmra.mrb[0].mxu0 %v2412
        %v2599 = vpop.f32.mrb[0].mxu0
        %v2600 = vadd.f32 0.0, %v2599
        %v2601 = vpop.f32.mrb[0].mxu0
        %2602 = vmatprep.mubr.f32.mxu0 0.0
        %2603 = vmatmul.mubr.f32.gmra.mrb[0].mxu0 %v2415
        %v2604 = vpop.f32.mrb[0].mxu0
        %v2605 = vadd.f32 0.0, %v2604
        %v2606 = vpop.f32.mrb[0].mxu0
        %2607 = vmatprep.mubr.f32.mxu0 0.0
        %2608 = vmatmul.mubr.f32.gmra.mrb[0].mxu0 %v2418
        %v2609 = vpop.f32.mrb[0].mxu0
        %v2610 = vadd.f32 0.0, %v2609
        %v2611 = vpop.f32.mrb[0].mxu0
        %2612 = vmatprep.mubr.f32.mxu0 0.0
        %2613 = vmatmul.mubr.f32.gmra.mrb[0].mxu0 %v2421
        %v2614 = vpop.f32.mrb[0].mxu0
        %v2615 = vadd.f32 0.0, %v2614
        %v2616 = vpop.f32.mrb[0].mxu0
        %2617 = vmatprep.mubr.f32.mxu0 0.0
        %2618 = vmatmul.mubr.f32.gmra.mrb[0].mxu0 %v2424
        %v2619 = vpop.f32.mrb[0].mxu0
        %v2620 = vadd.f32 0.0, %v2619
        %v2621 = vpop.f32.mrb[0].mxu0
        %2622 = vmatprep.mubr.f32.mxu0 0.0
        %2623 = vmatmul.mubr.f32.gmra.mrb[0].mxu0 %v2427
        %v2624 = vpop.f32.mrb[0].mxu0
        %v2625 = vadd.f32 0.0, %v2624
        %v2626 = vpop.f32.mrb[0].mxu0
        %2627 = vmatprep.mubr.f32.mxu0 0.0
        %2628 = vmatmul.mubr.f32.gmra.mrb[0].mxu0 %v2430
        %v2629 = vpop.f32.mrb[0].mxu0
        %v2630 = vadd.f32 0.0, %v2629
        %v2631 = vpop.f32.mrb[0].mxu0
        %2632 = vmatprep.mubr.f32.mxu0 0.0
        %2633 = vmatmul.mubr.f32.gmra.mrb[0].mxu0 %v2433
        %v2634 = vpop.f32.mrb[0].mxu0
        %v2635 = vadd.f32 0.0, %v2634
        %v2636 = vpop.f32.mrb[0].mxu0
        %2637 = vmatprep.mubr.f32.mxu0 0.0
        %2638 = vmatmul.mubr.f32.gmra.mrb[0].mxu0 %v2436
        %v2639 = vpop.f32.mrb[0].mxu0
        %v2640 = vadd.f32 0.0, %v2639
        %v2641 = vpop.f32.mrb[0].mxu0
        %2642 = vmatprep.mubr.f32.mxu0 0.0
        %2643 = vmatmul.mubr.f32.gmra.mrb[0].mxu0 %v2439
        %v2644 = vpop.f32.mrb[0].mxu0
        %v2645 = vadd.f32 0.0, %v2644
        %v2646 = vpop.f32.mrb[0].mxu0
        %2647 = vmatprep.mubr.f32.mxu0 0.0
        %2648 = vmatmul.mubr.f32.gmra.mrb[0].mxu0 %v2442
        %v2649 = vpop.f32.mrb[0].mxu0
        %v2650 = vadd.f32 0.0, %v2649
        %v2651 = vpop.f32.mrb[0].mxu0
        %2652 = vmatprep.mubr.f32.mxu0 0.0
        %2653 = vmatmul.mubr.f32.gmra.mrb[0].mxu0 %v2445
        %v2654 = vpop.f32.mrb[0].mxu0
        %v2655 = vadd.f32 0.0, %v2654
        %v2656 = vpop.f32.mrb[0].mxu0
        %2657 = vmatprep.mubr.f32.mxu0 0.0
        %2658 = vmatmul.mubr.f32.gmra.mrb[0].mxu0 %v2448
        %v2659 = vpop.f32.mrb[0].mxu0
        %v2660 = vadd.f32 0.0, %v2659
        %v2661 = vpop.f32.mrb[0].mxu0
        %2662 = vmatprep.mubr.f32.mxu0 0.0
        %2663 = vmatmul.mubr.f32.gmra.mrb[0].mxu0 %v2451
        %v2664 = vpop.f32.mrb[0].mxu0
        %v2665 = vadd.f32 0.0, %v2664
        %v2666 = vpop.f32.mrb[0].mxu0
        %2667 = vmatprep.mubr.f32.mxu0 0.0
        %2668 = vmatmul.mubr.f32.gmra.mrb[0].mxu0 %v2454
        %v2669 = vpop.f32.mrb[0].mxu0
        %v2670 = vadd.f32 0.0, %v2669
        %v2671 = vpop.f32.mrb[0].mxu0
        %2672 = vmatprep.mubr.f32.mxu0 0.0
        %2673 = vmatmul.mubr.f32.gmra.mrb[0].mxu0 %v2457
        %v2674 = vpop.f32.mrb[0].mxu0
        %v2675 = vadd.f32 0.0, %v2674
        %v2676 = vpop.f32.mrb[0].mxu0
        %2677 = vmatprep.mubr.f32.mxu0 0.0
        %2678 = vmatmul.mubr.f32.gmra.mrb[0].mxu0 %v2460
        %v2679 = vpop.f32.mrb[0].mxu0
        %v2680 = vadd.f32 0.0, %v2679
        %v2681 = vpop.f32.mrb[0].mxu0
        %2682 = vmatprep.mubr.f32.mxu0 0.0
        %2683 = vmatmul.mubr.f32.gmra.mrb[0].mxu0 %v2463
        %v2684 = vpop.f32.mrb[0].mxu0
        %v2685 = vadd.f32 0.0, %v2684
        %v2686 = vpop.f32.mrb[0].mxu0
        %2687 = vmatprep.mubr.f32.mxu0 0.0
        %2688 = vmatmul.mubr.f32.gmra.mrb[0].mxu0 %v2466
        %v2689 = vpop.f32.mrb[0].mxu0
        %v2690 = vadd.f32 0.0, %v2689
        %v2691 = vpop.f32.mrb[0].mxu0
        %2692 = vdwg.mxu0
        %v2693 = vmul.f32 %v2535, 2.0
        %v2694 = vmul.f32 %v2540, 2.0
        %v2695 = vmul.f32 %v2545, 2.0
        %v2696 = vmul.f32 %v2550, 2.0
        %v2697 = vmul.f32 %v2555, 2.0
        %v2698 = vmul.f32 %v2560, 2.0
        %v2699 = vmul.f32 %v2565, 2.0
        %v2700 = vmul.f32 %v2570, 2.0
        %v2701 = vmul.f32 %v2575, 2.0
        %v2702 = vmul.f32 %v2580, 2.0
        %v2703 = vmul.f32 %v2585, 2.0
        %v2704 = vmul.f32 %v2590, 2.0
        %v2705 = vmul.f32 %v2595, 2.0
        %v2706 = vmul.f32 %v2600, 2.0
        %v2707 = vmul.f32 %v2605, 2.0
        %v2708 = vmul.f32 %v2610, 2.0
        %v2709 = vmul.f32 %v2615, 2.0
        %v2710 = vmul.f32 %v2620, 2.0
        %v2711 = vmul.f32 %v2625, 2.0
        %v2712 = vmul.f32 %v2630, 2.0
        %v2713 = vmul.f32 %v2635, 2.0
        %v2714 = vmul.f32 %v2640, 2.0
        %v2715 = vmul.f32 %v2645, 2.0
        %v2716 = vmul.f32 %v2650, 2.0
        %v2717 = vmul.f32 %v2655, 2.0
        %v2718 = vmul.f32 %v2660, 2.0
        %v2719 = vmul.f32 %v2665, 2.0
        %v2720 = vmul.f32 %v2670, 2.0
        %v2721 = vmul.f32 %v2675, 2.0
        %v2722 = vmul.f32 %v2680, 2.0
        %v2723 = vmul.f32 %v2685, 2.0
        %v2724 = vmul.f32 %v2690, 2.0
        %2726 = vset.pattern.permute.xlu0 0
        %2727 = vperm.xlu0 %2726, %v2340
        %v2728 = vpop.permute.xlu0 %2727
        %2731 = vset.pattern.permute.xlu0 0
        %2732 = vperm.xlu0 %2731, %v2341
        %v2733 = vpop.permute.xlu0 %2732
        %2736 = vset.pattern.permute.xlu0 0
        %2737 = vperm.xlu0 %2736, %v2342
        %v2738 = vpop.permute.xlu0 %2737
        %2741 = vset.pattern.permute.xlu0 0
        %2742 = vperm.xlu0 %2741, %v2343
        %v2743 = vpop.permute.xlu0 %2742
        %2746 = vset.pattern.permute.xlu0 0
        %2747 = vperm.xlu0 %2746, %v2344
        %v2748 = vpop.permute.xlu0 %2747
        %2751 = vset.pattern.permute.xlu0 0
        %2752 = vperm.xlu0 %2751, %v2345
        %v2753 = vpop.permute.xlu0 %2752
        %2756 = vset.pattern.permute.xlu0 0
        %2757 = vperm.xlu0 %2756, %v2346
        %v2758 = vpop.permute.xlu0 %2757
        %2761 = vset.pattern.permute.xlu0 0
        %2762 = vperm.xlu0 %2761, %v2347
        %v2763 = vpop.permute.xlu0 %2762
        %2766 = vset.pattern.permute.xlu0 0
        %2767 = vperm.xlu0 %2766, %v2348
        %v2768 = vpop.permute.xlu0 %2767
        %2771 = vset.pattern.permute.xlu0 0
        %2772 = vperm.xlu0 %2771, %v2349
        %v2773 = vpop.permute.xlu0 %2772
        %2776 = vset.pattern.permute.xlu0 0
        %2777 = vperm.xlu0 %2776, %v2350
        %v2778 = vpop.permute.xlu0 %2777
        %2781 = vset.pattern.permute.xlu0 0
        %2782 = vperm.xlu0 %2781, %v2351
        %v2783 = vpop.permute.xlu0 %2782
        %2786 = vset.pattern.permute.xlu0 0
        %2787 = vperm.xlu0 %2786, %v2352
        %v2788 = vpop.permute.xlu0 %2787
        %2791 = vset.pattern.permute.xlu0 0
        %2792 = vperm.xlu0 %2791, %v2353
        %v2793 = vpop.permute.xlu0 %2792
        %2796 = vset.pattern.permute.xlu0 0
        %2797 = vperm.xlu0 %2796, %v2354
        %v2798 = vpop.permute.xlu0 %2797
        %2801 = vset.pattern.permute.xlu0 0
        %2802 = vperm.xlu0 %2801, %v2355
        %v2803 = vpop.permute.xlu0 %2802
        %2806 = vset.pattern.permute.xlu0 0
        %2807 = vperm.xlu0 %2806, %v2356
        %v2808 = vpop.permute.xlu0 %2807
        %2811 = vset.pattern.permute.xlu0 0
        %2812 = vperm.xlu0 %2811, %v2357
        %v2813 = vpop.permute.xlu0 %2812
        %2816 = vset.pattern.permute.xlu0 0
        %2817 = vperm.xlu0 %2816, %v2358
        %v2818 = vpop.permute.xlu0 %2817
        %2821 = vset.pattern.permute.xlu0 0
        %2822 = vperm.xlu0 %2821, %v2359
        %v2823 = vpop.permute.xlu0 %2822
        %2826 = vset.pattern.permute.xlu0 0
        %2827 = vperm.xlu0 %2826, %v2360
        %v2828 = vpop.permute.xlu0 %2827
        %2831 = vset.pattern.permute.xlu0 0
        %2832 = vperm.xlu0 %2831, %v2361
        %v2833 = vpop.permute.xlu0 %2832
        %2836 = vset.pattern.permute.xlu0 0
        %2837 = vperm.xlu0 %2836, %v2362
        %v2838 = vpop.permute.xlu0 %2837
        %2841 = vset.pattern.permute.xlu0 0
        %2842 = vperm.xlu0 %2841, %v2363
        %v2843 = vpop.permute.xlu0 %2842
        %2846 = vset.pattern.permute.xlu0 0
        %2847 = vperm.xlu0 %2846, %v2364
        %v2848 = vpop.permute.xlu0 %2847
        %2851 = vset.pattern.permute.xlu0 0
        %2852 = vperm.xlu0 %2851, %v2365
        %v2853 = vpop.permute.xlu0 %2852
        %2856 = vset.pattern.permute.xlu0 0
        %2857 = vperm.xlu0 %2856, %v2366
        %v2858 = vpop.permute.xlu0 %2857
        %2861 = vset.pattern.permute.xlu0 0
        %2862 = vperm.xlu0 %2861, %v2367
        %v2863 = vpop.permute.xlu0 %2862
        %2866 = vset.pattern.permute.xlu0 0
        %2867 = vperm.xlu0 %2866, %v2368
        %v2868 = vpop.permute.xlu0 %2867
        %2871 = vset.pattern.permute.xlu0 0
        %2872 = vperm.xlu0 %2871, %v2369
        %v2873 = vpop.permute.xlu0 %2872
        %2876 = vset.pattern.permute.xlu0 0
        %2877 = vperm.xlu0 %2876, %v2370
        %v2878 = vpop.permute.xlu0 %2877
        %2881 = vset.pattern.permute.xlu0 0
        %2882 = vperm.xlu0 %2881, %v2371
        %v2883 = vpop.permute.xlu0 %2882
        %v2885 = vsub.f32 %v2693, %v2728
        %v2886 = vsub.f32 %v2694, %v2733
        %v2887 = vsub.f32 %v2695, %v2738
        %v2888 = vsub.f32 %v2696, %v2743
        %v2889 = vsub.f32 %v2697, %v2748
        %v2890 = vsub.f32 %v2698, %v2753
        %v2891 = vsub.f32 %v2699, %v2758
        %v2892 = vsub.f32 %v2700, %v2763
        %v2893 = vsub.f32 %v2701, %v2768
        %v2894 = vsub.f32 %v2702, %v2773
        %v2895 = vsub.f32 %v2703, %v2778
        %v2896 = vsub.f32 %v2704, %v2783
        %v2897 = vsub.f32 %v2705, %v2788
        %v2898 = vsub.f32 %v2706, %v2793
        %v2899 = vsub.f32 %v2707, %v2798
        %v2900 = vsub.f32 %v2708, %v2803
        %v2901 = vsub.f32 %v2709, %v2808
        %v2902 = vsub.f32 %v2710, %v2813
        %v2903 = vsub.f32 %v2711, %v2818
        %v2904 = vsub.f32 %v2712, %v2823
        %v2905 = vsub.f32 %v2713, %v2828
        %v2906 = vsub.f32 %v2714, %v2833
        %v2907 = vsub.f32 %v2715, %v2838
        %v2908 = vsub.f32 %v2716, %v2843
        %v2909 = vsub.f32 %v2717, %v2848
        %v2910 = vsub.f32 %v2718, %v2853
        %v2911 = vsub.f32 %v2719, %v2858
        %v2912 = vsub.f32 %v2720, %v2863
        %v2913 = vsub.f32 %v2721, %v2868
        %v2914 = vsub.f32 %v2722, %v2873
        %v2915 = vsub.f32 %v2723, %v2878
        %v2916 = vsub.f32 %v2724, %v2883
        %v2917 = vmax.f32 %v2885, %v2889
        %v2918 = vmax.f32 %v2886, %v2890
        %v2919 = vmax.f32 %v2887, %v2891
        %v2920 = vmax.f32 %v2888, %v2892
        %v2921 = vmax.f32 %v2917, %v2893
        %v2922 = vmax.f32 %v2918, %v2894
        %v2923 = vmax.f32 %v2919, %v2895
        %v2924 = vmax.f32 %v2920, %v2896
        %v2925 = vmax.f32 %v2921, %v2897
        %v2926 = vmax.f32 %v2922, %v2898
        %v2927 = vmax.f32 %v2923, %v2899
        %v2928 = vmax.f32 %v2924, %v2900
        %v2929 = vmax.f32 %v2925, %v2901
        %v2930 = vmax.f32 %v2926, %v2902
        %v2931 = vmax.f32 %v2927, %v2903
        %v2932 = vmax.f32 %v2928, %v2904
        %v2933 = vmax.f32 %v2929, %v2905
        %v2934 = vmax.f32 %v2930, %v2906
        %v2935 = vmax.f32 %v2931, %v2907
        %v2936 = vmax.f32 %v2932, %v2908
        %v2937 = vmax.f32 %v2933, %v2909
        %v2938 = vmax.f32 %v2934, %v2910
        %v2939 = vmax.f32 %v2935, %v2911
        %v2940 = vmax.f32 %v2936, %v2912
        %v2941 = vmax.f32 %v2937, %v2913
        %v2942 = vmax.f32 %v2938, %v2914
        %v2943 = vmax.f32 %v2939, %v2915
        %v2944 = vmax.f32 %v2940, %v2916
        %v2945 = vmax.f32 %v2941, %v2942
        %v2946 = vmax.f32 %v2943, %v2944
        %v2947 = vmax.f32 %v2945, %v2946
        %v2948 = vrot.slane %v2947, 4
        %v2949 = vmax.f32 %v2947, %v2948
        %v2950 = vrot.slane %v2949, 2
        %v2951 = vmax.f32 %v2949, %v2950
        %v2952 = vrot.slane %v2951, 1
        %v2953 = vmax.f32 %v2951, %v2952
        %vm2954 = vcmp.ge.f32.partialorder %v2885, %v2953
        %vm2955 = vcmp.ge.f32.partialorder %v2886, %v2953
        %vm2956 = vcmp.ge.f32.partialorder %v2887, %v2953
        %vm2957 = vcmp.ge.f32.partialorder %v2888, %v2953
        %vm2958 = vcmp.ge.f32.partialorder %v2889, %v2953
        %vm2959 = vcmp.ge.f32.partialorder %v2890, %v2953
        %vm2960 = vcmp.ge.f32.partialorder %v2891, %v2953
        %vm2961 = vcmp.ge.f32.partialorder %v2892, %v2953
        %vm2962 = vcmp.ge.f32.partialorder %v2893, %v2953
        %vm2963 = vcmp.ge.f32.partialorder %v2894, %v2953
        %vm2964 = vcmp.ge.f32.partialorder %v2895, %v2953
        %vm2965 = vcmp.ge.f32.partialorder %v2896, %v2953
        %vm2966 = vcmp.ge.f32.partialorder %v2897, %v2953
        %vm2967 = vcmp.ge.f32.partialorder %v2898, %v2953
        %vm2968 = vcmp.ge.f32.partialorder %v2899, %v2953
        %vm2969 = vcmp.ge.f32.partialorder %v2900, %v2953
        %vm2970 = vcmp.ge.f32.partialorder %v2901, %v2953
        %vm2971 = vcmp.ge.f32.partialorder %v2902, %v2953
        %vm2972 = vcmp.ge.f32.partialorder %v2903, %v2953
        %vm2973 = vcmp.ge.f32.partialorder %v2904, %v2953
        %vm2974 = vcmp.ge.f32.partialorder %v2905, %v2953
        %vm2975 = vcmp.ge.f32.partialorder %v2906, %v2953
        %vm2976 = vcmp.ge.f32.partialorder %v2907, %v2953
        %vm2977 = vcmp.ge.f32.partialorder %v2908, %v2953
        %vm2978 = vcmp.ge.f32.partialorder %v2909, %v2953
        %vm2979 = vcmp.ge.f32.partialorder %v2910, %v2953
        %vm2980 = vcmp.ge.f32.partialorder %v2911, %v2953
        %vm2981 = vcmp.ge.f32.partialorder %v2912, %v2953
        %vm2982 = vcmp.ge.f32.partialorder %v2913, %v2953
        %vm2983 = vcmp.ge.f32.partialorder %v2914, %v2953
        %vm2984 = vcmp.ge.f32.partialorder %v2915, %v2953
        %vm2985 = vcmp.ge.f32.partialorder %v2916, %v2953
        %v2986 = vsel %vm2954, %v305, 256
        %v2987 = vsel %vm2955, %v306, 256
        %v2988 = vsel %vm2956, %v307, 256
        %v2989 = vsel %vm2957, %v308, 256
        %v2990 = vsel %vm2958, %v309, 256
        %v2991 = vsel %vm2959, %v310, 256
        %v2992 = vsel %vm2960, %v311, 256
        %v2993 = vsel %vm2961, %v312, 256
        %v2994 = vsel %vm2962, %v313, 256
        %v2995 = vsel %vm2963, %v314, 256
        %v2996 = vsel %vm2964, %v315, 256
        %v2997 = vsel %vm2965, %v316, 256
        %v2998 = vsel %vm2966, %v317, 256
        %v2999 = vsel %vm2967, %v318, 256
        %v3000 = vsel %vm2968, %v319, 256
        %v3001 = vsel %vm2969, %v320, 256
        %v3002 = vsel %vm2970, %v321, 256
        %v3003 = vsel %vm2971, %v322, 256
        %v3004 = vsel %vm2972, %v323, 256
        %v3005 = vsel %vm2973, %v324, 256
        %v3006 = vsel %vm2974, %v325, 256
        %v3007 = vsel %vm2975, %v326, 256
        %v3008 = vsel %vm2976, %v327, 256
        %v3009 = vsel %vm2977, %v328, 256
        %v3010 = vsel %vm2978, %v329, 256
        %v3011 = vsel %vm2979, %v330, 256
        %v3012 = vsel %vm2980, %v331, 256
        %v3013 = vsel %vm2981, %v332, 256
        %v3014 = vsel %vm2982, %v333, 256
        %v3015 = vsel %vm2983, %v334, 256
        %v3016 = vsel %vm2984, %v335, 256
        %v3017 = vsel %vm2985, %v336, 256
        %vm3018 = vcmp.lt.s32.totalorder %v2986, %v2990
        %v3019 = vsel %vm3018, %v2986, %v2990
        %vm3020 = vcmp.lt.s32.totalorder %v2987, %v2991
        %v3021 = vsel %vm3020, %v2987, %v2991
        %vm3022 = vcmp.lt.s32.totalorder %v2988, %v2992
        %v3023 = vsel %vm3022, %v2988, %v2992
        %vm3024 = vcmp.lt.s32.totalorder %v2989, %v2993
        %v3025 = vsel %vm3024, %v2989, %v2993
        %vm3026 = vcmp.lt.s32.totalorder %v3019, %v2994
        %v3027 = vsel %vm3026, %v3019, %v2994
        %vm3028 = vcmp.lt.s32.totalorder %v3021, %v2995
        %v3029 = vsel %vm3028, %v3021, %v2995
        %vm3030 = vcmp.lt.s32.totalorder %v3023, %v2996
        %v3031 = vsel %vm3030, %v3023, %v2996
        %vm3032 = vcmp.lt.s32.totalorder %v3025, %v2997
        %v3033 = vsel %vm3032, %v3025, %v2997
        %vm3034 = vcmp.lt.s32.totalorder %v3027, %v2998
        %v3035 = vsel %vm3034, %v3027, %v2998
        %vm3036 = vcmp.lt.s32.totalorder %v3029, %v2999
        %v3037 = vsel %vm3036, %v3029, %v2999
        %vm3038 = vcmp.lt.s32.totalorder %v3031, %v3000
        %v3039 = vsel %vm3038, %v3031, %v3000
        %vm3040 = vcmp.lt.s32.totalorder %v3033, %v3001
        %v3041 = vsel %vm3040, %v3033, %v3001
        %vm3042 = vcmp.lt.s32.totalorder %v3035, %v3002
        %v3043 = vsel %vm3042, %v3035, %v3002
        %vm3044 = vcmp.lt.s32.totalorder %v3037, %v3003
        %v3045 = vsel %vm3044, %v3037, %v3003
        %vm3046 = vcmp.lt.s32.totalorder %v3039, %v3004
        %v3047 = vsel %vm3046, %v3039, %v3004
        %vm3048 = vcmp.lt.s32.totalorder %v3041, %v3005
        %v3049 = vsel %vm3048, %v3041, %v3005
        %vm3050 = vcmp.lt.s32.totalorder %v3043, %v3006
        %v3051 = vsel %vm3050, %v3043, %v3006
        %vm3052 = vcmp.lt.s32.totalorder %v3045, %v3007
        %v3053 = vsel %vm3052, %v3045, %v3007
        %vm3054 = vcmp.lt.s32.totalorder %v3047, %v3008
        %v3055 = vsel %vm3054, %v3047, %v3008
        %vm3056 = vcmp.lt.s32.totalorder %v3049, %v3009
        %v3057 = vsel %vm3056, %v3049, %v3009
        %vm3058 = vcmp.lt.s32.totalorder %v3051, %v3010
        %v3059 = vsel %vm3058, %v3051, %v3010
        %vm3060 = vcmp.lt.s32.totalorder %v3053, %v3011
        %v3061 = vsel %vm3060, %v3053, %v3011
        %vm3062 = vcmp.lt.s32.totalorder %v3055, %v3012
        %v3063 = vsel %vm3062, %v3055, %v3012
        %vm3064 = vcmp.lt.s32.totalorder %v3057, %v3013
        %v3065 = vsel %vm3064, %v3057, %v3013
        %vm3066 = vcmp.lt.s32.totalorder %v3059, %v3014
        %v3067 = vsel %vm3066, %v3059, %v3014
        %vm3068 = vcmp.lt.s32.totalorder %v3061, %v3015
        %v3069 = vsel %vm3068, %v3061, %v3015
        %vm3070 = vcmp.lt.s32.totalorder %v3063, %v3016
        %v3071 = vsel %vm3070, %v3063, %v3016
        %vm3072 = vcmp.lt.s32.totalorder %v3065, %v3017
        %v3073 = vsel %vm3072, %v3065, %v3017
        %vm3074 = vcmp.lt.s32.totalorder %v3067, %v3069
        %v3075 = vsel %vm3074, %v3067, %v3069
        %vm3076 = vcmp.lt.s32.totalorder %v3071, %v3073
        %v3077 = vsel %vm3076, %v3071, %v3073
        %vm3078 = vcmp.lt.s32.totalorder %v3075, %v3077
        %v3079 = vsel %vm3078, %v3075, %v3077
        %v3080 = vrot.slane %v3079, 4
        %vm3081 = vcmp.lt.s32.totalorder %v3079, %v3080
        %v3082 = vsel %vm3081, %v3079, %v3080
        %v3083 = vrot.slane %v3082, 2
        %vm3084 = vcmp.lt.s32.totalorder %v3082, %v3083
        %v3085 = vsel %vm3084, %v3082, %v3083
        %v3086 = vrot.slane %v3085, 1
        %vm3087 = vcmp.lt.s32.totalorder %v3085, %v3086
        %v3088 = vsel %vm3087, %v3085, %v3086
        %vm3089 = vcmp.eq.s32.totalorder %v305, %v3088
        %vm3090 = vcmp.eq.s32.totalorder %v306, %v3088
        %vm3091 = vcmp.eq.s32.totalorder %v307, %v3088
        %vm3092 = vcmp.eq.s32.totalorder %v308, %v3088
        %vm3093 = vcmp.eq.s32.totalorder %v309, %v3088
        %vm3094 = vcmp.eq.s32.totalorder %v310, %v3088
        %vm3095 = vcmp.eq.s32.totalorder %v311, %v3088
        %vm3096 = vcmp.eq.s32.totalorder %v312, %v3088
        %vm3097 = vcmp.eq.s32.totalorder %v313, %v3088
        %vm3098 = vcmp.eq.s32.totalorder %v314, %v3088
        %vm3099 = vcmp.eq.s32.totalorder %v315, %v3088
        %vm3100 = vcmp.eq.s32.totalorder %v316, %v3088
        %vm3101 = vcmp.eq.s32.totalorder %v317, %v3088
        %vm3102 = vcmp.eq.s32.totalorder %v318, %v3088
        %vm3103 = vcmp.eq.s32.totalorder %v319, %v3088
        %vm3104 = vcmp.eq.s32.totalorder %v320, %v3088
        %vm3105 = vcmp.eq.s32.totalorder %v321, %v3088
        %vm3106 = vcmp.eq.s32.totalorder %v322, %v3088
        %vm3107 = vcmp.eq.s32.totalorder %v323, %v3088
        %vm3108 = vcmp.eq.s32.totalorder %v324, %v3088
        %vm3109 = vcmp.eq.s32.totalorder %v325, %v3088
        %vm3110 = vcmp.eq.s32.totalorder %v326, %v3088
        %vm3111 = vcmp.eq.s32.totalorder %v327, %v3088
        %vm3112 = vcmp.eq.s32.totalorder %v328, %v3088
        %vm3113 = vcmp.eq.s32.totalorder %v329, %v3088
        %vm3114 = vcmp.eq.s32.totalorder %v330, %v3088
        %vm3115 = vcmp.eq.s32.totalorder %v331, %v3088
        %vm3116 = vcmp.eq.s32.totalorder %v332, %v3088
        %vm3117 = vcmp.eq.s32.totalorder %v333, %v3088
        %vm3118 = vcmp.eq.s32.totalorder %v334, %v3088
        %vm3119 = vcmp.eq.s32.totalorder %v335, %v3088
        %vm3120 = vcmp.eq.s32.totalorder %v336, %v3088
        %v3121 = vsel %vm3089, 1, 0
        %v3122 = vsel %vm3090, 1, 0
        %v3123 = vsel %vm3091, 1, 0
        %v3124 = vsel %vm3092, 1, 0
        %v3125 = vsel %vm3093, 1, 0
        %v3126 = vsel %vm3094, 1, 0
        %v3127 = vsel %vm3095, 1, 0
        %v3128 = vsel %vm3096, 1, 0
        %v3129 = vsel %vm3097, 1, 0
        %v3130 = vsel %vm3098, 1, 0
        %v3131 = vsel %vm3099, 1, 0
        %v3132 = vsel %vm3100, 1, 0
        %v3133 = vsel %vm3101, 1, 0
        %v3134 = vsel %vm3102, 1, 0
        %v3135 = vsel %vm3103, 1, 0
        %v3136 = vsel %vm3104, 1, 0
        %v3137 = vsel %vm3105, 1, 0
        %v3138 = vsel %vm3106, 1, 0
        %v3139 = vsel %vm3107, 1, 0
        %v3140 = vsel %vm3108, 1, 0
        %v3141 = vsel %vm3109, 1, 0
        %v3142 = vsel %vm3110, 1, 0
        %v3143 = vsel %vm3111, 1, 0
        %v3144 = vsel %vm3112, 1, 0
        %v3145 = vsel %vm3113, 1, 0
        %v3146 = vsel %vm3114, 1, 0
        %v3147 = vsel %vm3115, 1, 0
        %v3148 = vsel %vm3116, 1, 0
        %v3149 = vsel %vm3117, 1, 0
        %v3150 = vsel %vm3118, 1, 0
        %v3151 = vsel %vm3119, 1, 0
        %v3152 = vsel %vm3120, 1, 0
        %v3153 = vcvt.s32.f32 %v3121
        %v3154 = vcvt.s32.f32 %v3122
        %v3155 = vcvt.s32.f32 %v3123
        %v3156 = vcvt.s32.f32 %v3124
        %v3157 = vcvt.s32.f32 %v3125
        %v3158 = vcvt.s32.f32 %v3126
        %v3159 = vcvt.s32.f32 %v3127
        %v3160 = vcvt.s32.f32 %v3128
        %v3161 = vcvt.s32.f32 %v3129
        %v3162 = vcvt.s32.f32 %v3130
        %v3163 = vcvt.s32.f32 %v3131
        %v3164 = vcvt.s32.f32 %v3132
        %v3165 = vcvt.s32.f32 %v3133
        %v3166 = vcvt.s32.f32 %v3134
        %v3167 = vcvt.s32.f32 %v3135
        %v3168 = vcvt.s32.f32 %v3136
        %v3169 = vcvt.s32.f32 %v3137
        %v3170 = vcvt.s32.f32 %v3138
        %v3171 = vcvt.s32.f32 %v3139
        %v3172 = vcvt.s32.f32 %v3140
        %v3173 = vcvt.s32.f32 %v3141
        %v3174 = vcvt.s32.f32 %v3142
        %v3175 = vcvt.s32.f32 %v3143
        %v3176 = vcvt.s32.f32 %v3144
        %v3177 = vcvt.s32.f32 %v3145
        %v3178 = vcvt.s32.f32 %v3146
        %v3179 = vcvt.s32.f32 %v3147
        %v3180 = vcvt.s32.f32 %v3148
        %v3181 = vcvt.s32.f32 %v3149
        %v3182 = vcvt.s32.f32 %v3150
        %v3183 = vcvt.s32.f32 %v3151
        %v3184 = vcvt.s32.f32 %v3152
        %3185 = vmatprep.subr.mxu0 0.0
        %3186 = vmatpush1.msra.mxu0 %v3153
        %3187 = vmatprep.subr.mxu0 0.0
        %3188 = vmatpush1.msra.mxu0 %v3154
        %3189 = vmatprep.subr.mxu0 0.0
        %3190 = vmatpush1.msra.mxu0 %v3155
        %3191 = vmatprep.subr.mxu0 0.0
        %3192 = vmatpush1.msra.mxu0 %v3156
        %3193 = vmatprep.subr.mxu0 0.0
        %3194 = vmatpush1.msra.mxu0 %v3157
        %3195 = vmatprep.subr.mxu0 0.0
        %3196 = vmatpush1.msra.mxu0 %v3158
        %3197 = vmatprep.subr.mxu0 0.0
        %3198 = vmatpush1.msra.mxu0 %v3159
        %3199 = vmatprep.subr.mxu0 0.0
        %3200 = vmatpush1.msra.mxu0 %v3160
        %3201 = vmatprep.subr.mxu0 0.0
        %3202 = vmatpush1.msra.mxu0 %v3161
        %3203 = vmatprep.subr.mxu0 0.0
        %3204 = vmatpush1.msra.mxu0 %v3162
        %3205 = vmatprep.subr.mxu0 0.0
        %3206 = vmatpush1.msra.mxu0 %v3163
        %3207 = vmatprep.subr.mxu0 0.0
        %3208 = vmatpush1.msra.mxu0 %v3164
        %3209 = vmatprep.subr.mxu0 0.0
        %3210 = vmatpush1.msra.mxu0 %v3165
        %3211 = vmatprep.subr.mxu0 0.0
        %3212 = vmatpush1.msra.mxu0 %v3166
        %3213 = vmatprep.subr.mxu0 0.0
        %3214 = vmatpush1.msra.mxu0 %v3167
        %3215 = vmatprep.subr.mxu0 0.0
        %3216 = vmatpush1.msra.mxu0 %v3168
        %3217 = vmatprep.subr.mxu0 0.0
        %3218 = vmatpush1.msra.mxu0 %v3169
        %3219 = vmatprep.subr.mxu0 0.0
        %3220 = vmatpush1.msra.mxu0 %v3170
        %3221 = vmatprep.subr.mxu0 0.0
        %3222 = vmatpush1.msra.mxu0 %v3171
        %3223 = vmatprep.subr.mxu0 0.0
        %3224 = vmatpush1.msra.mxu0 %v3172
        %3225 = vmatprep.subr.mxu0 0.0
        %3226 = vmatpush1.msra.mxu0 %v3173
        %3227 = vmatprep.subr.mxu0 0.0
        %3228 = vmatpush1.msra.mxu0 %v3174
        %3229 = vmatprep.subr.mxu0 0.0
        %3230 = vmatpush1.msra.mxu0 %v3175
        %3231 = vmatprep.subr.mxu0 0.0
        %3232 = vmatpush1.msra.mxu0 %v3176
        %3233 = vmatprep.subr.mxu0 0.0
        %3234 = vmatpush1.msra.mxu0 %v3177
        %3235 = vmatprep.subr.mxu0 0.0
        %3236 = vmatpush1.msra.mxu0 %v3178
        %3237 = vmatprep.subr.mxu0 0.0
        %3238 = vmatpush1.msra.mxu0 %v3179
        %3239 = vmatprep.subr.mxu0 0.0
        %3240 = vmatpush1.msra.mxu0 %v3180
        %3241 = vmatprep.subr.mxu0 0.0
        %3242 = vmatpush1.msra.mxu0 %v3181
        %3243 = vmatprep.subr.mxu0 0.0
        %3244 = vmatpush1.msra.mxu0 %v3182
        %3245 = vmatprep.subr.mxu0 0.0
        %3246 = vmatpush1.msra.mxu0 %v3183
        %3247 = vmatprep.subr.mxu0 0.0
        %3248 = vmatpush1.msra.mxu0 %v3184
        %3249 = vmatprep.mubr.f32.mxu0 %v2332
        %3250 = vmatmul.mubr.f32.gmra.mrb[0].mxu0 %v2331
        %v3251 = vpop.f32.mrb[0].mxu0
        %v3252 = vadd.f32 0.0, %v3251
        %v3253 = vpop.f32.mrb[0].mxu0
        %3254 = vmatprep.mubr.f32.mxu0 %v2334
        %3255 = vmatmul.mubr.f32.gmra.mrb[0].mxu0 %v2333
        %v3256 = vpop.f32.mrb[0].mxu0
        %v3257 = vadd.f32 0.0, %v3256
        %v3258 = vpop.f32.mrb[0].mxu0
        %3259 = vmatprep.mubr.f32.mxu0 %v2336
        %3260 = vmatmul.mubr.f32.gmra.mrb[0].mxu0 %v2335
        %v3261 = vpop.f32.mrb[0].mxu0
        %v3262 = vadd.f32 0.0, %v3261
        %v3263 = vpop.f32.mrb[0].mxu0
        %3264 = vmatprep.mubr.f32.mxu0 %v2338
        %3265 = vmatmul.mubr.f32.gmra.mrb[0].mxu0 %v2337
        %v3266 = vpop.f32.mrb[0].mxu0
        %v3267 = vadd.f32 0.0, %v3266
        %v3268 = vpop.f32.mrb[0].mxu0
        %3269 = vdwg.mxu0
        %v3270 = vsub.f32 %v2289, %v3252
        %v3271 = vsub.f32 %v2290, %v3257
        %v3272 = vsub.f32 %v2291, %v3262
        %v3273 = vsub.f32 %v2292, %v3267
        %v3274 = vadd.f32 %v2293, %v3252
        %v3275 = vadd.f32 %v2294, %v3257
        %v3276 = vadd.f32 %v2295, %v3262
        %v3277 = vadd.f32 %v2296, %v3267
        %s3278 = scalar_lea.vmem %s1, 768
        %v3279 = vld [vmem:[%s3278] sm:$0xff]
        %v3280 = vld [vmem:[%s3278 + $0x8] sm:$0xff]
        %v3281 = vld [vmem:[%s3278 + $0x10] sm:$0xff]
        %v3282 = vld [vmem:[%s3278 + $0x18] sm:$0xff]
        %v3283 = vld [vmem:[%s3278 + $0x20] sm:$0xff]
        %v3284 = vld [vmem:[%s3278 + $0x28] sm:$0xff]
        %v3285 = vld [vmem:[%s3278 + $0x30] sm:$0xff]
        %v3286 = vld [vmem:[%s3278 + $0x38] sm:$0xff]
        %v3287 = vld [vmem:[%s3278 + $0x40] sm:$0xff]
        %v3288 = vld [vmem:[%s3278 + $0x48] sm:$0xff]
        %v3289 = vld [vmem:[%s3278 + $0x50] sm:$0xff]
        %v3290 = vld [vmem:[%s3278 + $0x58] sm:$0xff]
        %v3291 = vld [vmem:[%s3278 + $0x60] sm:$0xff]
        %v3292 = vld [vmem:[%s3278 + $0x68] sm:$0xff]
        %v3293 = vld [vmem:[%s3278 + $0x70] sm:$0xff]
        %v3294 = vld [vmem:[%s3278 + $0x78] sm:$0xff]
        %v3295 = vld [vmem:[%s3278 + $0x80] sm:$0xff]
        %v3296 = vld [vmem:[%s3278 + $0x88] sm:$0xff]
        %v3297 = vld [vmem:[%s3278 + $0x90] sm:$0xff]
        %v3298 = vld [vmem:[%s3278 + $0x98] sm:$0xff]
        %v3299 = vld [vmem:[%s3278 + $0xa0] sm:$0xff]
        %v3300 = vld [vmem:[%s3278 + $0xa8] sm:$0xff]
        %v3301 = vld [vmem:[%s3278 + $0xb0] sm:$0xff]
        %v3302 = vld [vmem:[%s3278 + $0xb8] sm:$0xff]
        %v3303 = vld [vmem:[%s3278 + $0xc0] sm:$0xff]
        %v3304 = vld [vmem:[%s3278 + $0xc8] sm:$0xff]
        %v3305 = vld [vmem:[%s3278 + $0xd0] sm:$0xff]
        %v3306 = vld [vmem:[%s3278 + $0xd8] sm:$0xff]
        %v3307 = vld [vmem:[%s3278 + $0xe0] sm:$0xff]
        %v3308 = vld [vmem:[%s3278 + $0xe8] sm:$0xff]
        %v3309 = vld [vmem:[%s3278 + $0xf0] sm:$0xff]
        %v3310 = vld [vmem:[%s3278 + $0xf8] sm:$0xff]
        %s3311 = scalar_lea.vmem %s2, 192
        %v3312 = vld [vmem:[%s3311] sm:$0xff]
        %v3313 = vld [vmem:[%s3311 + $0x8] sm:$0xff]
        %v3314 = vld [vmem:[%s3311 + $0x10] sm:$0xff]
        %v3315 = vld [vmem:[%s3311 + $0x18] sm:$0xff]
        %v3316 = vld [vmem:[%s3311 + $0x20] sm:$0xff]
        %v3317 = vld [vmem:[%s3311 + $0x28] sm:$0xff]
        %v3318 = vld [vmem:[%s3311 + $0x30] sm:$0xff]
        %v3319 = vld [vmem:[%s3311 + $0x38] sm:$0xff]
        %s3320 = scalar_lea.vmem %s3, 768
        %v3321 = vld [vmem:[%s3320] sm:$0xff]
        %v3322 = vld [vmem:[%s3320 + $0x8] sm:$0xff]
        %v3323 = vld [vmem:[%s3320 + $0x10] sm:$0xff]
        %v3324 = vld [vmem:[%s3320 + $0x18] sm:$0xff]
        %v3325 = vld [vmem:[%s3320 + $0x20] sm:$0xff]
        %v3326 = vld [vmem:[%s3320 + $0x28] sm:$0xff]
        %v3327 = vld [vmem:[%s3320 + $0x30] sm:$0xff]
        %v3328 = vld [vmem:[%s3320 + $0x38] sm:$0xff]
        %v3329 = vld [vmem:[%s3320 + $0x40] sm:$0xff]
        %v3330 = vld [vmem:[%s3320 + $0x48] sm:$0xff]
        %v3331 = vld [vmem:[%s3320 + $0x50] sm:$0xff]
        %v3332 = vld [vmem:[%s3320 + $0x58] sm:$0xff]
        %v3333 = vld [vmem:[%s3320 + $0x60] sm:$0xff]
        %v3334 = vld [vmem:[%s3320 + $0x68] sm:$0xff]
        %v3335 = vld [vmem:[%s3320 + $0x70] sm:$0xff]
        %v3336 = vld [vmem:[%s3320 + $0x78] sm:$0xff]
        %v3337 = vld [vmem:[%s3320 + $0x80] sm:$0xff]
        %v3338 = vld [vmem:[%s3320 + $0x88] sm:$0xff]
        %v3339 = vld [vmem:[%s3320 + $0x90] sm:$0xff]
        %v3340 = vld [vmem:[%s3320 + $0x98] sm:$0xff]
        %v3341 = vld [vmem:[%s3320 + $0xa0] sm:$0xff]
        %v3342 = vld [vmem:[%s3320 + $0xa8] sm:$0xff]
        %v3343 = vld [vmem:[%s3320 + $0xb0] sm:$0xff]
        %v3344 = vld [vmem:[%s3320 + $0xb8] sm:$0xff]
        %v3345 = vld [vmem:[%s3320 + $0xc0] sm:$0xff]
        %v3346 = vld [vmem:[%s3320 + $0xc8] sm:$0xff]
        %v3347 = vld [vmem:[%s3320 + $0xd0] sm:$0xff]
        %v3348 = vld [vmem:[%s3320 + $0xd8] sm:$0xff]
        %v3349 = vld [vmem:[%s3320 + $0xe0] sm:$0xff]
        %v3350 = vld [vmem:[%s3320 + $0xe8] sm:$0xff]
        %v3351 = vld [vmem:[%s3320 + $0xf0] sm:$0xff]
        %v3352 = vld [vmem:[%s3320 + $0xf8] sm:$0xff]
        %v3354 = vsel %vm409, %v3279, 0
        %v3357 = vsel %vm409, %v3280, 0
        %v3360 = vsel %vm409, %v3281, 0
        %v3363 = vsel %vm409, %v3282, 0
        %v3366 = vsel %vm409, %v3283, 0
        %v3369 = vsel %vm409, %v3284, 0
        %v3372 = vsel %vm409, %v3285, 0
        %v3375 = vsel %vm409, %v3286, 0
        %v3378 = vsel %vm409, %v3287, 0
        %v3381 = vsel %vm409, %v3288, 0
        %v3384 = vsel %vm409, %v3289, 0
        %v3387 = vsel %vm409, %v3290, 0
        %v3390 = vsel %vm409, %v3291, 0
        %v3393 = vsel %vm409, %v3292, 0
        %v3396 = vsel %vm409, %v3293, 0
        %v3399 = vsel %vm409, %v3294, 0
        %v3402 = vsel %vm409, %v3295, 0
        %v3405 = vsel %vm409, %v3296, 0
        %v3408 = vsel %vm409, %v3297, 0
        %v3411 = vsel %vm409, %v3298, 0
        %v3414 = vsel %vm409, %v3299, 0
        %v3417 = vsel %vm409, %v3300, 0
        %v3420 = vsel %vm409, %v3301, 0
        %v3423 = vsel %vm409, %v3302, 0
        %v3426 = vsel %vm409, %v3303, 0
        %v3429 = vsel %vm409, %v3304, 0
        %v3432 = vsel %vm409, %v3305, 0
        %v3435 = vsel %vm409, %v3306, 0
        %v3438 = vsel %vm409, %v3307, 0
        %v3441 = vsel %vm409, %v3308, 0
        %v3444 = vsel %vm409, %v3309, 0
        %v3447 = vsel %vm409, %v3310, 0
        %3449 = vmatprep.subr.mxu0 0.0
        %3450 = vmatpush1.msra.mxu0 %v3270
        %3451 = vmatprep.subr.mxu0 0.0
        %3452 = vmatpush1.msra.mxu0 %v3271
        %3453 = vmatprep.subr.mxu0 0.0
        %3454 = vmatpush1.msra.mxu0 %v3272
        %3455 = vmatprep.subr.mxu0 0.0
        %3456 = vmatpush1.msra.mxu0 %v3273
        %3457 = vmatprep.subr.mxu0 0.0
        %3458 = vmatpush1.msra.mxu0 0.0
        %3459 = vmatprep.subr.mxu0 0.0
        %3460 = vmatpush1.msra.mxu0 0.0
        %3461 = vmatprep.subr.mxu0 0.0
        %3462 = vmatpush1.msra.mxu0 0.0
        %3463 = vmatprep.subr.mxu0 0.0
        %3464 = vmatpush1.msra.mxu0 0.0
        %3465 = vmatprep.subr.mxu0 0.0
        %3466 = vmatpush1.msra.mxu0 0.0
        %3467 = vmatprep.subr.mxu0 0.0
        %3468 = vmatpush1.msra.mxu0 0.0
        %3469 = vmatprep.subr.mxu0 0.0
        %3470 = vmatpush1.msra.mxu0 0.0
        %3471 = vmatprep.subr.mxu0 0.0
        %3472 = vmatpush1.msra.mxu0 0.0
        %3473 = vmatprep.subr.mxu0 0.0
        %3474 = vmatpush1.msra.mxu0 0.0
        %3475 = vmatprep.subr.mxu0 0.0
        %3476 = vmatpush1.msra.mxu0 0.0
        %3477 = vmatprep.subr.mxu0 0.0
        %3478 = vmatpush1.msra.mxu0 0.0
        %3479 = vmatprep.subr.mxu0 0.0
        %3480 = vmatpush1.msra.mxu0 0.0
        %3481 = vmatprep.subr.mxu0 0.0
        %3482 = vmatpush1.msra.mxu0 0.0
        %3483 = vmatprep.subr.mxu0 0.0
        %3484 = vmatpush1.msra.mxu0 0.0
        %3485 = vmatprep.subr.mxu0 0.0
        %3486 = vmatpush1.msra.mxu0 0.0
        %3487 = vmatprep.subr.mxu0 0.0
        %3488 = vmatpush1.msra.mxu0 0.0
        %3489 = vmatprep.subr.mxu0 0.0
        %3490 = vmatpush1.msra.mxu0 0.0
        %3491 = vmatprep.subr.mxu0 0.0
        %3492 = vmatpush1.msra.mxu0 0.0
        %3493 = vmatprep.subr.mxu0 0.0
        %3494 = vmatpush1.msra.mxu0 0.0
        %3495 = vmatprep.subr.mxu0 0.0
        %3496 = vmatpush1.msra.mxu0 0.0
        %3497 = vmatprep.subr.mxu0 0.0
        %3498 = vmatpush1.msra.mxu0 0.0
        %3499 = vmatprep.subr.mxu0 0.0
        %3500 = vmatpush1.msra.mxu0 0.0
        %3501 = vmatprep.subr.mxu0 0.0
        %3502 = vmatpush1.msra.mxu0 0.0
        %3503 = vmatprep.subr.mxu0 0.0
        %3504 = vmatpush1.msra.mxu0 0.0
        %3505 = vmatprep.subr.mxu0 0.0
        %3506 = vmatpush1.msra.mxu0 0.0
        %3507 = vmatprep.subr.mxu0 0.0
        %3508 = vmatpush1.msra.mxu0 0.0
        %3509 = vmatprep.subr.mxu0 0.0
        %3510 = vmatpush1.msra.mxu0 0.0
        %3511 = vmatprep.subr.mxu0 0.0
        %3512 = vmatpush1.msra.mxu0 0.0
        %3513 = vmatprep.mubr.f32.mxu0 0.0
        %3514 = vmatmul.mubr.f32.gmra.mrb[0].mxu0 %v3354
        %v3515 = vpop.f32.mrb[0].mxu0
        %v3516 = vadd.f32 0.0, %v3515
        %v3517 = vpop.f32.mrb[0].mxu0
        %3518 = vmatprep.mubr.f32.mxu0 0.0
        %3519 = vmatmul.mubr.f32.gmra.mrb[0].mxu0 %v3357
        %v3520 = vpop.f32.mrb[0].mxu0
        %v3521 = vadd.f32 0.0, %v3520
        %v3522 = vpop.f32.mrb[0].mxu0
        %3523 = vmatprep.mubr.f32.mxu0 0.0
        %3524 = vmatmul.mubr.f32.gmra.mrb[0].mxu0 %v3360
        %v3525 = vpop.f32.mrb[0].mxu0
        %v3526 = vadd.f32 0.0, %v3525
        %v3527 = vpop.f32.mrb[0].mxu0
        %3528 = vmatprep.mubr.f32.mxu0 0.0
        %3529 = vmatmul.mubr.f32.gmra.mrb[0].mxu0 %v3363
        %v3530 = vpop.f32.mrb[0].mxu0
        %v3531 = vadd.f32 0.0, %v3530
        %v3532 = vpop.f32.mrb[0].mxu0
        %3533 = vmatprep.mubr.f32.mxu0 0.0
        %3534 = vmatmul.mubr.f32.gmra.mrb[0].mxu0 %v3366
        %v3535 = vpop.f32.mrb[0].mxu0
        %v3536 = vadd.f32 0.0, %v3535
        %v3537 = vpop.f32.mrb[0].mxu0
        %3538 = vmatprep.mubr.f32.mxu0 0.0
        %3539 = vmatmul.mubr.f32.gmra.mrb[0].mxu0 %v3369
        %v3540 = vpop.f32.mrb[0].mxu0
        %v3541 = vadd.f32 0.0, %v3540
        %v3542 = vpop.f32.mrb[0].mxu0
        %3543 = vmatprep.mubr.f32.mxu0 0.0
        %3544 = vmatmul.mubr.f32.gmra.mrb[0].mxu0 %v3372
        %v3545 = vpop.f32.mrb[0].mxu0
        %v3546 = vadd.f32 0.0, %v3545
        %v3547 = vpop.f32.mrb[0].mxu0
        %3548 = vmatprep.mubr.f32.mxu0 0.0
        %3549 = vmatmul.mubr.f32.gmra.mrb[0].mxu0 %v3375
        %v3550 = vpop.f32.mrb[0].mxu0
        %v3551 = vadd.f32 0.0, %v3550
        %v3552 = vpop.f32.mrb[0].mxu0
        %3553 = vmatprep.mubr.f32.mxu0 0.0
        %3554 = vmatmul.mubr.f32.gmra.mrb[0].mxu0 %v3378
        %v3555 = vpop.f32.mrb[0].mxu0
        %v3556 = vadd.f32 0.0, %v3555
        %v3557 = vpop.f32.mrb[0].mxu0
        %3558 = vmatprep.mubr.f32.mxu0 0.0
        %3559 = vmatmul.mubr.f32.gmra.mrb[0].mxu0 %v3381
        %v3560 = vpop.f32.mrb[0].mxu0
        %v3561 = vadd.f32 0.0, %v3560
        %v3562 = vpop.f32.mrb[0].mxu0
        %3563 = vmatprep.mubr.f32.mxu0 0.0
        %3564 = vmatmul.mubr.f32.gmra.mrb[0].mxu0 %v3384
        %v3565 = vpop.f32.mrb[0].mxu0
        %v3566 = vadd.f32 0.0, %v3565
        %v3567 = vpop.f32.mrb[0].mxu0
        %3568 = vmatprep.mubr.f32.mxu0 0.0
        %3569 = vmatmul.mubr.f32.gmra.mrb[0].mxu0 %v3387
        %v3570 = vpop.f32.mrb[0].mxu0
        %v3571 = vadd.f32 0.0, %v3570
        %v3572 = vpop.f32.mrb[0].mxu0
        %3573 = vmatprep.mubr.f32.mxu0 0.0
        %3574 = vmatmul.mubr.f32.gmra.mrb[0].mxu0 %v3390
        %v3575 = vpop.f32.mrb[0].mxu0
        %v3576 = vadd.f32 0.0, %v3575
        %v3577 = vpop.f32.mrb[0].mxu0
        %3578 = vmatprep.mubr.f32.mxu0 0.0
        %3579 = vmatmul.mubr.f32.gmra.mrb[0].mxu0 %v3393
        %v3580 = vpop.f32.mrb[0].mxu0
        %v3581 = vadd.f32 0.0, %v3580
        %v3582 = vpop.f32.mrb[0].mxu0
        %3583 = vmatprep.mubr.f32.mxu0 0.0
        %3584 = vmatmul.mubr.f32.gmra.mrb[0].mxu0 %v3396
        %v3585 = vpop.f32.mrb[0].mxu0
        %v3586 = vadd.f32 0.0, %v3585
        %v3587 = vpop.f32.mrb[0].mxu0
        %3588 = vmatprep.mubr.f32.mxu0 0.0
        %3589 = vmatmul.mubr.f32.gmra.mrb[0].mxu0 %v3399
        %v3590 = vpop.f32.mrb[0].mxu0
        %v3591 = vadd.f32 0.0, %v3590
        %v3592 = vpop.f32.mrb[0].mxu0
        %3593 = vmatprep.mubr.f32.mxu0 0.0
        %3594 = vmatmul.mubr.f32.gmra.mrb[0].mxu0 %v3402
        %v3595 = vpop.f32.mrb[0].mxu0
        %v3596 = vadd.f32 0.0, %v3595
        %v3597 = vpop.f32.mrb[0].mxu0
        %3598 = vmatprep.mubr.f32.mxu0 0.0
        %3599 = vmatmul.mubr.f32.gmra.mrb[0].mxu0 %v3405
        %v3600 = vpop.f32.mrb[0].mxu0
        %v3601 = vadd.f32 0.0, %v3600
        %v3602 = vpop.f32.mrb[0].mxu0
        %3603 = vmatprep.mubr.f32.mxu0 0.0
        %3604 = vmatmul.mubr.f32.gmra.mrb[0].mxu0 %v3408
        %v3605 = vpop.f32.mrb[0].mxu0
        %v3606 = vadd.f32 0.0, %v3605
        %v3607 = vpop.f32.mrb[0].mxu0
        %3608 = vmatprep.mubr.f32.mxu0 0.0
        %3609 = vmatmul.mubr.f32.gmra.mrb[0].mxu0 %v3411
        %v3610 = vpop.f32.mrb[0].mxu0
        %v3611 = vadd.f32 0.0, %v3610
        %v3612 = vpop.f32.mrb[0].mxu0
        %3613 = vmatprep.mubr.f32.mxu0 0.0
        %3614 = vmatmul.mubr.f32.gmra.mrb[0].mxu0 %v3414
        %v3615 = vpop.f32.mrb[0].mxu0
        %v3616 = vadd.f32 0.0, %v3615
        %v3617 = vpop.f32.mrb[0].mxu0
        %3618 = vmatprep.mubr.f32.mxu0 0.0
        %3619 = vmatmul.mubr.f32.gmra.mrb[0].mxu0 %v3417
        %v3620 = vpop.f32.mrb[0].mxu0
        %v3621 = vadd.f32 0.0, %v3620
        %v3622 = vpop.f32.mrb[0].mxu0
        %3623 = vmatprep.mubr.f32.mxu0 0.0
        %3624 = vmatmul.mubr.f32.gmra.mrb[0].mxu0 %v3420
        %v3625 = vpop.f32.mrb[0].mxu0
        %v3626 = vadd.f32 0.0, %v3625
        %v3627 = vpop.f32.mrb[0].mxu0
        %3628 = vmatprep.mubr.f32.mxu0 0.0
        %3629 = vmatmul.mubr.f32.gmra.mrb[0].mxu0 %v3423
        %v3630 = vpop.f32.mrb[0].mxu0
        %v3631 = vadd.f32 0.0, %v3630
        %v3632 = vpop.f32.mrb[0].mxu0
        %3633 = vmatprep.mubr.f32.mxu0 0.0
        %3634 = vmatmul.mubr.f32.gmra.mrb[0].mxu0 %v3426
        %v3635 = vpop.f32.mrb[0].mxu0
        %v3636 = vadd.f32 0.0, %v3635
        %v3637 = vpop.f32.mrb[0].mxu0
        %3638 = vmatprep.mubr.f32.mxu0 0.0
        %3639 = vmatmul.mubr.f32.gmra.mrb[0].mxu0 %v3429
        %v3640 = vpop.f32.mrb[0].mxu0
        %v3641 = vadd.f32 0.0, %v3640
        %v3642 = vpop.f32.mrb[0].mxu0
        %3643 = vmatprep.mubr.f32.mxu0 0.0
        %3644 = vmatmul.mubr.f32.gmra.mrb[0].mxu0 %v3432
        %v3645 = vpop.f32.mrb[0].mxu0
        %v3646 = vadd.f32 0.0, %v3645
        %v3647 = vpop.f32.mrb[0].mxu0
        %3648 = vmatprep.mubr.f32.mxu0 0.0
        %3649 = vmatmul.mubr.f32.gmra.mrb[0].mxu0 %v3435
        %v3650 = vpop.f32.mrb[0].mxu0
        %v3651 = vadd.f32 0.0, %v3650
        %v3652 = vpop.f32.mrb[0].mxu0
        %3653 = vmatprep.mubr.f32.mxu0 0.0
        %3654 = vmatmul.mubr.f32.gmra.mrb[0].mxu0 %v3438
        %v3655 = vpop.f32.mrb[0].mxu0
        %v3656 = vadd.f32 0.0, %v3655
        %v3657 = vpop.f32.mrb[0].mxu0
        %3658 = vmatprep.mubr.f32.mxu0 0.0
        %3659 = vmatmul.mubr.f32.gmra.mrb[0].mxu0 %v3441
        %v3660 = vpop.f32.mrb[0].mxu0
        %v3661 = vadd.f32 0.0, %v3660
        %v3662 = vpop.f32.mrb[0].mxu0
        %3663 = vmatprep.mubr.f32.mxu0 0.0
        %3664 = vmatmul.mubr.f32.gmra.mrb[0].mxu0 %v3444
        %v3665 = vpop.f32.mrb[0].mxu0
        %v3666 = vadd.f32 0.0, %v3665
        %v3667 = vpop.f32.mrb[0].mxu0
        %3668 = vmatprep.mubr.f32.mxu0 0.0
        %3669 = vmatmul.mubr.f32.gmra.mrb[0].mxu0 %v3447
        %v3670 = vpop.f32.mrb[0].mxu0
        %v3671 = vadd.f32 0.0, %v3670
        %v3672 = vpop.f32.mrb[0].mxu0
        %3673 = vdwg.mxu0
        %v3674 = vmul.f32 %v3516, 2.0
        %v3675 = vmul.f32 %v3521, 2.0
        %v3676 = vmul.f32 %v3526, 2.0
        %v3677 = vmul.f32 %v3531, 2.0
        %v3678 = vmul.f32 %v3536, 2.0
        %v3679 = vmul.f32 %v3541, 2.0
        %v3680 = vmul.f32 %v3546, 2.0
        %v3681 = vmul.f32 %v3551, 2.0
        %v3682 = vmul.f32 %v3556, 2.0
        %v3683 = vmul.f32 %v3561, 2.0
        %v3684 = vmul.f32 %v3566, 2.0
        %v3685 = vmul.f32 %v3571, 2.0
        %v3686 = vmul.f32 %v3576, 2.0
        %v3687 = vmul.f32 %v3581, 2.0
        %v3688 = vmul.f32 %v3586, 2.0
        %v3689 = vmul.f32 %v3591, 2.0
        %v3690 = vmul.f32 %v3596, 2.0
        %v3691 = vmul.f32 %v3601, 2.0
        %v3692 = vmul.f32 %v3606, 2.0
        %v3693 = vmul.f32 %v3611, 2.0
        %v3694 = vmul.f32 %v3616, 2.0
        %v3695 = vmul.f32 %v3621, 2.0
        %v3696 = vmul.f32 %v3626, 2.0
        %v3697 = vmul.f32 %v3631, 2.0
        %v3698 = vmul.f32 %v3636, 2.0
        %v3699 = vmul.f32 %v3641, 2.0
        %v3700 = vmul.f32 %v3646, 2.0
        %v3701 = vmul.f32 %v3651, 2.0
        %v3702 = vmul.f32 %v3656, 2.0
        %v3703 = vmul.f32 %v3661, 2.0
        %v3704 = vmul.f32 %v3666, 2.0
        %v3705 = vmul.f32 %v3671, 2.0
        %3707 = vset.pattern.permute.xlu0 0
        %3708 = vperm.xlu0 %3707, %v3321
        %v3709 = vpop.permute.xlu0 %3708
        %3712 = vset.pattern.permute.xlu0 0
        %3713 = vperm.xlu0 %3712, %v3322
        %v3714 = vpop.permute.xlu0 %3713
        %3717 = vset.pattern.permute.xlu0 0
        %3718 = vperm.xlu0 %3717, %v3323
        %v3719 = vpop.permute.xlu0 %3718
        %3722 = vset.pattern.permute.xlu0 0
        %3723 = vperm.xlu0 %3722, %v3324
        %v3724 = vpop.permute.xlu0 %3723
        %3727 = vset.pattern.permute.xlu0 0
        %3728 = vperm.xlu0 %3727, %v3325
        %v3729 = vpop.permute.xlu0 %3728
        %3732 = vset.pattern.permute.xlu0 0
        %3733 = vperm.xlu0 %3732, %v3326
        %v3734 = vpop.permute.xlu0 %3733
        %3737 = vset.pattern.permute.xlu0 0
        %3738 = vperm.xlu0 %3737, %v3327
        %v3739 = vpop.permute.xlu0 %3738
        %3742 = vset.pattern.permute.xlu0 0
        %3743 = vperm.xlu0 %3742, %v3328
        %v3744 = vpop.permute.xlu0 %3743
        %3747 = vset.pattern.permute.xlu0 0
        %3748 = vperm.xlu0 %3747, %v3329
        %v3749 = vpop.permute.xlu0 %3748
        %3752 = vset.pattern.permute.xlu0 0
        %3753 = vperm.xlu0 %3752, %v3330
        %v3754 = vpop.permute.xlu0 %3753
        %3757 = vset.pattern.permute.xlu0 0
        %3758 = vperm.xlu0 %3757, %v3331
        %v3759 = vpop.permute.xlu0 %3758
        %3762 = vset.pattern.permute.xlu0 0
        %3763 = vperm.xlu0 %3762, %v3332
        %v3764 = vpop.permute.xlu0 %3763
        %3767 = vset.pattern.permute.xlu0 0
        %3768 = vperm.xlu0 %3767, %v3333
        %v3769 = vpop.permute.xlu0 %3768
        %3772 = vset.pattern.permute.xlu0 0
        %3773 = vperm.xlu0 %3772, %v3334
        %v3774 = vpop.permute.xlu0 %3773
        %3777 = vset.pattern.permute.xlu0 0
        %3778 = vperm.xlu0 %3777, %v3335
        %v3779 = vpop.permute.xlu0 %3778
        %3782 = vset.pattern.permute.xlu0 0
        %3783 = vperm.xlu0 %3782, %v3336
        %v3784 = vpop.permute.xlu0 %3783
        %3787 = vset.pattern.permute.xlu0 0
        %3788 = vperm.xlu0 %3787, %v3337
        %v3789 = vpop.permute.xlu0 %3788
        %3792 = vset.pattern.permute.xlu0 0
        %3793 = vperm.xlu0 %3792, %v3338
        %v3794 = vpop.permute.xlu0 %3793
        %3797 = vset.pattern.permute.xlu0 0
        %3798 = vperm.xlu0 %3797, %v3339
        %v3799 = vpop.permute.xlu0 %3798
        %3802 = vset.pattern.permute.xlu0 0
        %3803 = vperm.xlu0 %3802, %v3340
        %v3804 = vpop.permute.xlu0 %3803
        %3807 = vset.pattern.permute.xlu0 0
        %3808 = vperm.xlu0 %3807, %v3341
        %v3809 = vpop.permute.xlu0 %3808
        %3812 = vset.pattern.permute.xlu0 0
        %3813 = vperm.xlu0 %3812, %v3342
        %v3814 = vpop.permute.xlu0 %3813
        %3817 = vset.pattern.permute.xlu0 0
        %3818 = vperm.xlu0 %3817, %v3343
        %v3819 = vpop.permute.xlu0 %3818
        %3822 = vset.pattern.permute.xlu0 0
        %3823 = vperm.xlu0 %3822, %v3344
        %v3824 = vpop.permute.xlu0 %3823
        %3827 = vset.pattern.permute.xlu0 0
        %3828 = vperm.xlu0 %3827, %v3345
        %v3829 = vpop.permute.xlu0 %3828
        %3832 = vset.pattern.permute.xlu0 0
        %3833 = vperm.xlu0 %3832, %v3346
        %v3834 = vpop.permute.xlu0 %3833
        %3837 = vset.pattern.permute.xlu0 0
        %3838 = vperm.xlu0 %3837, %v3347
        %v3839 = vpop.permute.xlu0 %3838
        %3842 = vset.pattern.permute.xlu0 0
        %3843 = vperm.xlu0 %3842, %v3348
        %v3844 = vpop.permute.xlu0 %3843
        %3847 = vset.pattern.permute.xlu0 0
        %3848 = vperm.xlu0 %3847, %v3349
        %v3849 = vpop.permute.xlu0 %3848
        %3852 = vset.pattern.permute.xlu0 0
        %3853 = vperm.xlu0 %3852, %v3350
        %v3854 = vpop.permute.xlu0 %3853
        %3857 = vset.pattern.permute.xlu0 0
        %3858 = vperm.xlu0 %3857, %v3351
        %v3859 = vpop.permute.xlu0 %3858
        %3862 = vset.pattern.permute.xlu0 0
        %3863 = vperm.xlu0 %3862, %v3352
        %v3864 = vpop.permute.xlu0 %3863
        %v3866 = vsub.f32 %v3674, %v3709
        %v3867 = vsub.f32 %v3675, %v3714
        %v3868 = vsub.f32 %v3676, %v3719
        %v3869 = vsub.f32 %v3677, %v3724
        %v3870 = vsub.f32 %v3678, %v3729
        %v3871 = vsub.f32 %v3679, %v3734
        %v3872 = vsub.f32 %v3680, %v3739
        %v3873 = vsub.f32 %v3681, %v3744
        %v3874 = vsub.f32 %v3682, %v3749
        %v3875 = vsub.f32 %v3683, %v3754
        %v3876 = vsub.f32 %v3684, %v3759
        %v3877 = vsub.f32 %v3685, %v3764
        %v3878 = vsub.f32 %v3686, %v3769
        %v3879 = vsub.f32 %v3687, %v3774
        %v3880 = vsub.f32 %v3688, %v3779
        %v3881 = vsub.f32 %v3689, %v3784
        %v3882 = vsub.f32 %v3690, %v3789
        %v3883 = vsub.f32 %v3691, %v3794
        %v3884 = vsub.f32 %v3692, %v3799
        %v3885 = vsub.f32 %v3693, %v3804
        %v3886 = vsub.f32 %v3694, %v3809
        %v3887 = vsub.f32 %v3695, %v3814
        %v3888 = vsub.f32 %v3696, %v3819
        %v3889 = vsub.f32 %v3697, %v3824
        %v3890 = vsub.f32 %v3698, %v3829
        %v3891 = vsub.f32 %v3699, %v3834
        %v3892 = vsub.f32 %v3700, %v3839
        %v3893 = vsub.f32 %v3701, %v3844
        %v3894 = vsub.f32 %v3702, %v3849
        %v3895 = vsub.f32 %v3703, %v3854
        %v3896 = vsub.f32 %v3704, %v3859
        %v3897 = vsub.f32 %v3705, %v3864
        %v3898 = vmax.f32 %v3866, %v3870
        %v3899 = vmax.f32 %v3867, %v3871
        %v3900 = vmax.f32 %v3868, %v3872
        %v3901 = vmax.f32 %v3869, %v3873
        %v3902 = vmax.f32 %v3898, %v3874
        %v3903 = vmax.f32 %v3899, %v3875
        %v3904 = vmax.f32 %v3900, %v3876
        %v3905 = vmax.f32 %v3901, %v3877
        %v3906 = vmax.f32 %v3902, %v3878
        %v3907 = vmax.f32 %v3903, %v3879
        %v3908 = vmax.f32 %v3904, %v3880
        %v3909 = vmax.f32 %v3905, %v3881
        %v3910 = vmax.f32 %v3906, %v3882
        %v3911 = vmax.f32 %v3907, %v3883
        %v3912 = vmax.f32 %v3908, %v3884
        %v3913 = vmax.f32 %v3909, %v3885
        %v3914 = vmax.f32 %v3910, %v3886
        %v3915 = vmax.f32 %v3911, %v3887
        %v3916 = vmax.f32 %v3912, %v3888
        %v3917 = vmax.f32 %v3913, %v3889
        %v3918 = vmax.f32 %v3914, %v3890
        %v3919 = vmax.f32 %v3915, %v3891
        %v3920 = vmax.f32 %v3916, %v3892
        %v3921 = vmax.f32 %v3917, %v3893
        %v3922 = vmax.f32 %v3918, %v3894
        %v3923 = vmax.f32 %v3919, %v3895
        %v3924 = vmax.f32 %v3920, %v3896
        %v3925 = vmax.f32 %v3921, %v3897
        %v3926 = vmax.f32 %v3922, %v3923
        %v3927 = vmax.f32 %v3924, %v3925
        %v3928 = vmax.f32 %v3926, %v3927
        %v3929 = vrot.slane %v3928, 4
        %v3930 = vmax.f32 %v3928, %v3929
        %v3931 = vrot.slane %v3930, 2
        %v3932 = vmax.f32 %v3930, %v3931
        %v3933 = vrot.slane %v3932, 1
        %v3934 = vmax.f32 %v3932, %v3933
        %vm3935 = vcmp.ge.f32.partialorder %v3866, %v3934
        %vm3936 = vcmp.ge.f32.partialorder %v3867, %v3934
        %vm3937 = vcmp.ge.f32.partialorder %v3868, %v3934
        %vm3938 = vcmp.ge.f32.partialorder %v3869, %v3934
        %vm3939 = vcmp.ge.f32.partialorder %v3870, %v3934
        %vm3940 = vcmp.ge.f32.partialorder %v3871, %v3934
        %vm3941 = vcmp.ge.f32.partialorder %v3872, %v3934
        %vm3942 = vcmp.ge.f32.partialorder %v3873, %v3934
        %vm3943 = vcmp.ge.f32.partialorder %v3874, %v3934
        %vm3944 = vcmp.ge.f32.partialorder %v3875, %v3934
        %vm3945 = vcmp.ge.f32.partialorder %v3876, %v3934
        %vm3946 = vcmp.ge.f32.partialorder %v3877, %v3934
        %vm3947 = vcmp.ge.f32.partialorder %v3878, %v3934
        %vm3948 = vcmp.ge.f32.partialorder %v3879, %v3934
        %vm3949 = vcmp.ge.f32.partialorder %v3880, %v3934
        %vm3950 = vcmp.ge.f32.partialorder %v3881, %v3934
        %vm3951 = vcmp.ge.f32.partialorder %v3882, %v3934
        %vm3952 = vcmp.ge.f32.partialorder %v3883, %v3934
        %vm3953 = vcmp.ge.f32.partialorder %v3884, %v3934
        %vm3954 = vcmp.ge.f32.partialorder %v3885, %v3934
        %vm3955 = vcmp.ge.f32.partialorder %v3886, %v3934
        %vm3956 = vcmp.ge.f32.partialorder %v3887, %v3934
        %vm3957 = vcmp.ge.f32.partialorder %v3888, %v3934
        %vm3958 = vcmp.ge.f32.partialorder %v3889, %v3934
        %vm3959 = vcmp.ge.f32.partialorder %v3890, %v3934
        %vm3960 = vcmp.ge.f32.partialorder %v3891, %v3934
        %vm3961 = vcmp.ge.f32.partialorder %v3892, %v3934
        %vm3962 = vcmp.ge.f32.partialorder %v3893, %v3934
        %vm3963 = vcmp.ge.f32.partialorder %v3894, %v3934
        %vm3964 = vcmp.ge.f32.partialorder %v3895, %v3934
        %vm3965 = vcmp.ge.f32.partialorder %v3896, %v3934
        %vm3966 = vcmp.ge.f32.partialorder %v3897, %v3934
        %v3967 = vsel %vm3935, %v305, 256
        %v3968 = vsel %vm3936, %v306, 256
        %v3969 = vsel %vm3937, %v307, 256
        %v3970 = vsel %vm3938, %v308, 256
        %v3971 = vsel %vm3939, %v309, 256
        %v3972 = vsel %vm3940, %v310, 256
        %v3973 = vsel %vm3941, %v311, 256
        %v3974 = vsel %vm3942, %v312, 256
        %v3975 = vsel %vm3943, %v313, 256
        %v3976 = vsel %vm3944, %v314, 256
        %v3977 = vsel %vm3945, %v315, 256
        %v3978 = vsel %vm3946, %v316, 256
        %v3979 = vsel %vm3947, %v317, 256
        %v3980 = vsel %vm3948, %v318, 256
        %v3981 = vsel %vm3949, %v319, 256
        %v3982 = vsel %vm3950, %v320, 256
        %v3983 = vsel %vm3951, %v321, 256
        %v3984 = vsel %vm3952, %v322, 256
        %v3985 = vsel %vm3953, %v323, 256
        %v3986 = vsel %vm3954, %v324, 256
        %v3987 = vsel %vm3955, %v325, 256
        %v3988 = vsel %vm3956, %v326, 256
        %v3989 = vsel %vm3957, %v327, 256
        %v3990 = vsel %vm3958, %v328, 256
        %v3991 = vsel %vm3959, %v329, 256
        %v3992 = vsel %vm3960, %v330, 256
        %v3993 = vsel %vm3961, %v331, 256
        %v3994 = vsel %vm3962, %v332, 256
        %v3995 = vsel %vm3963, %v333, 256
        %v3996 = vsel %vm3964, %v334, 256
        %v3997 = vsel %vm3965, %v335, 256
        %v3998 = vsel %vm3966, %v336, 256
        %vm3999 = vcmp.lt.s32.totalorder %v3967, %v3971
        %v4000 = vsel %vm3999, %v3967, %v3971
        %vm4001 = vcmp.lt.s32.totalorder %v3968, %v3972
        %v4002 = vsel %vm4001, %v3968, %v3972
        %vm4003 = vcmp.lt.s32.totalorder %v3969, %v3973
        %v4004 = vsel %vm4003, %v3969, %v3973
        %vm4005 = vcmp.lt.s32.totalorder %v3970, %v3974
        %v4006 = vsel %vm4005, %v3970, %v3974
        %vm4007 = vcmp.lt.s32.totalorder %v4000, %v3975
        %v4008 = vsel %vm4007, %v4000, %v3975
        %vm4009 = vcmp.lt.s32.totalorder %v4002, %v3976
        %v4010 = vsel %vm4009, %v4002, %v3976
        %vm4011 = vcmp.lt.s32.totalorder %v4004, %v3977
        %v4012 = vsel %vm4011, %v4004, %v3977
        %vm4013 = vcmp.lt.s32.totalorder %v4006, %v3978
        %v4014 = vsel %vm4013, %v4006, %v3978
        %vm4015 = vcmp.lt.s32.totalorder %v4008, %v3979
        %v4016 = vsel %vm4015, %v4008, %v3979
        %vm4017 = vcmp.lt.s32.totalorder %v4010, %v3980
        %v4018 = vsel %vm4017, %v4010, %v3980
        %vm4019 = vcmp.lt.s32.totalorder %v4012, %v3981
        %v4020 = vsel %vm4019, %v4012, %v3981
        %vm4021 = vcmp.lt.s32.totalorder %v4014, %v3982
        %v4022 = vsel %vm4021, %v4014, %v3982
        %vm4023 = vcmp.lt.s32.totalorder %v4016, %v3983
        %v4024 = vsel %vm4023, %v4016, %v3983
        %vm4025 = vcmp.lt.s32.totalorder %v4018, %v3984
        %v4026 = vsel %vm4025, %v4018, %v3984
        %vm4027 = vcmp.lt.s32.totalorder %v4020, %v3985
        %v4028 = vsel %vm4027, %v4020, %v3985
        %vm4029 = vcmp.lt.s32.totalorder %v4022, %v3986
        %v4030 = vsel %vm4029, %v4022, %v3986
        %vm4031 = vcmp.lt.s32.totalorder %v4024, %v3987
        %v4032 = vsel %vm4031, %v4024, %v3987
        %vm4033 = vcmp.lt.s32.totalorder %v4026, %v3988
        %v4034 = vsel %vm4033, %v4026, %v3988
        %vm4035 = vcmp.lt.s32.totalorder %v4028, %v3989
        %v4036 = vsel %vm4035, %v4028, %v3989
        %vm4037 = vcmp.lt.s32.totalorder %v4030, %v3990
        %v4038 = vsel %vm4037, %v4030, %v3990
        %vm4039 = vcmp.lt.s32.totalorder %v4032, %v3991
        %v4040 = vsel %vm4039, %v4032, %v3991
        %vm4041 = vcmp.lt.s32.totalorder %v4034, %v3992
        %v4042 = vsel %vm4041, %v4034, %v3992
        %vm4043 = vcmp.lt.s32.totalorder %v4036, %v3993
        %v4044 = vsel %vm4043, %v4036, %v3993
        %vm4045 = vcmp.lt.s32.totalorder %v4038, %v3994
        %v4046 = vsel %vm4045, %v4038, %v3994
        %vm4047 = vcmp.lt.s32.totalorder %v4040, %v3995
        %v4048 = vsel %vm4047, %v4040, %v3995
        %vm4049 = vcmp.lt.s32.totalorder %v4042, %v3996
        %v4050 = vsel %vm4049, %v4042, %v3996
        %vm4051 = vcmp.lt.s32.totalorder %v4044, %v3997
        %v4052 = vsel %vm4051, %v4044, %v3997
        %vm4053 = vcmp.lt.s32.totalorder %v4046, %v3998
        %v4054 = vsel %vm4053, %v4046, %v3998
        %vm4055 = vcmp.lt.s32.totalorder %v4048, %v4050
        %v4056 = vsel %vm4055, %v4048, %v4050
        %vm4057 = vcmp.lt.s32.totalorder %v4052, %v4054
        %v4058 = vsel %vm4057, %v4052, %v4054
        %vm4059 = vcmp.lt.s32.totalorder %v4056, %v4058
        %v4060 = vsel %vm4059, %v4056, %v4058
        %v4061 = vrot.slane %v4060, 4
        %vm4062 = vcmp.lt.s32.totalorder %v4060, %v4061
        %v4063 = vsel %vm4062, %v4060, %v4061
        %v4064 = vrot.slane %v4063, 2
        %vm4065 = vcmp.lt.s32.totalorder %v4063, %v4064
        %v4066 = vsel %vm4065, %v4063, %v4064
        %v4067 = vrot.slane %v4066, 1
        %vm4068 = vcmp.lt.s32.totalorder %v4066, %v4067
        %v4069 = vsel %vm4068, %v4066, %v4067
        %vm4070 = vcmp.eq.s32.totalorder %v305, %v4069
        %vm4071 = vcmp.eq.s32.totalorder %v306, %v4069
        %vm4072 = vcmp.eq.s32.totalorder %v307, %v4069
        %vm4073 = vcmp.eq.s32.totalorder %v308, %v4069
        %vm4074 = vcmp.eq.s32.totalorder %v309, %v4069
        %vm4075 = vcmp.eq.s32.totalorder %v310, %v4069
        %vm4076 = vcmp.eq.s32.totalorder %v311, %v4069
        %vm4077 = vcmp.eq.s32.totalorder %v312, %v4069
        %vm4078 = vcmp.eq.s32.totalorder %v313, %v4069
        %vm4079 = vcmp.eq.s32.totalorder %v314, %v4069
        %vm4080 = vcmp.eq.s32.totalorder %v315, %v4069
        %vm4081 = vcmp.eq.s32.totalorder %v316, %v4069
        %vm4082 = vcmp.eq.s32.totalorder %v317, %v4069
        %vm4083 = vcmp.eq.s32.totalorder %v318, %v4069
        %vm4084 = vcmp.eq.s32.totalorder %v319, %v4069
        %vm4085 = vcmp.eq.s32.totalorder %v320, %v4069
        %vm4086 = vcmp.eq.s32.totalorder %v321, %v4069
        %vm4087 = vcmp.eq.s32.totalorder %v322, %v4069
        %vm4088 = vcmp.eq.s32.totalorder %v323, %v4069
        %vm4089 = vcmp.eq.s32.totalorder %v324, %v4069
        %vm4090 = vcmp.eq.s32.totalorder %v325, %v4069
        %vm4091 = vcmp.eq.s32.totalorder %v326, %v4069
        %vm4092 = vcmp.eq.s32.totalorder %v327, %v4069
        %vm4093 = vcmp.eq.s32.totalorder %v328, %v4069
        %vm4094 = vcmp.eq.s32.totalorder %v329, %v4069
        %vm4095 = vcmp.eq.s32.totalorder %v330, %v4069
        %vm4096 = vcmp.eq.s32.totalorder %v331, %v4069
        %vm4097 = vcmp.eq.s32.totalorder %v332, %v4069
        %vm4098 = vcmp.eq.s32.totalorder %v333, %v4069
        %vm4099 = vcmp.eq.s32.totalorder %v334, %v4069
        %vm4100 = vcmp.eq.s32.totalorder %v335, %v4069
        %vm4101 = vcmp.eq.s32.totalorder %v336, %v4069
        %v4102 = vsel %vm4070, 1, 0
        %v4103 = vsel %vm4071, 1, 0
        %v4104 = vsel %vm4072, 1, 0
        %v4105 = vsel %vm4073, 1, 0
        %v4106 = vsel %vm4074, 1, 0
        %v4107 = vsel %vm4075, 1, 0
        %v4108 = vsel %vm4076, 1, 0
        %v4109 = vsel %vm4077, 1, 0
        %v4110 = vsel %vm4078, 1, 0
        %v4111 = vsel %vm4079, 1, 0
        %v4112 = vsel %vm4080, 1, 0
        %v4113 = vsel %vm4081, 1, 0
        %v4114 = vsel %vm4082, 1, 0
        %v4115 = vsel %vm4083, 1, 0
        %v4116 = vsel %vm4084, 1, 0
        %v4117 = vsel %vm4085, 1, 0
        %v4118 = vsel %vm4086, 1, 0
        %v4119 = vsel %vm4087, 1, 0
        %v4120 = vsel %vm4088, 1, 0
        %v4121 = vsel %vm4089, 1, 0
        %v4122 = vsel %vm4090, 1, 0
        %v4123 = vsel %vm4091, 1, 0
        %v4124 = vsel %vm4092, 1, 0
        %v4125 = vsel %vm4093, 1, 0
        %v4126 = vsel %vm4094, 1, 0
        %v4127 = vsel %vm4095, 1, 0
        %v4128 = vsel %vm4096, 1, 0
        %v4129 = vsel %vm4097, 1, 0
        %v4130 = vsel %vm4098, 1, 0
        %v4131 = vsel %vm4099, 1, 0
        %v4132 = vsel %vm4100, 1, 0
        %v4133 = vsel %vm4101, 1, 0
        %v4134 = vcvt.s32.f32 %v4102
        %v4135 = vcvt.s32.f32 %v4103
        %v4136 = vcvt.s32.f32 %v4104
        %v4137 = vcvt.s32.f32 %v4105
        %v4138 = vcvt.s32.f32 %v4106
        %v4139 = vcvt.s32.f32 %v4107
        %v4140 = vcvt.s32.f32 %v4108
        %v4141 = vcvt.s32.f32 %v4109
        %v4142 = vcvt.s32.f32 %v4110
        %v4143 = vcvt.s32.f32 %v4111
        %v4144 = vcvt.s32.f32 %v4112
        %v4145 = vcvt.s32.f32 %v4113
        %v4146 = vcvt.s32.f32 %v4114
        %v4147 = vcvt.s32.f32 %v4115
        %v4148 = vcvt.s32.f32 %v4116
        %v4149 = vcvt.s32.f32 %v4117
        %v4150 = vcvt.s32.f32 %v4118
        %v4151 = vcvt.s32.f32 %v4119
        %v4152 = vcvt.s32.f32 %v4120
        %v4153 = vcvt.s32.f32 %v4121
        %v4154 = vcvt.s32.f32 %v4122
        %v4155 = vcvt.s32.f32 %v4123
        %v4156 = vcvt.s32.f32 %v4124
        %v4157 = vcvt.s32.f32 %v4125
        %v4158 = vcvt.s32.f32 %v4126
        %v4159 = vcvt.s32.f32 %v4127
        %v4160 = vcvt.s32.f32 %v4128
        %v4161 = vcvt.s32.f32 %v4129
        %v4162 = vcvt.s32.f32 %v4130
        %v4163 = vcvt.s32.f32 %v4131
        %v4164 = vcvt.s32.f32 %v4132
        %v4165 = vcvt.s32.f32 %v4133
        %4166 = vmatprep.subr.mxu0 0.0
        %4167 = vmatpush1.msra.mxu0 %v4134
        %4168 = vmatprep.subr.mxu0 0.0
        %4169 = vmatpush1.msra.mxu0 %v4135
        %4170 = vmatprep.subr.mxu0 0.0
        %4171 = vmatpush1.msra.mxu0 %v4136
        %4172 = vmatprep.subr.mxu0 0.0
        %4173 = vmatpush1.msra.mxu0 %v4137
        %4174 = vmatprep.subr.mxu0 0.0
        %4175 = vmatpush1.msra.mxu0 %v4138
        %4176 = vmatprep.subr.mxu0 0.0
        %4177 = vmatpush1.msra.mxu0 %v4139
        %4178 = vmatprep.subr.mxu0 0.0
        %4179 = vmatpush1.msra.mxu0 %v4140
        %4180 = vmatprep.subr.mxu0 0.0
        %4181 = vmatpush1.msra.mxu0 %v4141
        %4182 = vmatprep.subr.mxu0 0.0
        %4183 = vmatpush1.msra.mxu0 %v4142
        %4184 = vmatprep.subr.mxu0 0.0
        %4185 = vmatpush1.msra.mxu0 %v4143
        %4186 = vmatprep.subr.mxu0 0.0
        %4187 = vmatpush1.msra.mxu0 %v4144
        %4188 = vmatprep.subr.mxu0 0.0
        %4189 = vmatpush1.msra.mxu0 %v4145
        %4190 = vmatprep.subr.mxu0 0.0
        %4191 = vmatpush1.msra.mxu0 %v4146
        %4192 = vmatprep.subr.mxu0 0.0
        %4193 = vmatpush1.msra.mxu0 %v4147
        %4194 = vmatprep.subr.mxu0 0.0
        %4195 = vmatpush1.msra.mxu0 %v4148
        %4196 = vmatprep.subr.mxu0 0.0
        %4197 = vmatpush1.msra.mxu0 %v4149
        %4198 = vmatprep.subr.mxu0 0.0
        %4199 = vmatpush1.msra.mxu0 %v4150
        %4200 = vmatprep.subr.mxu0 0.0
        %4201 = vmatpush1.msra.mxu0 %v4151
        %4202 = vmatprep.subr.mxu0 0.0
        %4203 = vmatpush1.msra.mxu0 %v4152
        %4204 = vmatprep.subr.mxu0 0.0
        %4205 = vmatpush1.msra.mxu0 %v4153
        %4206 = vmatprep.subr.mxu0 0.0
        %4207 = vmatpush1.msra.mxu0 %v4154
        %4208 = vmatprep.subr.mxu0 0.0
        %4209 = vmatpush1.msra.mxu0 %v4155
        %4210 = vmatprep.subr.mxu0 0.0
        %4211 = vmatpush1.msra.mxu0 %v4156
        %4212 = vmatprep.subr.mxu0 0.0
        %4213 = vmatpush1.msra.mxu0 %v4157
        %4214 = vmatprep.subr.mxu0 0.0
        %4215 = vmatpush1.msra.mxu0 %v4158
        %4216 = vmatprep.subr.mxu0 0.0
        %4217 = vmatpush1.msra.mxu0 %v4159
        %4218 = vmatprep.subr.mxu0 0.0
        %4219 = vmatpush1.msra.mxu0 %v4160
        %4220 = vmatprep.subr.mxu0 0.0
        %4221 = vmatpush1.msra.mxu0 %v4161
        %4222 = vmatprep.subr.mxu0 0.0
        %4223 = vmatpush1.msra.mxu0 %v4162
        %4224 = vmatprep.subr.mxu0 0.0
        %4225 = vmatpush1.msra.mxu0 %v4163
        %4226 = vmatprep.subr.mxu0 0.0
        %4227 = vmatpush1.msra.mxu0 %v4164
        %4228 = vmatprep.subr.mxu0 0.0
        %4229 = vmatpush1.msra.mxu0 %v4165
        %4230 = vmatprep.mubr.f32.mxu0 %v3313
        %4231 = vmatmul.mubr.f32.gmra.mrb[0].mxu0 %v3312
        %v4232 = vpop.f32.mrb[0].mxu0
        %v4233 = vadd.f32 0.0, %v4232
        %v4234 = vpop.f32.mrb[0].mxu0
        %4235 = vmatprep.mubr.f32.mxu0 %v3315
        %4236 = vmatmul.mubr.f32.gmra.mrb[0].mxu0 %v3314
        %v4237 = vpop.f32.mrb[0].mxu0
        %v4238 = vadd.f32 0.0, %v4237
        %v4239 = vpop.f32.mrb[0].mxu0
        %4240 = vmatprep.mubr.f32.mxu0 %v3317
        %4241 = vmatmul.mubr.f32.gmra.mrb[0].mxu0 %v3316
        %v4242 = vpop.f32.mrb[0].mxu0
        %v4243 = vadd.f32 0.0, %v4242
        %v4244 = vpop.f32.mrb[0].mxu0
        %4245 = vmatprep.mubr.f32.mxu0 %v3319
        %4246 = vmatmul.mubr.f32.gmra.mrb[0].mxu0 %v3318
        %v4247 = vpop.f32.mrb[0].mxu0
        %v4248 = vadd.f32 0.0, %v4247
        %v4249 = vpop.f32.mrb[0].mxu0
        %4250 = vdwg.mxu0
        %v4251 = vadd.f32 %v3274, %v4233
        %v4252 = vadd.f32 %v3275, %v4238
        %v4253 = vadd.f32 %v3276, %v4243
        %v4254 = vadd.f32 %v3277, %v4248
        %4255 = vst [vmem:[%s292] sm:$0xff] %v4251
        %4256 = vst [vmem:[%s292 + $0x8] sm:$0xff] %v4252
        %4257 = vst [vmem:[%s292 + $0x10] sm:$0xff] %v4253
        %4258 = vst [vmem:[%s292 + $0x18] sm:$0xff] %v4254
        %vm4259 = vcmask 1040384
        %v4260 = vsel %vm4259, %v1126, %v2107
        %vm4261 = vcmask 1041408
        %v4262 = vsel %vm4261, %v4260, %v3088
        %vm4263 = vcmask 1042432
        %v4264 = vsel %vm4263, %v4262, %v4069
        %4265 = vst [vmem:[%s299] sm:$0xf] %v4264
        %s4266 = sand.u32 %s136, 1
        %s4267 = scalar_lea.sflag [#allocation4], %s4266
        %s4268 = sand.u32 %s136, 1
        %s4269 = smul.addr %s4268, 32
        %s4270 = scalar_lea.vmem [#allocation3], %s4269
        %s4271 = sand.u32 %s164, 1
        %s4272 = scalar_lea.sflag [#allocation6], %s4271
        %s4273 = sand.u32 %s164, 1
        %s4274 = smul.addr %s4273, 4
        %s4275 = scalar_lea.vmem [#allocation5], %s4274
        // Predicated region
        $region75: #{tpu_custom_call.1} parent=69 // pred_check
          %p4276 = pneg %p146
        $region76: #{tpu_custom_call.1} parent=69 // pred_check_branch
          %4278 = sbr.rel (%p4276) target = $region78
        $region77: #{tpu_custom_call.1} parent=69 // pred_region
          %s4280 = ssub.s32 512, 512
          %4281 = vsyncadd %s4267, %s4280
          %s4282 = smul.addr %s27, 8
          %s4283 = sadd.s32 %s28, %s4282
          %s4284 = smul.addr %s4283, 128
          %s4285 = scalar_lea.hbm %s4, %s4284
          %s4286 = sshll.u32 %s4270, 4
          %s4287 = int_to_ptr.vmem [resolvable:$true] %s4286
          %4292 = dma.vmem_to_hbm [thread:$0]  %s4287, 512, %s4285, %s4267, 128, 256, 8
        $region78: #{tpu_custom_call.1} parent=69 // pred_fallthru
          _
        // Predicated region
        $region79: #{tpu_custom_call.1} parent=69 // pred_check
          %p4293 = pneg %p174
        $region80: #{tpu_custom_call.1} parent=69 // pred_check_branch
          %4295 = sbr.rel (%p4293) target = $region82
        $region81: #{tpu_custom_call.1} parent=69 // pred_region
          %s4297 = ssub.s32 64, 64
          %4298 = vsyncadd %s4272, %s4297
          %s4299 = smul.addr %s27, 2
          %s4300 = sadd.s32 %s28, %s4299
          %s4301 = smul.addr %s4300, 64
          %s4302 = scalar_lea.hbm %s5, %s4301
          %s4304 = sshll.u32 %s4275, 4
          %s4305 = int_to_ptr.vmem [resolvable:$true] %s4304
          %4307 = dma.vmem_to_hbm [thread:$0]  %s4305, 64, %s4302, %s4272
        $region82: #{tpu_custom_call.1} parent=69 // pred_fallthru
          _
      $region70: #{tpu_custom_call.1} parent=5 // pred_fallthru
        _
      %p4308 = scmp.le.s32.totalorder 2, %s18
      // Predicated region
      $region83: #{tpu_custom_call.1} parent=5 // pred_check
        %p4309 = pneg %p4308
      $region84: #{tpu_custom_call.1} parent=5 // pred_check_branch
        %4311 = sbr.rel (%p4309) target = $region86
      $region85: #{tpu_custom_call.1} parent=5 // pred_region
        %s4312 = ssub.s32 %s18, 2
        // Predicated region
        $region87: #{tpu_custom_call.1} parent=85 // pred_check
          %p4313 = pneg %p152
        $region88: #{tpu_custom_call.1} parent=85 // pred_check_branch
          %4315 = sbr.rel (%p4313) target = $region90
        $region89: #{tpu_custom_call.1} parent=85 // pred_region
          %s4316 = sand.u32 %s137, 1
          %s4317 = scalar_lea.sflag [#allocation4], %s4316
          %s4318 = sand.u32 %s137, 1
          %s4319 = smul.addr %s4318, 32
          %s4320 = scalar_lea.vmem [#allocation3], %s4319
          %4321 = dma.done %s4317, 512
        $region90: #{tpu_custom_call.1} parent=85 // pred_fallthru
          _
        // Predicated region
        $region91: #{tpu_custom_call.1} parent=85 // pred_check
          %p4322 = pneg %p180
        $region92: #{tpu_custom_call.1} parent=85 // pred_check_branch
          %4324 = sbr.rel (%p4322) target = $region94
        $region93: #{tpu_custom_call.1} parent=85 // pred_region
          %s4325 = sand.u32 %s165, 1
          %s4326 = scalar_lea.sflag [#allocation6], %s4325
          %s4327 = sand.u32 %s165, 1
          %s4328 = smul.addr %s4327, 4
          %s4329 = scalar_lea.vmem [#allocation5], %s4328
          %4330 = dma.done %s4326, 64
        $region94: #{tpu_custom_call.1} parent=85 // pred_fallthru
          _
      $region86: #{tpu_custom_call.1} parent=5 // pred_fallthru
        _
    $region6: #{tpu_custom_call.1} parent=1 // loop_footer
      %s22 = sadd.s32 1, %s18
    $region7: #{tpu_custom_call.1} parent=1 // loop_footer_branch
      %17 = sbr.rel target = $region3
    $region8: #{tpu_custom_call.1} parent=1 // loop_exit
      _
    %4331 = vsyncpa [#allocation4], 1
    %s4332 = scalar_lea.sflag [#allocation4], 1
    %4333 = vsyncpa %s4332, 1
    %4334 = vsyncpa [#allocation6], 1
    %s4335 = scalar_lea.sflag [#allocation6], 1
    %4336 = vsyncpa %s4335, 1

</llo_original>
